<compile_context>
chip_gen: v5e
topology: v5e:2x2
jax: 0.10.0
libtpu: 0.0.40
codegen_flags: <defaults>
</compile_context>

<pallas_src>
import functools

import jax
import jax.numpy as jnp
import numpy as np
from jax import lax
from jax.experimental import pallas as pl
from jax.experimental.pallas import tpu as pltpu


# ----------------------------------------------------------------------------
# Kernel 1: combine-Linear (3 partial matmuls) + LayerNorm + stacked gate input
#           projection.  rows = (S*B) time-major; output = (rows, 4*Hp) bf16.
# ----------------------------------------------------------------------------
def _embed_proj_kernel(x_ref, ne_ref, ce_ref, wc_ref, bc_ref, g_ref, b_ref,
                       wx_ref, bg_ref, o_ref, *, hidden, eps):
    H = hidden
    # combine-Linear as sum of three partial matmuls (no x_cat materialization).
    y = (jnp.dot(x_ref[...], wc_ref[0:H, :], preferred_element_type=jnp.float32)
         + jnp.dot(ne_ref[...], wc_ref[H:2 * H, :],
                   preferred_element_type=jnp.float32)
         + jnp.dot(ce_ref[...], wc_ref[2 * H:3 * H, :],
                   preferred_element_type=jnp.float32)
         + bc_ref[...])
    mu = jnp.mean(y, axis=-1, keepdims=True)
    var = jnp.mean(jnp.square(y - mu), axis=-1, keepdims=True)
    nx = (y - mu) * lax.rsqrt(var + eps) * g_ref[...] + b_ref[...]
    # stacked gate projection, gate bias folded in, lane-dense bf16 store.
    o_ref[...] = (jnp.dot(nx.astype(jnp.bfloat16), wx_ref[...],
                          preferred_element_type=jnp.float32)
                  + bg_ref[...]).astype(o_ref.dtype)


# ----------------------------------------------------------------------------
# Kernel 2: fused bidirectional T-LSTM recurrence + classifier head (+ sigmoid)
#   x_ref   : (ts, 2B, 4Hp) bf16  fused fwd/bwd X_proj (bwd already time-reversed)
#   t_ref   : (ts, 2B, 1)   f32   fused fwd/bwd elapsed times
#   wblk_ref: (2Hp, 5Hp)    bf16  block-diag [[W_decomp,0],[0,Wh(stacked)]]
#   ch_scr  : (2B, 2Hp)     f32   carry, cols [:Hp]=c, cols [Hp:]=h
# ----------------------------------------------------------------------------
def _tlstm_kernel(x_ref, t_ref, wblk_ref, bd_ref, wcls_ref, bcls_ref,
                  his_ref, pred_ref, ch_scr, td_scr, *, hp, b, unroll):
    TS = x_ref.shape[0]
    k = pl.program_id(0)

    @pl.when(k == 0)
    def _init():
        ch_scr[...] = jnp.zeros_like(ch_scr)
        pred_ref[...] = jnp.zeros_like(pred_ref)

    # time-decay T = 1/log(t + e), vectorized per chunk (off the critical path).
    td_scr[...] = 1.0 / jnp.log(t_ref[...] + jnp.float32(np.e))

    # hoist weight loads out of the recurrence.
    wblk = wblk_ref[...]            # (2Hp, 5Hp) bf16
    bd = bd_ref[...]                # (1, Hp)    f32

    def step(j, ch):
        c = ch[:, :hp]                                         # (2B, Hp) f32
        T = td_scr[j]                                          # (2B, 1)
        # single MXU push/pop: (c|h) @ [[Wd,0],[0,Wh]]
        chw = jnp.dot(ch.astype(jnp.bfloat16), wblk,
                      preferred_element_type=jnp.float32)      # (2B, 5Hp)
        c_st = jnp.tanh(chw[:, :hp] + bd)
        c_adj = c - c_st + T * c_st
        # gate pre-activations: precomputed x-side (bias folded) + h-side.
        g = jax.nn.sigmoid(chw[:, hp:] + x_ref[j])             # (2B, 4Hp) f32
        ig = g[:, 0 * hp:1 * hp]
        fg = g[:, 1 * hp:2 * hp]
        og = g[:, 2 * hp:3 * hp]
        cg = g[:, 3 * hp:4 * hp]   # candidate uses sigmoid, per reference module
        c_new = fg * c_adj + ig * cg
        h_new = og * jnp.tanh(c_new)
        his_ref[j] = h_new          # rows [:B] forward history, rows [B:] backward
        return jnp.concatenate([c_new, h_new], axis=1)         # lane-aligned concat

    ch_fin = lax.fori_loop(0, TS, step, ch_scr[...], unroll=unroll)
    ch_scr[...] = ch_fin

    # classifier on lstm_output[0, -1, :] == concat(fwd_final[b=0], bwd_final[b=0]).
    @pl.when(k == pl.num_programs(0) - 1)
    def _final():
        h_fin = ch_fin[:, hp:]
        hf = h_fin[0:1, :]          # forward-direction final hidden, batch row 0
        hb = h_fin[b:b + 1, :]      # backward-direction final hidden, batch row 0
        logits = (jnp.dot(hf, wcls_ref[0:hp, :],
                          preferred_element_type=jnp.float32)
                  + jnp.dot(hb, wcls_ref[hp:2 * hp, :],
                            preferred_element_type=jnp.float32)
                  + bcls_ref[...])
        logits = jnp.where(jnp.isnan(logits) | jnp.isinf(logits),
                           jnp.zeros_like(logits), logits)
        pred = jax.nn.sigmoid(logits)
        pred = jnp.where(jnp.isnan(pred) | jnp.isinf(pred),
                         jnp.zeros_like(pred), pred)
        pred_ref[...] = pred


# ----------------------------------------------------------------------------
# Tiling / VMEM helpers
# ----------------------------------------------------------------------------
def _round_up(x, m):
    return ((x + m - 1) // m) * m


def _default_vmem_limit():
    cap = None
    try:
        cap = pltpu.get_tpu_info().vmem_capacity_bytes
    except Exception:
        cap = None
    if not cap:
        cap = 64 * 1024 * 1024          # conservative (v7x-sized) fallback
    return max(32 * 1024 * 1024, int(min(int(cap * 0.75), 100 * 1024 * 1024)))


def _pick_row_tile(n, h, g4, budget_bytes):
    # double-buffered: 3 bf16 input streams of width H + bf16 output of width 4Hp.
    per_row = 2 * (3 * h * 2 + g4 * 2)
    for tn in (4096, 2048, 1024, 512, 256, 128, 64, 32, 16, 8):
        if tn <= n and n % tn == 0 and tn * per_row <= budget_bytes:
            return tn
    return n


def _divisors_desc(n):
    return [d for d in range(n, 0, -1) if n % d == 0]


def _pick_time_tile(s, b2, g4, hp, budget_bytes):
    # double-buffered x (bf16) + t (f32) + his (f32) blocks, plus td scratch.
    per_ts = b2 * (2 * (g4 * 2 + 4 + hp * 4) + 4)
    for ts in _divisors_desc(s):
        if ts * per_ts <= budget_bytes:
            return ts
    return 1


# ----------------------------------------------------------------------------
# Wrapper (glue: embedding gathers, weight stacking / lane padding, layout)
# ----------------------------------------------------------------------------
def tlstm_layer_forward(inputs, times, note_ids, chunk_ids, params,
                        eps=1e-12, time_tile=None):
    B, S, H = inputs.shape
    Hh = params["W_decomp"].shape[0]
    L = params["W_cls"].shape[1]
    Hp = _round_up(Hh, 128)             # lane-padded per-direction hidden width
    G4 = 4 * Hp                         # stacked gate width (lane-dense)
    B2 = 2 * B
    N = S * B
    bf16, f32 = jnp.bfloat16, jnp.float32

    vmem_limit = _default_vmem_limit()
    budget = vmem_limit // 2

    # --- glue: time-major bf16 activation streams (ids transposed before the
    #     gather so the embedding outputs are already time-major; no x_cat).
    x_in = jnp.transpose(inputs.astype(bf16), (1, 0, 2)).reshape(N, H)
    note_e = params["note_emb"].astype(bf16)[jnp.transpose(note_ids)].reshape(N, H)
    chunk_e = params["chunk_emb"].astype(bf16)[jnp.transpose(chunk_ids)].reshape(N, H)

    # --- stacked / zero-padded weights, gate order [i | f | o | c] ------------
    def pad_c(w):                       # (in, Hh) -> (in, Hp)
        return jnp.pad(w, ((0, 0), (0, Hp - Hh)))

    def pad_rc(w):                      # (Hh, Hh) -> (Hp, Hp)
        return jnp.pad(w, ((0, Hp - Hh), (0, Hp - Hh)))

    def pad_b(v):                       # (Hh,) -> (Hp,)
        return jnp.pad(v, (0, Hp - Hh))

    wx = jnp.concatenate([pad_c(params["Wi"]), pad_c(params["Wf"]),
                          pad_c(params["Wog"]), pad_c(params["Wc"])],
                         axis=1).astype(bf16)                       # (H, 4Hp)
    bg = jnp.concatenate([pad_b(params["bi"]), pad_b(params["bf"]),
                          pad_b(params["bog"]), pad_b(params["bc"])]
                         ).reshape(1, G4).astype(f32)
    wh = jnp.concatenate([pad_rc(params["Ui"]), pad_rc(params["Uf"]),
                          pad_rc(params["Uog"]), pad_rc(params["Uc"])],
                         axis=1)                                    # (Hp, 4Hp)
    wd = pad_rc(params["W_decomp"])                                 # (Hp, Hp)
    bd = pad_b(params["b_decomp"]).reshape(1, Hp).astype(f32)
    # block-diagonal weight -> single MXU op per recurrence step.
    w_blk = jnp.zeros((2 * Hp, Hp + G4), f32)
    w_blk = w_blk.at[:Hp, :Hp].set(wd).at[Hp:, Hp:].set(wh).astype(bf16)
    wcls = jnp.zeros((2 * Hp, L), f32)
    wcls = wcls.at[:Hh, :].set(params["W_cls"][:Hh])
    wcls = wcls.at[Hp:Hp + Hh, :].set(params["W_cls"][Hh:])
    bcls = params["b_cls"].reshape(1, L).astype(f32)

    wc_bf = params["W_comb"].astype(bf16)
    bc = params["b_comb"].reshape(1, H).astype(f32)
    ln_g = params["ln_gamma"].reshape(1, H).astype(f32)
    ln_b = params["ln_beta"].reshape(1, H).astype(f32)

    # --- kernel 1: combine + LN + gate input projection (bf16, lane-dense) ---
    tn = _pick_row_tile(N, H, G4, budget)
    xproj = pl.pallas_call(
        functools.partial(_embed_proj_kernel, hidden=H, eps=eps),
        grid=(N // tn,),
        out_shape=jax.ShapeDtypeStruct((N, G4), bf16),
        in_specs=[pl.BlockSpec((tn, H), lambda i: (i, 0)),          # inputs
                  pl.BlockSpec((tn, H), lambda i: (i, 0)),          # note emb
                  pl.BlockSpec((tn, H), lambda i: (i, 0)),          # chunk emb
                  pl.BlockSpec((3 * H, H), lambda i: (0, 0)),       # W_comb
                  pl.BlockSpec((1, H), lambda i: (0, 0)),           # b_comb
                  pl.BlockSpec((1, H), lambda i: (0, 0)),           # ln_gamma
                  pl.BlockSpec((1, H), lambda i: (0, 0)),           # ln_beta
                  pl.BlockSpec((H, G4), lambda i: (0, 0)),          # Wx stacked
                  pl.BlockSpec((1, G4), lambda i: (0, 0))],         # bg stacked
        out_specs=pl.BlockSpec((tn, G4), lambda i: (i, 0)),
        compiler_params=pltpu.CompilerParams(
            dimension_semantics=("parallel",),
            vmem_limit_bytes=vmem_limit),
    )(x_in, note_e, chunk_e, wc_bf, bc, ln_g, ln_b, wx, bg)
    xproj = xproj.reshape(S, B, G4)                 # (S, B, 4Hp), time-major, bf16

    # --- glue: fused fwd/bwd streams -> single kernel-2 input, no in-loop concat.
    x_fused = jnp.concatenate([xproj, jnp.flip(xproj, axis=0)], axis=1)  # (S,2B,4Hp)
    t_tm = jnp.transpose(times.astype(f32), (1, 0, 2))                   # (S, B, 1)
    # torch flip semantics: t_bwd[i] = t[0] if i==0 else t[S-i].
    t_bwd = jnp.concatenate([t_tm[0:1], t_tm[:0:-1]], axis=0)
    t_fused = jnp.concatenate([t_tm, t_bwd], axis=1)                     # (S, 2B, 1)

    # --- kernel 2: recurrence + classifier --------------------------------------
    if time_tile is not None:
        assert S % time_tile == 0, "time_tile must divide the sequence length"
        ts = int(time_tile)
    else:
        ts = _pick_time_tile(S, B2, G4, Hp, budget)
    nk = S // ts
    unroll = ts if ts <= 16 else 8

    his, pred = pl.pallas_call(
        functools.partial(_tlstm_kernel, hp=Hp, b=B, unroll=unroll),
        grid=(nk,),
        out_shape=(jax.ShapeDtypeStruct((S, B2, Hp), f32),
                   jax.ShapeDtypeStruct((1, L), f32)),
        in_specs=[pl.BlockSpec((ts, B2, G4), lambda k: (k, 0, 0)),       # fused X
                  pl.BlockSpec((ts, B2, 1), lambda k: (k, 0, 0)),        # fused t
                  pl.BlockSpec((2 * Hp, Hp + G4), lambda k: (0, 0)),     # W block-diag
                  pl.BlockSpec((1, Hp), lambda k: (0, 0)),               # b_decomp
                  pl.BlockSpec((2 * Hp, L), lambda k: (0, 0)),           # W_cls (pad)
                  pl.BlockSpec((1, L), lambda k: (0, 0))],               # b_cls
        out_specs=(pl.BlockSpec((ts, B2, Hp), lambda k: (k, 0, 0)),
                   pl.BlockSpec((1, L), lambda k: (0, 0))),
        scratch_shapes=[pltpu.VMEM((B2, 2 * Hp), f32),      # (c|h) carry
                        pltpu.VMEM((ts, B2, 1), f32)],      # time-decay chunk
        compiler_params=pltpu.CompilerParams(
            dimension_semantics=("arbitrary",),              # serial recurrence
            vmem_limit_bytes=vmem_limit),
    )(x_fused, t_fused, w_blk, bd, wcls, bcls)

    # hidden_his (batch_first) = concat(fwd history, bwd history) along features
    # (padded hidden columns sliced away).
    hidden_his = jnp.concatenate(
        [jnp.transpose(his[:, :B, :Hh], (1, 0, 2)),
         jnp.transpose(his[:, B:, :Hh], (1, 0, 2))], axis=2)             # (B, S, 2Hh)
    return pred[0], hidden_his


# ----------------------------------------------------------------------------
# Pure-JAX f32 reference (semantics of the PyTorch module) for verification
# ----------------------------------------------------------------------------
def ref_forward(inputs, times, note_ids, chunk_ids, p, eps=1e-12):
    note_e = p["note_emb"][note_ids]
    chunk_e = p["chunk_emb"][chunk_ids]
    x = jnp.concatenate([inputs, note_e, chunk_e], axis=2)
    y = x @ p["W_comb"] + p["b_comb"]
    mu = y.mean(-1, keepdims=True)
    var = ((y - mu) ** 2).mean(-1, keepdims=True)
    new_input = (y - mu) / jnp.sqrt(var + eps) * p["ln_gamma"] + p["ln_beta"]

    x_tm = jnp.transpose(new_input, (1, 0, 2))
    t_tm = jnp.transpose(times.astype(jnp.float32), (1, 0, 2))
    S, B, _ = x_tm.shape
    Hh = p["W_decomp"].shape[0]

    def unit(h, c, xx, tt):
        T = 1.0 / jnp.log(tt + np.e)
        c_st = jnp.tanh(c @ p["W_decomp"] + p["b_decomp"])
        c_adj = c - c_st + T * c_st
        i = jax.nn.sigmoid(xx @ p["Wi"] + h @ p["Ui"] + p["bi"])
        f = jax.nn.sigmoid(xx @ p["Wf"] + h @ p["Uf"] + p["bf"])
        o = jax.nn.sigmoid(xx @ p["Wog"] + h @ p["Uog"] + p["bog"])
        C = jax.nn.sigmoid(xx @ p["Wc"] + h @ p["Uc"] + p["bc"])
        c_new = f * c_adj + i * C
        return o * jnp.tanh(c_new), c_new

    h = jnp.zeros((B, Hh)); c = jnp.zeros((B, Hh)); his_f = []
    for s in range(S):
        h, c = unit(h, c, x_tm[s], t_tm[s])
        his_f.append(h)
    hb = jnp.zeros((B, Hh)); cb = jnp.zeros((B, Hh)); his_b = []
    for s in range(S):
        t = t_tm[0] if s == 0 else t_tm[S - s]
        hb, cb = unit(hb, cb, x_tm[S - 1 - s], t)
        his_b.append(hb)

    hidden_his = jnp.concatenate([jnp.stack(his_f), jnp.stack(his_b)], axis=2)
    hidden_his = jnp.transpose(hidden_his, (1, 0, 2))
    final = jnp.concatenate([h[0], hb[0]])
    logits = final @ p["W_cls"] + p["b_cls"]
    return jax.nn.sigmoid(logits), hidden_his


# ----------------------------------------------------------------------------
if __name__ == "__main__":
    # small config consistent with the module
    B, S, H, L = 2, 8, 32, 4          # batch, seq, hidden_size, num_labels
    Hh = H // 2                       # per-direction TLSTM hidden
    max_note, max_chunk = 10, 20
    init_range = 0.02
    layer_norm_eps = 1e-12

    key = jax.random.PRNGKey(0)
    ks = jax.random.split(key, 32)

    def g(i, shape):
        return init_range * jax.random.normal(ks[i], shape, jnp.float32)

    def smallb(i, shape):
        return 0.01 * jax.random.normal(ks[i], shape, jnp.float32)

    params = {
        "note_emb": g(0, (max_note, H)),
        "chunk_emb": g(1, (max_chunk, H)),
        "W_comb": g(2, (3 * H, H)),
        "b_comb": smallb(3, (H,)),
        "ln_gamma": 1.0 + smallb(4, (H,)),
        "ln_beta": smallb(5, (H,)),
        "Wi": g(6, (H, Hh)), "Ui": g(7, (Hh, Hh)), "bi": smallb(8, (Hh,)),
        "Wf": g(9, (H, Hh)), "Uf": g(10, (Hh, Hh)), "bf": smallb(11, (Hh,)),
        "Wog": g(12, (H, Hh)), "Uog": g(13, (Hh, Hh)), "bog": smallb(14, (Hh,)),
        "Wc": g(15, (H, Hh)), "Uc": g(16, (Hh, Hh)), "bc": smallb(17, (Hh,)),
        "W_decomp": g(18, (Hh, Hh)), "b_decomp": smallb(19, (Hh,)),
        "W_cls": g(20, (2 * Hh, L)), "b_cls": jnp.zeros((L,), jnp.float32),
    }

    inputs = jax.random.normal(ks[21], (B, S, H), jnp.float32)
    times = jax.random.uniform(ks[22], (B, S, 1), jnp.float32,
                               minval=0.5, maxval=30.0)
    note_ids = jax.random.randint(ks[23], (B, S), 0, max_note)
    chunk_ids = jax.random.randint(ks[24], (B, S), 0, max_chunk)

    fwd = jax.jit(lambda a, t, n, c: tlstm_layer_forward(
        a, t, n, c, params, layer_norm_eps, time_tile=4))
    pred, hidden_his = fwd(inputs, times, note_ids, chunk_ids)
    pred = jax.block_until_ready(pred)
    hidden_his = jax.block_until_ready(hidden_his)

    ref_pred, ref_his = ref_forward(inputs, times, note_ids, chunk_ids,
                                    params, layer_norm_eps)
    # kernel uses bf16 matmul operands / bf16 activation streams; f32 reference
    np.testing.assert_allclose(np.asarray(pred), np.asarray(ref_pred),
                               rtol=0.0, atol=3e-3)
    np.testing.assert_allclose(np.asarray(hidden_his), np.asarray(ref_his),
                               rtol=0.0, atol=3e-2)

    print("KERNEL_OK")
</pallas_src>

<mosaic_0001>
module attributes {stable_mosaic.version = 11 : i64} {
  func.func @_embed_proj_kernel(%arg0: i32, %arg1: memref<16x32xbf16, #tpu.memory_space<vmem>>, %arg2: memref<16x32xbf16, #tpu.memory_space<vmem>>, %arg3: memref<16x32xbf16, #tpu.memory_space<vmem>>, %arg4: memref<96x32xbf16, #tpu.memory_space<vmem>>, %arg5: memref<1x32xf32, #tpu.memory_space<vmem>>, %arg6: memref<1x32xf32, #tpu.memory_space<vmem>>, %arg7: memref<1x32xf32, #tpu.memory_space<vmem>>, %arg8: memref<32x512xbf16, #tpu.memory_space<vmem>>, %arg9: memref<1x512xf32, #tpu.memory_space<vmem>>, %arg10: memref<16x512xbf16, #tpu.memory_space<vmem>>) attributes {dimension_semantics = [#tpu.dimension_semantics<parallel>], iteration_bounds = array<i64: 1>, scalar_prefetch = 0 : i64, scratch_operands = 0 : i64, tpu.core_type = #tpu.core_type<tc>, window_params = [{transform_indices = @transform_0, window_bounds = array<i64: 16, 32>}, {transform_indices = @transform_1, window_bounds = array<i64: 16, 32>}, {transform_indices = @transform_2, window_bounds = array<i64: 16, 32>}, {pipeline_mode = #tpu.pipeline_mode<synchronous>, transform_indices = @transform_3, window_bounds = array<i64: 96, 32>}, {pipeline_mode = #tpu.pipeline_mode<synchronous>, transform_indices = @transform_4, window_bounds = array<i64: 1, 32>}, {pipeline_mode = #tpu.pipeline_mode<synchronous>, transform_indices = @transform_5, window_bounds = array<i64: 1, 32>}, {pipeline_mode = #tpu.pipeline_mode<synchronous>, transform_indices = @transform_6, window_bounds = array<i64: 1, 32>}, {pipeline_mode = #tpu.pipeline_mode<synchronous>, transform_indices = @transform_7, window_bounds = array<i64: 32, 512>}, {pipeline_mode = #tpu.pipeline_mode<synchronous>, transform_indices = @transform_8, window_bounds = array<i64: 1, 512>}, {transform_indices = @transform_9, window_bounds = array<i64: 16, 512>}]} {
    %c0 = arith.constant 0 : index
    %c0_0 = arith.constant 0 : index
    %0 = vector.load %arg1[%c0, %c0_0] : memref<16x32xbf16, #tpu.memory_space<vmem>>, vector<16x32xbf16>
    %c0_1 = arith.constant 0 : index
    %c0_2 = arith.constant 0 : index
    %1 = vector.load %arg4[%c0_1, %c0_2] : memref<96x32xbf16, #tpu.memory_space<vmem>>, vector<32x32xbf16>
    %cst = arith.constant dense<0.000000e+00> : vector<16x32xf32>
    %2 = tpu.matmul %0, %1, %cst {dimension_numbers = #tpu.dot_dimension_numbers<[1], [0], [0], [1], [0, 0, 1, 1], [], []>} : vector<16x32xbf16>, vector<32x32xbf16>, vector<16x32xf32> -> vector<16x32xf32>
    %c0_3 = arith.constant 0 : index
    %c0_4 = arith.constant 0 : index
    %3 = vector.load %arg2[%c0_3, %c0_4] : memref<16x32xbf16, #tpu.memory_space<vmem>>, vector<16x32xbf16>
    %c32 = arith.constant 32 : index
    %c0_5 = arith.constant 0 : index
    %4 = vector.load %arg4[%c32, %c0_5] : memref<96x32xbf16, #tpu.memory_space<vmem>>, vector<32x32xbf16>
    %cst_6 = arith.constant dense<0.000000e+00> : vector<16x32xf32>
    %5 = tpu.matmul %3, %4, %cst_6 {dimension_numbers = #tpu.dot_dimension_numbers<[1], [0], [0], [1], [0, 0, 1, 1], [], []>} : vector<16x32xbf16>, vector<32x32xbf16>, vector<16x32xf32> -> vector<16x32xf32>
    %6 = arith.addf %2, %5 : vector<16x32xf32>
    %c0_7 = arith.constant 0 : index
    %c0_8 = arith.constant 0 : index
    %7 = vector.load %arg3[%c0_7, %c0_8] : memref<16x32xbf16, #tpu.memory_space<vmem>>, vector<16x32xbf16>
    %c64 = arith.constant 64 : index
    %c0_9 = arith.constant 0 : index
    %8 = vector.load %arg4[%c64, %c0_9] : memref<96x32xbf16, #tpu.memory_space<vmem>>, vector<32x32xbf16>
    %cst_10 = arith.constant dense<0.000000e+00> : vector<16x32xf32>
    %9 = tpu.matmul %7, %8, %cst_10 {dimension_numbers = #tpu.dot_dimension_numbers<[1], [0], [0], [1], [0, 0, 1, 1], [], []>} : vector<16x32xbf16>, vector<32x32xbf16>, vector<16x32xf32> -> vector<16x32xf32>
    %10 = arith.addf %6, %9 : vector<16x32xf32>
    %c0_11 = arith.constant 0 : index
    %c0_12 = arith.constant 0 : index
    %11 = vector.load %arg5[%c0_11, %c0_12] : memref<1x32xf32, #tpu.memory_space<vmem>>, vector<1x32xf32>
    %12 = vector.broadcast %11 : vector<1x32xf32> to vector<16x32xf32>
    %13 = arith.addf %10, %12 : vector<16x32xf32>
    %cst_13 = arith.constant dense<0.000000e+00> : vector<16xf32>
    %14 = vector.multi_reduction <add>, %13, %cst_13 [1] : vector<16x32xf32> to vector<16xf32>
    %15 = vector.shape_cast %14 : vector<16xf32> to vector<16x1xf32>
    %cst_14 = arith.constant 3.200000e+01 : f32
    %16 = vector.broadcast %cst_14 : f32 to vector<16x1xf32>
    %17 = arith.divf %15, %16 : vector<16x1xf32>
    %18 = vector.broadcast %17 : vector<16x1xf32> to vector<16x32xf32>
    %19 = arith.subf %13, %18 : vector<16x32xf32>
    %20 = arith.mulf %19, %19 : vector<16x32xf32>
    %cst_15 = arith.constant dense<0.000000e+00> : vector<16xf32>
    %21 = vector.multi_reduction <add>, %20, %cst_15 [1] : vector<16x32xf32> to vector<16xf32>
    %22 = vector.shape_cast %21 : vector<16xf32> to vector<16x1xf32>
    %cst_16 = arith.constant 3.200000e+01 : f32
    %23 = vector.broadcast %cst_16 : f32 to vector<16x1xf32>
    %24 = arith.divf %22, %23 : vector<16x1xf32>
    %25 = vector.broadcast %17 : vector<16x1xf32> to vector<16x32xf32>
    %26 = arith.subf %13, %25 : vector<16x32xf32>
    %cst_17 = arith.constant 9.99999996E-13 : f32
    %27 = vector.broadcast %cst_17 : f32 to vector<16x1xf32>
    %28 = arith.addf %24, %27 : vector<16x1xf32>
    %29 = math.rsqrt %28 : vector<16x1xf32>
    %30 = vector.broadcast %29 : vector<16x1xf32> to vector<16x32xf32>
    %31 = arith.mulf %26, %30 : vector<16x32xf32>
    %c0_18 = arith.constant 0 : index
    %c0_19 = arith.constant 0 : index
    %32 = vector.load %arg6[%c0_18, %c0_19] : memref<1x32xf32, #tpu.memory_space<vmem>>, vector<1x32xf32>
    %33 = vector.broadcast %32 : vector<1x32xf32> to vector<16x32xf32>
    %34 = arith.mulf %31, %33 : vector<16x32xf32>
    %c0_20 = arith.constant 0 : index
    %c0_21 = arith.constant 0 : index
    %35 = vector.load %arg7[%c0_20, %c0_21] : memref<1x32xf32, #tpu.memory_space<vmem>>, vector<1x32xf32>
    %36 = vector.broadcast %35 : vector<1x32xf32> to vector<16x32xf32>
    %37 = arith.addf %34, %36 : vector<16x32xf32>
    %38 = arith.truncf %37 : vector<16x32xf32> to vector<16x32xbf16>
    %c0_22 = arith.constant 0 : index
    %c0_23 = arith.constant 0 : index
    %39 = vector.load %arg8[%c0_22, %c0_23] : memref<32x512xbf16, #tpu.memory_space<vmem>>, vector<32x512xbf16>
    %cst_24 = arith.constant dense<0.000000e+00> : vector<16x512xf32>
    %40 = tpu.matmul %38, %39, %cst_24 {dimension_numbers = #tpu.dot_dimension_numbers<[1], [0], [0], [1], [0, 0, 1, 1], [], []>} : vector<16x32xbf16>, vector<32x512xbf16>, vector<16x512xf32> -> vector<16x512xf32>
    %c0_25 = arith.constant 0 : index
    %c0_26 = arith.constant 0 : index
    %41 = vector.load %arg9[%c0_25, %c0_26] : memref<1x512xf32, #tpu.memory_space<vmem>>, vector<1x512xf32>
    %42 = vector.broadcast %41 : vector<1x512xf32> to vector<16x512xf32>
    %43 = arith.addf %40, %42 : vector<16x512xf32>
    %44 = arith.truncf %43 : vector<16x512xf32> to vector<16x512xbf16>
    %c0_27 = arith.constant 0 : index
    %c0_28 = arith.constant 0 : index
    %45 = vector.load %arg10[%c0_27, %c0_28] : memref<16x512xbf16, #tpu.memory_space<vmem>>, vector<16x512xbf16>
    tpu.vector_store %arg10[%c0_27, %c0_28], %44 {strides = array<i32>} : memref<16x512xbf16, #tpu.memory_space<vmem>>, vector<16x512xbf16>,
    return
  }
  func.func @transform_0(%arg0: i32) -> (i32, i32) {
    %c0_i32 = arith.constant 0 : i32
    %c0_i32_0 = arith.constant 0 : i32
    return %arg0, %c0_i32 : i32, i32
  }
  func.func @transform_1(%arg0: i32) -> (i32, i32) {
    %c0_i32 = arith.constant 0 : i32
    %c0_i32_0 = arith.constant 0 : i32
    return %arg0, %c0_i32 : i32, i32
  }
  func.func @transform_2(%arg0: i32) -> (i32, i32) {
    %c0_i32 = arith.constant 0 : i32
    %c0_i32_0 = arith.constant 0 : i32
    return %arg0, %c0_i32 : i32, i32
  }
  func.func @transform_3(%arg0: i32) -> (i32, i32) {
    %c0_i32 = arith.constant 0 : i32
    %c0_i32_0 = arith.constant 0 : i32
    %c0_i32_1 = arith.constant 0 : i32
    return %c0_i32, %c0_i32_0 : i32, i32
  }
  func.func @transform_4(%arg0: i32) -> (i32, i32) {
    %c0_i32 = arith.constant 0 : i32
    %c0_i32_0 = arith.constant 0 : i32
    %c0_i32_1 = arith.constant 0 : i32
    return %c0_i32, %c0_i32_0 : i32, i32
  }
  func.func @transform_5(%arg0: i32) -> (i32, i32) {
    %c0_i32 = arith.constant 0 : i32
    %c0_i32_0 = arith.constant 0 : i32
    %c0_i32_1 = arith.constant 0 : i32
    return %c0_i32, %c0_i32_0 : i32, i32
  }
  func.func @transform_6(%arg0: i32) -> (i32, i32) {
    %c0_i32 = arith.constant 0 : i32
    %c0_i32_0 = arith.constant 0 : i32
    %c0_i32_1 = arith.constant 0 : i32
    return %c0_i32, %c0_i32_0 : i32, i32
  }
  func.func @transform_7(%arg0: i32) -> (i32, i32) {
    %c0_i32 = arith.constant 0 : i32
    %c0_i32_0 = arith.constant 0 : i32
    %c0_i32_1 = arith.constant 0 : i32
    return %c0_i32, %c0_i32_0 : i32, i32
  }
  func.func @transform_8(%arg0: i32) -> (i32, i32) {
    %c0_i32 = arith.constant 0 : i32
    %c0_i32_0 = arith.constant 0 : i32
    %c0_i32_1 = arith.constant 0 : i32
    return %c0_i32, %c0_i32_0 : i32, i32
  }
  func.func @transform_9(%arg0: i32) -> (i32, i32) {
    %c0_i32 = arith.constant 0 : i32
    %c0_i32_0 = arith.constant 0 : i32
    return %arg0, %c0_i32 : i32, i32
  }
}

module attributes {stable_mosaic.version = 11 : i64} {
  func.func @_tlstm_kernel(%arg0: i32, %arg1: memref<4x4x512xbf16, #tpu.memory_space<vmem>>, %arg2: memref<4x4x1xf32, #tpu.memory_space<vmem>>, %arg3: memref<256x640xbf16, #tpu.memory_space<vmem>>, %arg4: memref<1x128xf32, #tpu.memory_space<vmem>>, %arg5: memref<256x4xf32, #tpu.memory_space<vmem>>, %arg6: memref<1x4xf32, #tpu.memory_space<vmem>>, %arg7: memref<4x4x128xf32, #tpu.memory_space<vmem>>, %arg8: memref<1x4xf32, #tpu.memory_space<vmem>>, %arg9: memref<4x256xf32, #tpu.memory_space<vmem>>, %arg10: memref<4x4x1xf32, #tpu.memory_space<vmem>>) attributes {dimension_semantics = [#tpu.dimension_semantics<arbitrary>], iteration_bounds = array<i64: 2>, scalar_prefetch = 0 : i64, scratch_operands = 2 : i64, tpu.core_type = #tpu.core_type<tc>, window_params = [{transform_indices = @transform_0, window_bounds = array<i64: 4, 4, 512>}, {transform_indices = @transform_1, window_bounds = array<i64: 4, 4, 1>}, {pipeline_mode = #tpu.pipeline_mode<synchronous>, transform_indices = @transform_2, window_bounds = array<i64: 256, 640>}, {pipeline_mode = #tpu.pipeline_mode<synchronous>, transform_indices = @transform_3, window_bounds = array<i64: 1, 128>}, {pipeline_mode = #tpu.pipeline_mode<synchronous>, transform_indices = @transform_4, window_bounds = array<i64: 256, 4>}, {pipeline_mode = #tpu.pipeline_mode<synchronous>, transform_indices = @transform_5, window_bounds = array<i64: 1, 4>}, {transform_indices = @transform_6, window_bounds = array<i64: 4, 4, 128>}, {pipeline_mode = #tpu.pipeline_mode<synchronous>, transform_indices = @transform_7, window_bounds = array<i64: 1, 4>}]} {
    %c0_i32 = arith.constant 0 : i32
    %0 = arith.cmpi eq, %arg0, %c0_i32 : i32
    %1 = arith.extui %0 : i1 to i32
    %c0_i32_0 = arith.constant 0 : i32
    %2 = arith.cmpi ne, %1, %c0_i32_0 : i32
    scf.if %2 {
      %cst_50 = arith.constant 0.000000e+00 : f32
      %173 = vector.broadcast %cst_50 : f32 to vector<4x256xf32>
      %c0_51 = arith.constant 0 : index
      %c0_52 = arith.constant 0 : index
      %174 = vector.load %arg9[%c0_51, %c0_52] : memref<4x256xf32, #tpu.memory_space<vmem>>, vector<4x256xf32>
      tpu.vector_store %arg9[%c0_51, %c0_52], %173 {strides = array<i32>} : memref<4x256xf32, #tpu.memory_space<vmem>>, vector<4x256xf32>,
      %cst_53 = arith.constant 0.000000e+00 : f32
      %175 = vector.broadcast %cst_53 : f32 to vector<1x4xf32>
      %c0_54 = arith.constant 0 : index
      %c0_55 = arith.constant 0 : index
      %176 = vector.load %arg8[%c0_54, %c0_55] : memref<1x4xf32, #tpu.memory_space<vmem>>, vector<1x4xf32>
      tpu.vector_store %arg8[%c0_54, %c0_55], %175 {strides = array<i32>} : memref<1x4xf32, #tpu.memory_space<vmem>>, vector<1x4xf32>,
    } else {
    }
    %c0 = arith.constant 0 : index
    %c0_1 = arith.constant 0 : index
    %c0_2 = arith.constant 0 : index
    %3 = vector.load %arg2[%c0, %c0_1, %c0_2] : memref<4x4x1xf32, #tpu.memory_space<vmem>>, vector<4x4x1xf32>
    %cst = arith.constant 2.71828175 : f32
    %4 = vector.broadcast %cst : f32 to vector<4x4x1xf32>
    %5 = arith.addf %3, %4 : vector<4x4x1xf32>
    %6 = math.log %5 : vector<4x4x1xf32>
    %cst_3 = arith.constant 1.000000e+00 : f32
    %7 = vector.broadcast %cst_3 : f32 to vector<4x4x1xf32>
    %8 = arith.divf %7, %6 : vector<4x4x1xf32>
    %c0_4 = arith.constant 0 : index
    %c0_5 = arith.constant 0 : index
    %c0_6 = arith.constant 0 : index
    %9 = vector.load %arg10[%c0_4, %c0_5, %c0_6] : memref<4x4x1xf32, #tpu.memory_space<vmem>>, vector<4x4x1xf32>
    tpu.vector_store %arg10[%c0_4, %c0_5, %c0_6], %8 {strides = array<i32>} : memref<4x4x1xf32, #tpu.memory_space<vmem>>, vector<4x4x1xf32>,
    %c0_7 = arith.constant 0 : index
    %c0_8 = arith.constant 0 : index
    %10 = vector.load %arg3[%c0_7, %c0_8] : memref<256x640xbf16, #tpu.memory_space<vmem>>, vector<256x640xbf16>
    %c0_9 = arith.constant 0 : index
    %c0_10 = arith.constant 0 : index
    %11 = vector.load %arg4[%c0_9, %c0_10] : memref<1x128xf32, #tpu.memory_space<vmem>>, vector<1x128xf32>
    %c0_11 = arith.constant 0 : index
    %c0_12 = arith.constant 0 : index
    %12 = vector.load %arg9[%c0_11, %c0_12] : memref<4x256xf32, #tpu.memory_space<vmem>>, vector<4x256xf32>
    %c0_i32_13 = arith.constant 0 : i32
    %13 = vector.extract_strided_slice %12 {offsets = [0, 0], sizes = [4, 128], strides = [1, 1]} : vector<4x256xf32> to vector<4x128xf32>
    %14 = arith.index_cast %c0_i32_13 : i32 to index
    %c0_14 = arith.constant 0 : index
    %c0_15 = arith.constant 0 : index
    %15 = vector.load %arg10[%14, %c0_14, %c0_15] : memref<4x4x1xf32, #tpu.memory_space<vmem>>, vector<1x4x1xf32>
    %16 = vector.shape_cast %15 : vector<1x4x1xf32> to vector<4x1xf32>
    %17 = arith.truncf %12 : vector<4x256xf32> to vector<4x256xbf16>
    %cst_16 = arith.constant dense<0.000000e+00> : vector<4x640xf32>
    %18 = tpu.matmul %17, %10, %cst_16 {dimension_numbers = #tpu.dot_dimension_numbers<[1], [0], [0], [1], [0, 0, 1, 1], [], []>} : vector<4x256xbf16>, vector<256x640xbf16>, vector<4x640xf32> -> vector<4x640xf32>
    %19 = vector.extract_strided_slice %18 {offsets = [0, 0], sizes = [4, 128], strides = [1, 1]} : vector<4x640xf32> to vector<4x128xf32>
    %20 = vector.broadcast %11 : vector<1x128xf32> to vector<4x128xf32>
    %21 = arith.addf %19, %20 : vector<4x128xf32>
    %22 = math.tanh %21 : vector<4x128xf32>
    %23 = arith.subf %13, %22 : vector<4x128xf32>
    %24 = vector.broadcast %16 : vector<4x1xf32> to vector<4x128xf32>
    %25 = arith.mulf %24, %22 : vector<4x128xf32>
    %26 = arith.addf %23, %25 : vector<4x128xf32>
    %27 = vector.extract_strided_slice %18 {offsets = [0, 128], sizes = [4, 512], strides = [1, 1]} : vector<4x640xf32> to vector<4x512xf32>
    %28 = arith.index_cast %c0_i32_13 : i32 to index
    %c0_17 = arith.constant 0 : index
    %c0_18 = arith.constant 0 : index
    %29 = vector.load %arg1[%28, %c0_17, %c0_18] : memref<4x4x512xbf16, #tpu.memory_space<vmem>>, vector<1x4x512xbf16>
    %30 = vector.shape_cast %29 : vector<1x4x512xbf16> to vector<4x512xbf16>
    %31 = arith.extf %30 : vector<4x512xbf16> to vector<4x512xf32>
    %32 = arith.addf %27, %31 : vector<4x512xf32>
    %33 = arith.negf %32 : vector<4x512xf32>
    %34 = math.exp %33 : vector<4x512xf32>
    %cst_19 = arith.constant 1.000000e+00 : f32
    %35 = vector.broadcast %cst_19 : f32 to vector<4x512xf32>
    %36 = arith.addf %35, %34 : vector<4x512xf32>
    %37 = arith.divf %35, %36 : vector<4x512xf32>
    %38 = vector.extract_strided_slice %37 {offsets = [0, 0], sizes = [4, 128], strides = [1, 1]} : vector<4x512xf32> to vector<4x128xf32>
    %39 = vector.extract_strided_slice %37 {offsets = [0, 128], sizes = [4, 128], strides = [1, 1]} : vector<4x512xf32> to vector<4x128xf32>
    %40 = vector.extract_strided_slice %37 {offsets = [0, 256], sizes = [4, 128], strides = [1, 1]} : vector<4x512xf32> to vector<4x128xf32>
    %41 = vector.extract_strided_slice %37 {offsets = [0, 384], sizes = [4, 128], strides = [1, 1]} : vector<4x512xf32> to vector<4x128xf32>
    %42 = arith.mulf %39, %26 : vector<4x128xf32>
    %43 = arith.mulf %38, %41 : vector<4x128xf32>
    %44 = arith.addf %42, %43 : vector<4x128xf32>
    %45 = math.tanh %44 : vector<4x128xf32>
    %46 = arith.mulf %40, %45 : vector<4x128xf32>
    %47 = arith.index_cast %c0_i32_13 : i32 to index
    %c0_20 = arith.constant 0 : index
    %c0_21 = arith.constant 0 : index
    %48 = vector.load %arg7[%47, %c0_20, %c0_21] : memref<4x4x128xf32, #tpu.memory_space<vmem>>, vector<1x4x128xf32>
    %49 = vector.shape_cast %48 : vector<1x4x128xf32> to vector<4x128xf32>
    %50 = vector.shape_cast %46 : vector<4x128xf32> to vector<1x4x128xf32>
    tpu.vector_store %arg7[%47, %c0_20, %c0_21], %50 {strides = array<i32>} : memref<4x4x128xf32, #tpu.memory_space<vmem>>, vector<1x4x128xf32>,
    %51 = tpu.concatenate %44, %46 in 1 : vector<4x128xf32>, vector<4x128xf32> -> vector<4x256xf32>
    %c1_i32 = arith.constant 1 : i32
    %52 = vector.extract_strided_slice %51 {offsets = [0, 0], sizes = [4, 128], strides = [1, 1]} : vector<4x256xf32> to vector<4x128xf32>
    %53 = arith.index_cast %c1_i32 : i32 to index
    %c0_22 = arith.constant 0 : index
    %c0_23 = arith.constant 0 : index
    %54 = vector.load %arg10[%53, %c0_22, %c0_23] : memref<4x4x1xf32, #tpu.memory_space<vmem>>, vector<1x4x1xf32>
    %55 = vector.shape_cast %54 : vector<1x4x1xf32> to vector<4x1xf32>
    %56 = arith.truncf %51 : vector<4x256xf32> to vector<4x256xbf16>
    %cst_24 = arith.constant dense<0.000000e+00> : vector<4x640xf32>
    %57 = tpu.matmul %56, %10, %cst_24 {dimension_numbers = #tpu.dot_dimension_numbers<[1], [0], [0], [1], [0, 0, 1, 1], [], []>} : vector<4x256xbf16>, vector<256x640xbf16>, vector<4x640xf32> -> vector<4x640xf32>
    %58 = vector.extract_strided_slice %57 {offsets = [0, 0], sizes = [4, 128], strides = [1, 1]} : vector<4x640xf32> to vector<4x128xf32>
    %59 = vector.broadcast %11 : vector<1x128xf32> to vector<4x128xf32>
    %60 = arith.addf %58, %59 : vector<4x128xf32>
    %61 = math.tanh %60 : vector<4x128xf32>
    %62 = arith.subf %52, %61 : vector<4x128xf32>
    %63 = vector.broadcast %55 : vector<4x1xf32> to vector<4x128xf32>
    %64 = arith.mulf %63, %61 : vector<4x128xf32>
    %65 = arith.addf %62, %64 : vector<4x128xf32>
    %66 = vector.extract_strided_slice %57 {offsets = [0, 128], sizes = [4, 512], strides = [1, 1]} : vector<4x640xf32> to vector<4x512xf32>
    %67 = arith.index_cast %c1_i32 : i32 to index
    %c0_25 = arith.constant 0 : index
    %c0_26 = arith.constant 0 : index
    %68 = vector.load %arg1[%67, %c0_25, %c0_26] : memref<4x4x512xbf16, #tpu.memory_space<vmem>>, vector<1x4x512xbf16>
    %69 = vector.shape_cast %68 : vector<1x4x512xbf16> to vector<4x512xbf16>
    %70 = arith.extf %69 : vector<4x512xbf16> to vector<4x512xf32>
    %71 = arith.addf %66, %70 : vector<4x512xf32>
    %72 = arith.negf %71 : vector<4x512xf32>
    %73 = math.exp %72 : vector<4x512xf32>
    %cst_27 = arith.constant 1.000000e+00 : f32
    %74 = vector.broadcast %cst_27 : f32 to vector<4x512xf32>
    %75 = arith.addf %74, %73 : vector<4x512xf32>
    %76 = arith.divf %74, %75 : vector<4x512xf32>
    %77 = vector.extract_strided_slice %76 {offsets = [0, 0], sizes = [4, 128], strides = [1, 1]} : vector<4x512xf32> to vector<4x128xf32>
    %78 = vector.extract_strided_slice %76 {offsets = [0, 128], sizes = [4, 128], strides = [1, 1]} : vector<4x512xf32> to vector<4x128xf32>
    %79 = vector.extract_strided_slice %76 {offsets = [0, 256], sizes = [4, 128], strides = [1, 1]} : vector<4x512xf32> to vector<4x128xf32>
    %80 = vector.extract_strided_slice %76 {offsets = [0, 384], sizes = [4, 128], strides = [1, 1]} : vector<4x512xf32> to vector<4x128xf32>
    %81 = arith.mulf %78, %65 : vector<4x128xf32>
    %82 = arith.mulf %77, %80 : vector<4x128xf32>
    %83 = arith.addf %81, %82 : vector<4x128xf32>
    %84 = math.tanh %83 : vector<4x128xf32>
    %85 = arith.mulf %79, %84 : vector<4x128xf32>
    %86 = arith.index_cast %c1_i32 : i32 to index
    %c0_28 = arith.constant 0 : index
    %c0_29 = arith.constant 0 : index
    %87 = vector.load %arg7[%86, %c0_28, %c0_29] : memref<4x4x128xf32, #tpu.memory_space<vmem>>, vector<1x4x128xf32>
    %88 = vector.shape_cast %87 : vector<1x4x128xf32> to vector<4x128xf32>
    %89 = vector.shape_cast %85 : vector<4x128xf32> to vector<1x4x128xf32>
    tpu.vector_store %arg7[%86, %c0_28, %c0_29], %89 {strides = array<i32>} : memref<4x4x128xf32, #tpu.memory_space<vmem>>, vector<1x4x128xf32>,
    %90 = tpu.concatenate %83, %85 in 1 : vector<4x128xf32>, vector<4x128xf32> -> vector<4x256xf32>
    %c2_i32 = arith.constant 2 : i32
    %91 = vector.extract_strided_slice %90 {offsets = [0, 0], sizes = [4, 128], strides = [1, 1]} : vector<4x256xf32> to vector<4x128xf32>
    %92 = arith.index_cast %c2_i32 : i32 to index
    %c0_30 = arith.constant 0 : index
    %c0_31 = arith.constant 0 : index
    %93 = vector.load %arg10[%92, %c0_30, %c0_31] : memref<4x4x1xf32, #tpu.memory_space<vmem>>, vector<1x4x1xf32>
    %94 = vector.shape_cast %93 : vector<1x4x1xf32> to vector<4x1xf32>
    %95 = arith.truncf %90 : vector<4x256xf32> to vector<4x256xbf16>
    %cst_32 = arith.constant dense<0.000000e+00> : vector<4x640xf32>
    %96 = tpu.matmul %95, %10, %cst_32 {dimension_numbers = #tpu.dot_dimension_numbers<[1], [0], [0], [1], [0, 0, 1, 1], [], []>} : vector<4x256xbf16>, vector<256x640xbf16>, vector<4x640xf32> -> vector<4x640xf32>
    %97 = vector.extract_strided_slice %96 {offsets = [0, 0], sizes = [4, 128], strides = [1, 1]} : vector<4x640xf32> to vector<4x128xf32>
    %98 = vector.broadcast %11 : vector<1x128xf32> to vector<4x128xf32>
    %99 = arith.addf %97, %98 : vector<4x128xf32>
    %100 = math.tanh %99 : vector<4x128xf32>
    %101 = arith.subf %91, %100 : vector<4x128xf32>
    %102 = vector.broadcast %94 : vector<4x1xf32> to vector<4x128xf32>
    %103 = arith.mulf %102, %100 : vector<4x128xf32>
    %104 = arith.addf %101, %103 : vector<4x128xf32>
    %105 = vector.extract_strided_slice %96 {offsets = [0, 128], sizes = [4, 512], strides = [1, 1]} : vector<4x640xf32> to vector<4x512xf32>
    %106 = arith.index_cast %c2_i32 : i32 to index
    %c0_33 = arith.constant 0 : index
    %c0_34 = arith.constant 0 : index
    %107 = vector.load %arg1[%106, %c0_33, %c0_34] : memref<4x4x512xbf16, #tpu.memory_space<vmem>>, vector<1x4x512xbf16>
    %108 = vector.shape_cast %107 : vector<1x4x512xbf16> to vector<4x512xbf16>
    %109 = arith.extf %108 : vector<4x512xbf16> to vector<4x512xf32>
    %110 = arith.addf %105, %109 : vector<4x512xf32>
    %111 = arith.negf %110 : vector<4x512xf32>
    %112 = math.exp %111 : vector<4x512xf32>
    %cst_35 = arith.constant 1.000000e+00 : f32
    %113 = vector.broadcast %cst_35 : f32 to vector<4x512xf32>
    %114 = arith.addf %113, %112 : vector<4x512xf32>
    %115 = arith.divf %113, %114 : vector<4x512xf32>
    %116 = vector.extract_strided_slice %115 {offsets = [0, 0], sizes = [4, 128], strides = [1, 1]} : vector<4x512xf32> to vector<4x128xf32>
    %117 = vector.extract_strided_slice %115 {offsets = [0, 128], sizes = [4, 128], strides = [1, 1]} : vector<4x512xf32> to vector<4x128xf32>
    %118 = vector.extract_strided_slice %115 {offsets = [0, 256], sizes = [4, 128], strides = [1, 1]} : vector<4x512xf32> to vector<4x128xf32>
    %119 = vector.extract_strided_slice %115 {offsets = [0, 384], sizes = [4, 128], strides = [1, 1]} : vector<4x512xf32> to vector<4x128xf32>
    %120 = arith.mulf %117, %104 : vector<4x128xf32>
    %121 = arith.mulf %116, %119 : vector<4x128xf32>
    %122 = arith.addf %120, %121 : vector<4x128xf32>
    %123 = math.tanh %122 : vector<4x128xf32>
    %124 = arith.mulf %118, %123 : vector<4x128xf32>
    %125 = arith.index_cast %c2_i32 : i32 to index
    %c0_36 = arith.constant 0 : index
    %c0_37 = arith.constant 0 : index
    %126 = vector.load %arg7[%125, %c0_36, %c0_37] : memref<4x4x128xf32, #tpu.memory_space<vmem>>, vector<1x4x128xf32>
    %127 = vector.shape_cast %126 : vector<1x4x128xf32> to vector<4x128xf32>
    %128 = vector.shape_cast %124 : vector<4x128xf32> to vector<1x4x128xf32>
    tpu.vector_store %arg7[%125, %c0_36, %c0_37], %128 {strides = array<i32>} : memref<4x4x128xf32, #tpu.memory_space<vmem>>, vector<1x4x128xf32>,
    %129 = tpu.concatenate %122, %124 in 1 : vector<4x128xf32>, vector<4x128xf32> -> vector<4x256xf32>
    %c3_i32 = arith.constant 3 : i32
    %130 = vector.extract_strided_slice %129 {offsets = [0, 0], sizes = [4, 128], strides = [1, 1]} : vector<4x256xf32> to vector<4x128xf32>
    %131 = arith.index_cast %c3_i32 : i32 to index
    %c0_38 = arith.constant 0 : index
    %c0_39 = arith.constant 0 : index
    %132 = vector.load %arg10[%131, %c0_38, %c0_39] : memref<4x4x1xf32, #tpu.memory_space<vmem>>, vector<1x4x1xf32>
    %133 = vector.shape_cast %132 : vector<1x4x1xf32> to vector<4x1xf32>
    %134 = arith.truncf %129 : vector<4x256xf32> to vector<4x256xbf16>
    %cst_40 = arith.constant dense<0.000000e+00> : vector<4x640xf32>
    %135 = tpu.matmul %134, %10, %cst_40 {dimension_numbers = #tpu.dot_dimension_numbers<[1], [0], [0], [1], [0, 0, 1, 1], [], []>} : vector<4x256xbf16>, vector<256x640xbf16>, vector<4x640xf32> -> vector<4x640xf32>
    %136 = vector.extract_strided_slice %135 {offsets = [0, 0], sizes = [4, 128], strides = [1, 1]} : vector<4x640xf32> to vector<4x128xf32>
    %137 = vector.broadcast %11 : vector<1x128xf32> to vector<4x128xf32>
    %138 = arith.addf %136, %137 : vector<4x128xf32>
    %139 = math.tanh %138 : vector<4x128xf32>
    %140 = arith.subf %130, %139 : vector<4x128xf32>
    %141 = vector.broadcast %133 : vector<4x1xf32> to vector<4x128xf32>
    %142 = arith.mulf %141, %139 : vector<4x128xf32>
    %143 = arith.addf %140, %142 : vector<4x128xf32>
    %144 = vector.extract_strided_slice %135 {offsets = [0, 128], sizes = [4, 512], strides = [1, 1]} : vector<4x640xf32> to vector<4x512xf32>
    %145 = arith.index_cast %c3_i32 : i32 to index
    %c0_41 = arith.constant 0 : index
    %c0_42 = arith.constant 0 : index
    %146 = vector.load %arg1[%145, %c0_41, %c0_42] : memref<4x4x512xbf16, #tpu.memory_space<vmem>>, vector<1x4x512xbf16>
    %147 = vector.shape_cast %146 : vector<1x4x512xbf16> to vector<4x512xbf16>
    %148 = arith.extf %147 : vector<4x512xbf16> to vector<4x512xf32>
    %149 = arith.addf %144, %148 : vector<4x512xf32>
    %150 = arith.negf %149 : vector<4x512xf32>
    %151 = math.exp %150 : vector<4x512xf32>
    %cst_43 = arith.constant 1.000000e+00 : f32
    %152 = vector.broadcast %cst_43 : f32 to vector<4x512xf32>
    %153 = arith.addf %152, %151 : vector<4x512xf32>
    %154 = arith.divf %152, %153 : vector<4x512xf32>
    %155 = vector.extract_strided_slice %154 {offsets = [0, 0], sizes = [4, 128], strides = [1, 1]} : vector<4x512xf32> to vector<4x128xf32>
    %156 = vector.extract_strided_slice %154 {offsets = [0, 128], sizes = [4, 128], strides = [1, 1]} : vector<4x512xf32> to vector<4x128xf32>
    %157 = vector.extract_strided_slice %154 {offsets = [0, 256], sizes = [4, 128], strides = [1, 1]} : vector<4x512xf32> to vector<4x128xf32>
    %158 = vector.extract_strided_slice %154 {offsets = [0, 384], sizes = [4, 128], strides = [1, 1]} : vector<4x512xf32> to vector<4x128xf32>
    %159 = arith.mulf %156, %143 : vector<4x128xf32>
    %160 = arith.mulf %155, %158 : vector<4x128xf32>
    %161 = arith.addf %159, %160 : vector<4x128xf32>
    %162 = math.tanh %161 : vector<4x128xf32>
    %163 = arith.mulf %157, %162 : vector<4x128xf32>
    %164 = arith.index_cast %c3_i32 : i32 to index
    %c0_44 = arith.constant 0 : index
    %c0_45 = arith.constant 0 : index
    %165 = vector.load %arg7[%164, %c0_44, %c0_45] : memref<4x4x128xf32, #tpu.memory_space<vmem>>, vector<1x4x128xf32>
    %166 = vector.shape_cast %165 : vector<1x4x128xf32> to vector<4x128xf32>
    %167 = vector.shape_cast %163 : vector<4x128xf32> to vector<1x4x128xf32>
    tpu.vector_store %arg7[%164, %c0_44, %c0_45], %167 {strides = array<i32>} : memref<4x4x128xf32, #tpu.memory_space<vmem>>, vector<1x4x128xf32>,
    %168 = tpu.concatenate %161, %163 in 1 : vector<4x128xf32>, vector<4x128xf32> -> vector<4x256xf32>
    %c4_i32 = arith.constant 4 : i32
    %c0_46 = arith.constant 0 : index
    %c0_47 = arith.constant 0 : index
    %169 = vector.load %arg9[%c0_46, %c0_47] : memref<4x256xf32, #tpu.memory_space<vmem>>, vector<4x256xf32>
    tpu.vector_store %arg9[%c0_46, %c0_47], %168 {strides = array<i32>} : memref<4x256xf32, #tpu.memory_space<vmem>>, vector<4x256xf32>,
    %c1_i32_48 = arith.constant 1 : i32
    %170 = arith.cmpi eq, %arg0, %c1_i32_48 : i32
    %171 = arith.extui %170 : i1 to i32
    %c0_i32_49 = arith.constant 0 : i32
    %172 = arith.cmpi ne, %171, %c0_i32_49 : i32
    scf.if %172 {
      %173 = vector.extract_strided_slice %168 {offsets = [0, 128], sizes = [4, 128], strides = [1, 1]} : vector<4x256xf32> to vector<4x128xf32>
      %174 = vector.extract_strided_slice %173 {offsets = [0, 0], sizes = [1, 128], strides = [1, 1]} : vector<4x128xf32> to vector<1x128xf32>
      %175 = vector.extract_strided_slice %173 {offsets = [2, 0], sizes = [1, 128], strides = [1, 1]} : vector<4x128xf32> to vector<1x128xf32>
      %c0_50 = arith.constant 0 : index
      %c0_51 = arith.constant 0 : index
      %176 = vector.load %arg5[%c0_50, %c0_51] : memref<256x4xf32, #tpu.memory_space<vmem>>, vector<128x4xf32>
      %cst_52 = arith.constant dense<0.000000e+00> : vector<1x4xf32>
      %177 = tpu.matmul %174, %176, %cst_52 {dimension_numbers = #tpu.dot_dimension_numbers<[1], [0], [0], [1], [0, 0, 1, 1], [], []>} : vector<1x128xf32>, vector<128x4xf32>, vector<1x4xf32> -> vector<1x4xf32>
      %c128 = arith.constant 128 : index
      %c0_53 = arith.constant 0 : index
      %178 = vector.load %arg5[%c128, %c0_53] : memref<256x4xf32, #tpu.memory_space<vmem>>, vector<128x4xf32>
      %cst_54 = arith.constant dense<0.000000e+00> : vector<1x4xf32>
      %179 = tpu.matmul %175, %178, %cst_54 {dimension_numbers = #tpu.dot_dimension_numbers<[1], [0], [0], [1], [0, 0, 1, 1], [], []>} : vector<1x128xf32>, vector<128x4xf32>, vector<1x4xf32> -> vector<1x4xf32>
      %180 = arith.addf %177, %179 : vector<1x4xf32>
      %c0_55 = arith.constant 0 : index
      %c0_56 = arith.constant 0 : index
      %181 = vector.load %arg6[%c0_55, %c0_56] : memref<1x4xf32, #tpu.memory_space<vmem>>, vector<1x4xf32>
      %182 = arith.addf %180, %181 : vector<1x4xf32>
      %183 = arith.cmpf one, %182, %182 : vector<1x4xf32>
      %184 = math.absf %182 : vector<1x4xf32>
      %cst_57 = arith.constant 0x7F800000 : f32
      %185 = vector.broadcast %cst_57 : f32 to vector<1x4xf32>
      %186 = arith.cmpf oeq, %184, %185 : vector<1x4xf32>
      %187 = arith.ori %183, %186 : vector<1x4xi1>
      %cst_58 = arith.constant 0.000000e+00 : f32
      %188 = vector.broadcast %cst_58 : f32 to vector<1x4xf32>
      %189 = arith.select %187, %188, %182 : vector<1x4xi1>, vector<1x4xf32>
      %190 = arith.negf %189 : vector<1x4xf32>
      %191 = math.exp %190 : vector<1x4xf32>
      %cst_59 = arith.constant 1.000000e+00 : f32
      %192 = vector.broadcast %cst_59 : f32 to vector<1x4xf32>
      %193 = arith.addf %192, %191 : vector<1x4xf32>
      %194 = arith.divf %192, %193 : vector<1x4xf32>
      %195 = arith.cmpf one, %194, %194 : vector<1x4xf32>
      %196 = math.absf %194 : vector<1x4xf32>
      %cst_60 = arith.constant 0x7F800000 : f32
      %197 = vector.broadcast %cst_60 : f32 to vector<1x4xf32>
      %198 = arith.cmpf oeq, %196, %197 : vector<1x4xf32>
      %199 = arith.ori %195, %198 : vector<1x4xi1>
      %cst_61 = arith.constant 0.000000e+00 : f32
      %200 = vector.broadcast %cst_61 : f32 to vector<1x4xf32>
      %201 = arith.select %199, %200, %194 : vector<1x4xi1>, vector<1x4xf32>
      %c0_62 = arith.constant 0 : index
      %c0_63 = arith.constant 0 : index
      %202 = vector.load %arg8[%c0_62, %c0_63] : memref<1x4xf32, #tpu.memory_space<vmem>>, vector<1x4xf32>
      tpu.vector_store %arg8[%c0_62, %c0_63], %201 {strides = array<i32>} : memref<1x4xf32, #tpu.memory_space<vmem>>, vector<1x4xf32>,
    } else {
    }
    return
  }
  func.func @transform_0(%arg0: i32) -> (i32, i32, i32) {
    %c0_i32 = arith.constant 0 : i32
    %c0_i32_0 = arith.constant 0 : i32
    %c0_i32_1 = arith.constant 0 : i32
    return %arg0, %c0_i32, %c0_i32_0 : i32, i32, i32
  }
  func.func @transform_1(%arg0: i32) -> (i32, i32, i32) {
    %c0_i32 = arith.constant 0 : i32
    %c0_i32_0 = arith.constant 0 : i32
    %c0_i32_1 = arith.constant 0 : i32
    return %arg0, %c0_i32, %c0_i32_0 : i32, i32, i32
  }
  func.func @transform_2(%arg0: i32) -> (i32, i32) {
    %c0_i32 = arith.constant 0 : i32
    %c0_i32_0 = arith.constant 0 : i32
    %c0_i32_1 = arith.constant 0 : i32
    return %c0_i32, %c0_i32_0 : i32, i32
  }
  func.func @transform_3(%arg0: i32) -> (i32, i32) {
    %c0_i32 = arith.constant 0 : i32
    %c0_i32_0 = arith.constant 0 : i32
    %c0_i32_1 = arith.constant 0 : i32
    return %c0_i32, %c0_i32_0 : i32, i32
  }
  func.func @transform_4(%arg0: i32) -> (i32, i32) {
    %c0_i32 = arith.constant 0 : i32
    %c0_i32_0 = arith.constant 0 : i32
    %c0_i32_1 = arith.constant 0 : i32
    return %c0_i32, %c0_i32_0 : i32, i32
  }
  func.func @transform_5(%arg0: i32) -> (i32, i32) {
    %c0_i32 = arith.constant 0 : i32
    %c0_i32_0 = arith.constant 0 : i32
    %c0_i32_1 = arith.constant 0 : i32
    return %c0_i32, %c0_i32_0 : i32, i32
  }
  func.func @transform_6(%arg0: i32) -> (i32, i32, i32) {
    %c0_i32 = arith.constant 0 : i32
    %c0_i32_0 = arith.constant 0 : i32
    %c0_i32_1 = arith.constant 0 : i32
    return %arg0, %c0_i32, %c0_i32_0 : i32, i32, i32
  }
  func.func @transform_7(%arg0: i32) -> (i32, i32) {
    %c0_i32 = arith.constant 0 : i32
    %c0_i32_0 = arith.constant 0 : i32
    %c0_i32_1 = arith.constant 0 : i32
    return %c0_i32, %c0_i32_0 : i32, i32
  }
}

</mosaic_0001>

<llo_original>
// kernel: _lambda_.2
$region0: #{_lambda_.2}
  #allocation0 [shape = 'u32[]', space=smem, size = 0x4, offset = 0x4, fixed_abs, tag = 'smem constant byte address 0x4 - core index']
  #allocation1 [shape = 'u32[72,128]{1,0:T(1,128)}', space=vmem, size = 0x9000, scoped, tag = 'internal scratch']
  %s0 = inlined_call_operand.vmem [shape: bf16[16,32], index: 0, kind: input, shape index: {}]
  %s1 = inlined_call_operand.vmem [shape: bf16[16,32], index: 1, kind: input, shape index: {}]
  %s2 = inlined_call_operand.vmem [shape: bf16[16,32], index: 2, kind: input, shape index: {}]
  %s3 = inlined_call_operand.vmem [shape: bf16[96,32], index: 3, kind: input, shape index: {}]
  %s4 = inlined_call_operand.vmem [shape: f32[1,32], index: 4, kind: input, shape index: {}]
  %s5 = inlined_call_operand.vmem [shape: f32[1,32], index: 5, kind: input, shape index: {}]
  %s6 = inlined_call_operand.vmem [shape: f32[1,32], index: 6, kind: input, shape index: {}]
  %s7 = inlined_call_operand.vmem [shape: bf16[32,512], index: 7, kind: input, shape index: {}]
  %s8 = inlined_call_operand.vmem [shape: f32[1,512], index: 8, kind: input, shape index: {}]
  %s9 = inlined_call_operand.vmem [shape: bf16[16,512], index: 9, kind: output, shape index: {}]
  %s10 = sld [smem:[#allocation0]]
  $region46: #{_lambda_.2} parent=0
    _
  %s12 = ssub.s32 1, %s10
  %s13 = scalar_select 0, %s12, %s10
  // Predicated region
  $region2: #{_lambda_.2} parent=0 // pred_check
    _
  $region3: #{_lambda_.2} parent=0 // pred_check_branch
    %15 = sbr.rel (0) target = $region5
  $region4: #{_lambda_.2} parent=0 // pred_region
    _
  $region5: #{_lambda_.2} parent=0 // pred_fallthru
    _
  // Predicated region
  $region6: #{_lambda_.2} parent=0 // pred_check
    _
  $region7: #{_lambda_.2} parent=0 // pred_check_branch
    %17 = sbr.rel (0) target = $region9
  $region8: #{_lambda_.2} parent=0 // pred_region
    _
  $region9: #{_lambda_.2} parent=0 // pred_fallthru
    _
  // Predicated region
  $region10: #{_lambda_.2} parent=0 // pred_check
    _
  $region11: #{_lambda_.2} parent=0 // pred_check_branch
    %19 = sbr.rel (0) target = $region13
  $region12: #{_lambda_.2} parent=0 // pred_region
    _
  $region13: #{_lambda_.2} parent=0 // pred_fallthru
    _
  // Predicated region
  $region14: #{_lambda_.2} parent=0 // pred_check
    _
  $region15: #{_lambda_.2} parent=0 // pred_check_branch
    %21 = sbr.rel (0) target = $region17
  $region16: #{_lambda_.2} parent=0 // pred_region
    _
  $region17: #{_lambda_.2} parent=0 // pred_fallthru
    _
  // Predicated region
  $region18: #{_lambda_.2} parent=0 // pred_check
    _
  $region19: #{_lambda_.2} parent=0 // pred_check_branch
    %23 = sbr.rel (0) target = $region21
  $region20: #{_lambda_.2} parent=0 // pred_region
    _
  $region21: #{_lambda_.2} parent=0 // pred_fallthru
    _
  // Predicated region
  $region22: #{_lambda_.2} parent=0 // pred_check
    _
  $region23: #{_lambda_.2} parent=0 // pred_check_branch
    %25 = sbr.rel (0) target = $region25
  $region24: #{_lambda_.2} parent=0 // pred_region
    _
  $region25: #{_lambda_.2} parent=0 // pred_fallthru
    _
  // Predicated region
  $region26: #{_lambda_.2} parent=0 // pred_check
    _
  $region27: #{_lambda_.2} parent=0 // pred_check_branch
    %27 = sbr.rel (0) target = $region29
  $region28: #{_lambda_.2} parent=0 // pred_region
    _
  $region29: #{_lambda_.2} parent=0 // pred_fallthru
    _
  // Predicated region
  $region30: #{_lambda_.2} parent=0 // pred_check
    _
  $region31: #{_lambda_.2} parent=0 // pred_check_branch
    %29 = sbr.rel (0) target = $region33
  $region32: #{_lambda_.2} parent=0 // pred_region
    _
  $region33: #{_lambda_.2} parent=0 // pred_fallthru
    _
  // Predicated region
  $region34: #{_lambda_.2} parent=0 // pred_check
    _
  $region35: #{_lambda_.2} parent=0 // pred_check_branch
    %31 = sbr.rel (0) target = $region37
  $region36: #{_lambda_.2} parent=0 // pred_region
    _
  $region37: #{_lambda_.2} parent=0 // pred_fallthru
    _
  %v33 = vld [vmem:[%s0] sm:$0xf]
  %v34 = vld [vmem:[%s0 + $0x4] sm:$0xf]
  %v35 = vld [vmem:[%s3] sm:$0xf]
  %v36 = vld [vmem:[%s3 + $0x4] sm:$0xf]
  %v37 = vld [vmem:[%s3 + $0x8] sm:$0xf]
  %v38 = vld [vmem:[%s3 + $0xc] sm:$0xf]
  %v39 = vld [vmem:[%s1] sm:$0xf]
  %v40 = vld [vmem:[%s1 + $0x4] sm:$0xf]
  %v41 = vld [vmem:[%s3 + $0x10] sm:$0xf]
  %v42 = vld [vmem:[%s3 + $0x14] sm:$0xf]
  %v43 = vld [vmem:[%s3 + $0x18] sm:$0xf]
  %v44 = vld [vmem:[%s3 + $0x1c] sm:$0xf]
  %v47 = vunpack.c.l.b16 %v39
  %v48 = vunpack.c.l.b16 %v40
  %v49 = vpack.c.b16 %v48, %v47
  %v54 = vunpack.c.l.b16 %v41
  %v55 = vunpack.c.l.b16 %v42
  %v56 = vunpack.c.l.b16 %v43
  %v57 = vunpack.c.l.b16 %v44
  %v58 = vpack.c.b16 %v55, %v54
  %v59 = vpack.c.b16 %v57, %v56
  %vm62 = vcmask 261120
  %v64 = vsel %vm62, %v49, 0
  %66 = vmatpush.bf16.msra.mxu0 0
  %67 = vmatpush.bf16.msra.mxu0 0
  %68 = vmatpush.bf16.msra.mxu0 0
  %69 = vmatpush.bf16.msra.mxu0 0
  %70 = vmatpush.bf16.msra.mxu0 0
  %71 = vmatpush.bf16.msra.mxu0 0
  %72 = vmatpush.bf16.msra.mxu0 %v59
  %73 = vmatpush.bf16.msra.mxu0 %v58
  %74 = vmatmul.bf16.gmra.mxu0 %v64
  %v75 = vpop.f32.mrf.mxu0
  %v76 = vadd.f32 0.0, %v75
  %v77 = vpop.f32.mrf.mxu0
  %v78 = vadd.f32 0.0, %v77
  %79 = vdwg.mxu0
  %v82 = vunpack.c.l.b16 %v33
  %v83 = vunpack.c.l.b16 %v34
  %v84 = vpack.c.b16 %v83, %v82
  %v89 = vunpack.c.l.b16 %v35
  %v90 = vunpack.c.l.b16 %v36
  %v91 = vunpack.c.l.b16 %v37
  %v92 = vunpack.c.l.b16 %v38
  %v93 = vpack.c.b16 %v90, %v89
  %v94 = vpack.c.b16 %v92, %v91
  %v98 = vsel %vm62, %v84, 0
  %100 = vmatpush.bf16.msra.mxu0 0
  %101 = vmatpush.bf16.msra.mxu0 0
  %102 = vmatpush.bf16.msra.mxu0 0
  %103 = vmatpush.bf16.msra.mxu0 0
  %104 = vmatpush.bf16.msra.mxu0 0
  %105 = vmatpush.bf16.msra.mxu0 0
  %106 = vmatpush.bf16.msra.mxu0 %v94
  %107 = vmatpush.bf16.msra.mxu0 %v93
  %108 = vmatmul.bf16.gmra.mxu0 %v98
  %v109 = vpop.f32.mrf.mxu0
  %v110 = vadd.f32 %v76, %v109
  %v111 = vpop.f32.mrf.mxu0
  %v112 = vadd.f32 %v78, %v111
  %113 = vdwg.mxu0
  %v114 = vld [vmem:[%s2] sm:$0xf]
  %v115 = vld [vmem:[%s2 + $0x4] sm:$0xf]
  %v116 = vld [vmem:[%s3 + $0x20] sm:$0xf]
  %v117 = vld [vmem:[%s3 + $0x24] sm:$0xf]
  %v118 = vld [vmem:[%s3 + $0x28] sm:$0xf]
  %v119 = vld [vmem:[%s3 + $0x2c] sm:$0xf]
  %v122 = vunpack.c.l.b16 %v114
  %v123 = vunpack.c.l.b16 %v115
  %v124 = vpack.c.b16 %v123, %v122
  %v129 = vunpack.c.l.b16 %v116
  %v130 = vunpack.c.l.b16 %v117
  %v131 = vunpack.c.l.b16 %v118
  %v132 = vunpack.c.l.b16 %v119
  %v133 = vpack.c.b16 %v130, %v129
  %v134 = vpack.c.b16 %v132, %v131
  %v138 = vsel %vm62, %v124, 0
  %140 = vmatpush.bf16.msra.mxu0 0
  %141 = vmatpush.bf16.msra.mxu0 0
  %142 = vmatpush.bf16.msra.mxu0 0
  %143 = vmatpush.bf16.msra.mxu0 0
  %144 = vmatpush.bf16.msra.mxu0 0
  %145 = vmatpush.bf16.msra.mxu0 0
  %146 = vmatpush.bf16.msra.mxu0 %v134
  %147 = vmatpush.bf16.msra.mxu0 %v133
  %148 = vmatmul.bf16.gmra.mxu0 %v138
  %v149 = vpop.f32.mrf.mxu0
  %v150 = vadd.f32 0.0, %v149
  %v151 = vpop.f32.mrf.mxu0
  %v152 = vadd.f32 0.0, %v151
  %153 = vdwg.mxu0
  %v154 = vadd.f32 %v110, %v150
  %v155 = vadd.f32 %v112, %v152
  %v156 = vld [vmem:[%s4] sm:$0x1]
  %v158 = vperm.slane %v156, 0
  %v160 = vadd.f32 %v154, %v158
  %v161 = vadd.f32 %v155, %v158
  %v162 = vsel %vm62, %v160, 0.0
  %163 = vadd.xlane.f32.xlu0 %v162
  %v164 = vpop.xlane.xlu0 %163
  %v165 = vsel %vm62, %v161, 0.0
  %166 = vadd.xlane.f32.xlu0 %v165
  %v167 = vpop.xlane.xlu0 %166
  %v168 = vrcp.pop 32.0
  %v169 = vmul.f32 32.0, %v168
  %v170 = vsub.f32 1.0, %v169
  %v171 = vmul.f32 %v168, %v170
  %v172 = vadd.f32 %v168, %v171
  %vm173 = vweird.f32 %v168
  %v174 = vsel %vm173, %v168, %v172
  %v175 = vmul.f32 %v164, %v174
  %v176 = vmul.f32 %v167, %v174
  %v177 = vsub.f32 %v160, %v175
  %v178 = vsub.f32 %v161, %v176
  %v179 = vmul.f32 %v177, %v177
  %v180 = vmul.f32 %v178, %v178
  %v181 = vsel %vm62, %v179, 0.0
  %182 = vadd.xlane.f32.xlu0 %v181
  %v183 = vpop.xlane.xlu0 %182
  %v184 = vsel %vm62, %v180, 0.0
  %185 = vadd.xlane.f32.xlu0 %v184
  %v186 = vpop.xlane.xlu0 %185
  %v187 = vmul.f32 %v183, %v174
  %v188 = vmul.f32 %v186, %v174
  %v189 = vadd.f32 %v187, 1e-12
  %v190 = vadd.f32 %v188, 1e-12
  %v191 = vrsqrt.pop %v189
  %v192 = vmul.f32 %v191, %v189
  %v193 = vmul.f32 %v192, %v191
  %v194 = vmul.f32 0.5, %v193
  %v195 = vsub.f32 1.5, %v194
  %v196 = vmul.f32 %v191, %v195
  %vm197 = vweird.f32 %v189
  %vm198 = vweird.f32 %v191
  %vm199 = vmor %vm197, %vm198
  %v200 = vsel %vm199, %v191, %v196
  %v201 = vrsqrt.pop %v190
  %v202 = vmul.f32 %v201, %v190
  %v203 = vmul.f32 %v202, %v201
  %v204 = vmul.f32 0.5, %v203
  %v205 = vsub.f32 1.5, %v204
  %v206 = vmul.f32 %v201, %v205
  %vm207 = vweird.f32 %v190
  %vm208 = vweird.f32 %v201
  %vm209 = vmor %vm207, %vm208
  %v210 = vsel %vm209, %v201, %v206
  %v211 = vmul.f32 %v177, %v200
  %v212 = vmul.f32 %v178, %v210
  %v213 = vld [vmem:[%s5] sm:$0x1]
  %v215 = vperm.slane %v213, 0
  %v217 = vmul.f32 %v211, %v215
  %v218 = vmul.f32 %v212, %v215
  %v219 = vld [vmem:[%s6] sm:$0x1]
  %v221 = vperm.slane %v219, 0
  %v223 = vadd.f32 %v217, %v221
  %v224 = vadd.f32 %v218, %v221
  %v225 = vpack.c.bf16 %v224, %v223
  %v226 = vld [vmem:[%s7] sm:$0xff]
  %v227 = vld [vmem:[%s7 + $0x8] sm:$0xff]
  %v228 = vld [vmem:[%s7 + $0x10] sm:$0xff]
  %v229 = vld [vmem:[%s7 + $0x18] sm:$0xff]
  %v230 = vld [vmem:[%s7 + $0x20] sm:$0xff]
  %v231 = vld [vmem:[%s7 + $0x28] sm:$0xff]
  %v232 = vld [vmem:[%s7 + $0x30] sm:$0xff]
  %v233 = vld [vmem:[%s7 + $0x38] sm:$0xff]
  %v234 = vld [vmem:[%s8] sm:$0xf]
  %v236 = vperm.slane %v234, 0
  %v237 = vperm.slane %v234, 1
  %v238 = vperm.slane %v234, 2
  %v239 = vperm.slane %v234, 3
  %v252 = vunpack.c.l.b16 %v226
  %v253 = vunpack.c.h.b16 %v226
  %v254 = vunpack.c.l.b16 %v227
  %v255 = vunpack.c.h.b16 %v227
  %v256 = vunpack.c.l.b16 %v228
  %v257 = vunpack.c.h.b16 %v228
  %v258 = vunpack.c.l.b16 %v229
  %v259 = vunpack.c.h.b16 %v229
  %v260 = vunpack.c.l.b16 %v230
  %v261 = vunpack.c.h.b16 %v230
  %v262 = vunpack.c.l.b16 %v231
  %v263 = vunpack.c.h.b16 %v231
  %v264 = vunpack.c.l.b16 %v232
  %v265 = vunpack.c.h.b16 %v232
  %v266 = vunpack.c.l.b16 %v233
  %v267 = vunpack.c.h.b16 %v233
  %v268 = vpack.c.b16 %v256, %v252
  %v269 = vpack.c.b16 %v257, %v253
  %v270 = vpack.c.b16 %v258, %v254
  %v271 = vpack.c.b16 %v259, %v255
  %v272 = vpack.c.b16 %v264, %v260
  %v273 = vpack.c.b16 %v265, %v261
  %v274 = vpack.c.b16 %v266, %v262
  %v275 = vpack.c.b16 %v267, %v263
  %v285 = vsel %vm62, %v225, 0
  %287 = vmatpush.bf16.msra.mxu0 0
  %288 = vmatpush.bf16.msra.mxu0 0
  %289 = vmatpush.bf16.msra.mxu0 0
  %290 = vmatpush.bf16.msra.mxu0 0
  %291 = vmatpush.bf16.msra.mxu0 0
  %292 = vmatpush.bf16.msra.mxu0 0
  %293 = vmatpush.bf16.msra.mxu0 %v272
  %294 = vmatpush.bf16.msra.mxu0 %v268
  %295 = vmatmul.bf16.gmra.mxu0 %v285
  %v296 = vpop.f32.mrf.mxu0
  %v297 = vadd.f32 %v236, %v296
  %v298 = vpop.f32.mrf.mxu0
  %v299 = vadd.f32 %v236, %v298
  %300 = vdwg.mxu0
  %301 = vmatpush.bf16.msra.mxu0 0
  %302 = vmatpush.bf16.msra.mxu0 0
  %303 = vmatpush.bf16.msra.mxu0 0
  %304 = vmatpush.bf16.msra.mxu0 0
  %305 = vmatpush.bf16.msra.mxu0 0
  %306 = vmatpush.bf16.msra.mxu0 0
  %307 = vmatpush.bf16.msra.mxu0 %v273
  %308 = vmatpush.bf16.msra.mxu0 %v269
  %309 = vmatmul.bf16.gmra.mxu0 %v285
  %v310 = vpop.f32.mrf.mxu0
  %v311 = vadd.f32 %v237, %v310
  %v312 = vpop.f32.mrf.mxu0
  %v313 = vadd.f32 %v237, %v312
  %314 = vdwg.mxu0
  %315 = vmatpush.bf16.msra.mxu0 0
  %316 = vmatpush.bf16.msra.mxu0 0
  %317 = vmatpush.bf16.msra.mxu0 0
  %318 = vmatpush.bf16.msra.mxu0 0
  %319 = vmatpush.bf16.msra.mxu0 0
  %320 = vmatpush.bf16.msra.mxu0 0
  %321 = vmatpush.bf16.msra.mxu0 %v274
  %322 = vmatpush.bf16.msra.mxu0 %v270
  %323 = vmatmul.bf16.gmra.mxu0 %v285
  %v324 = vpop.f32.mrf.mxu0
  %v325 = vadd.f32 %v238, %v324
  %v326 = vpop.f32.mrf.mxu0
  %v327 = vadd.f32 %v238, %v326
  %328 = vdwg.mxu0
  %329 = vmatpush.bf16.msra.mxu0 0
  %330 = vmatpush.bf16.msra.mxu0 0
  %331 = vmatpush.bf16.msra.mxu0 0
  %332 = vmatpush.bf16.msra.mxu0 0
  %333 = vmatpush.bf16.msra.mxu0 0
  %334 = vmatpush.bf16.msra.mxu0 0
  %335 = vmatpush.bf16.msra.mxu0 %v275
  %336 = vmatpush.bf16.msra.mxu0 %v271
  %337 = vmatmul.bf16.gmra.mxu0 %v285
  %v338 = vpop.f32.mrf.mxu0
  %v339 = vadd.f32 %v239, %v338
  %v340 = vpop.f32.mrf.mxu0
  %v341 = vadd.f32 %v239, %v340
  %342 = vdwg.mxu0
  %v343 = vpack.c.bf16 %v311, %v297
  %v344 = vpack.c.bf16 %v339, %v325
  %v345 = vpack.c.bf16 %v313, %v299
  %v346 = vpack.c.bf16 %v341, %v327
  %347 = vst [vmem:[%s9] sm:$0xff] %v343
  %348 = vst [vmem:[%s9 + $0x8] sm:$0xff] %v344
  %349 = vst [vmem:[%s9 + $0x10] sm:$0xff] %v345
  %350 = vst [vmem:[%s9 + $0x18] sm:$0xff] %v346
  // Predicated region
  $region38: #{_lambda_.2} parent=0 // pred_check
    _
  $region39: #{_lambda_.2} parent=0 // pred_check_branch
    %352 = sbr.rel (0) target = $region41
  $region40: #{_lambda_.2} parent=0 // pred_region
    _
  $region41: #{_lambda_.2} parent=0 // pred_fallthru
    _
  // Predicated region
  $region42: #{_lambda_.2} parent=0 // pred_check
    _
  $region43: #{_lambda_.2} parent=0 // pred_check_branch
    %354 = sbr.rel (0) target = $region45
  $region44: #{_lambda_.2} parent=0 // pred_region
    _
  $region45: #{_lambda_.2} parent=0 // pred_fallthru
    _

// kernel: _lambda_.3
$region0: #{_lambda_.3}
  #allocation0 [shape = 'u32[]', space=smem, size = 0x4, offset = 0x4, fixed_abs, tag = 'smem constant byte address 0x4 - core index']
  #allocation1 [shape = 'u32[72,128]{1,0:T(1,128)}', space=vmem, size = 0x9000, scoped, tag = 'internal scratch']
  #allocation2 [shape = 'f32[4,256]{1,0:T(4,128)}', space=vmem, size = 0x1000, scoped, tag = 'scratch operand']
  #allocation3 [shape = 'f32[4,4,1]{2,1,0:T(4,128)}', space=vmem, size = 0x2000, scoped, tag = 'scratch operand']
  %s0 = inlined_call_operand.vmem [shape: bf16[8,4,512], index: 0, kind: input, shape index: {}]
  %s1 = inlined_call_operand.vmem [shape: f32[8,4,1], index: 1, kind: input, shape index: {}]
  %s2 = inlined_call_operand.hbm [shape: bf16[256,640], index: 2, kind: input, shape index: {}]
  %s3 = inlined_call_operand.vmem [shape: f32[1,128], index: 3, kind: input, shape index: {}]
  %s4 = inlined_call_operand.vmem [shape: f32[256,4], index: 4, kind: input, shape index: {}]
  %s5 = inlined_call_operand.vmem [shape: f32[1,4], index: 5, kind: input, shape index: {}]
  %s6 = inlined_call_operand.vmem [shape: f32[8,4,128], index: 6, kind: output, shape index: {0}]
  %s7 = inlined_call_operand.hbm [shape: f32[1,4], index: 7, kind: output, shape index: {1}]
  %8 = xla_tuple %s6, %s7
  %s9 = sld [smem:[#allocation0]]
  $region77: #{_lambda_.3} parent=0
    _
  %s11 = ssub.s32 1, %s9
  %s12 = scalar_select 0, %s11, %s9
  $region1: #{_lambda_.3} parent=0
    #allocation4 [shape = 'u8[327680]{0}', space=vmem, size = 0x50000, scoped, tag = 'input window, operand 2, single buffered']
    #allocation5 [shape = 's32[2]{0}', space=sflag, size = 0x8, scoped, tag = 'scoped memory for _lambda_.3']
    #allocation6 [shape = 's32[2]{0}', space=sflag, size = 0x8, scoped, tag = 'scoped memory for _lambda_.3']
    #allocation7 [shape = 'u8[512]{0}', space=vmem, size = 0x400, scoped, tag = 'output window, operand 1, single buffered']
    %13 = vsyncpa [#allocation5], 0
    %14 = vsyncpa [#allocation6], 0
    loop: start=0, step=1, limit=4
    $region2: #{_lambda_.3} parent=1 // loop_pre_header
      _
    $region3: #{_lambda_.3} parent=1 // loop_header
      %s16 = sphi 0, %s20
      %p17 = scmp.ge.s32.totalorder %s16, 4
      %s26 = sphi 0, %s28
      %s29 = sphi 0, %s26
      %s30 = sphi 0, %s29
      %s46 = sphi 0, %s30
      %s52 = sphi 0, %s54
      %s55 = sphi 0, %s52
      %s56 = sphi 0, %s55
      %s72 = sphi 0, %s56
      %s76 = sphi 0, %s76
      %s78 = sphi 0, %s76
      %s79 = sphi 0, %s78
      %s93 = sphi 0, %s79
      %s97 = sphi 0, %s97
      %s99 = sphi 0, %s97
      %s100 = sphi 0, %s99
      %s114 = sphi 0, %s100
      %s118 = sphi 0, %s118
      %s120 = sphi 0, %s118
      %s121 = sphi 0, %s120
      %s135 = sphi 0, %s121
      %s139 = sphi 0, %s139
      %s141 = sphi 0, %s139
      %s142 = sphi 0, %s141
      %s156 = sphi 0, %s142
      %s162 = sphi 0, %s164
      %s165 = sphi 0, %s162
      %s166 = sphi 0, %s165
      %s182 = sphi 0, %s166
      %s186 = sphi 0, %s186
      %s188 = sphi 0, %s186
      %s189 = sphi 0, %s188
      %s203 = sphi 0, %s189
    $region4: #{_lambda_.3} parent=1 // loop_header_branch
      %19 = sbr.rel (%p17) target = $region8
    $region5: #{_lambda_.3} parent=1 // loop_body
      %s21 = ssub.s32 %s16, 1
      %s22 = ssub.s32 %s16, 2
      %s23 = sadd.s32 %s16, 1
      %s24 = ssub.s32 %s16, %s23
      %p25 = scmp.eq.s32.totalorder %s24, 0
      %s27 = sadd.s32 %s26, 1
      %s28 = scalar_select %p25, %s26, %s27
      %p31 = pneg %p25
      %p32 = scmp.eq.s32.totalorder %s16, 1
      %p33 = por %p31, %p32
      %p34 = scmp.ne.s32.totalorder %s26, %s29
      %p35 = scmp.eq.s32.totalorder %s16, 0
      %p36 = por %p34, %p35
      %p37 = scmp.ne.s32.totalorder %s26, %s29
      %p38 = scmp.eq.s32.totalorder %s21, 1
      %p39 = por %p37, %p38
      %p40 = scmp.ne.s32.totalorder %s29, %s30
      %p41 = scmp.eq.s32.totalorder %s21, 0
      %p42 = por %p40, %p41
      %p43 = scmp.ne.s32.totalorder %s29, %s30
      %p44 = scmp.eq.s32.totalorder %s22, 1
      %p45 = por %p43, %p44
      %p47 = scmp.ne.s32.totalorder %s30, %s46
      %p48 = scmp.eq.s32.totalorder %s22, 0
      %p49 = por %p47, %p48
      %s50 = ssub.s32 %s16, %s23
      %p51 = scmp.eq.s32.totalorder %s50, 0
      %s53 = sadd.s32 %s52, 1
      %s54 = scalar_select %p51, %s52, %s53
      %p57 = pneg %p51
      %p58 = scmp.eq.s32.totalorder %s16, 1
      %p59 = por %p57, %p58
      %p60 = scmp.ne.s32.totalorder %s52, %s55
      %p61 = scmp.eq.s32.totalorder %s16, 0
      %p62 = por %p60, %p61
      %p63 = scmp.ne.s32.totalorder %s52, %s55
      %p64 = scmp.eq.s32.totalorder %s21, 1
      %p65 = por %p63, %p64
      %p66 = scmp.ne.s32.totalorder %s55, %s56
      %p67 = scmp.eq.s32.totalorder %s21, 0
      %p68 = por %p66, %p67
      %p69 = scmp.ne.s32.totalorder %s55, %s56
      %p70 = scmp.eq.s32.totalorder %s22, 1
      %p71 = por %p69, %p70
      %p73 = scmp.ne.s32.totalorder %s56, %s72
      %p74 = scmp.eq.s32.totalorder %s22, 0
      %p75 = por %p73, %p74
      %s77 = sadd.s32 %s76, 1
      %p80 = scmp.eq.s32.totalorder %s16, 1
      %p81 = scmp.ne.s32.totalorder %s76, %s78
      %p82 = scmp.eq.s32.totalorder %s16, 0
      %p83 = por %p81, %p82
      %p84 = scmp.ne.s32.totalorder %s76, %s78
      %p85 = scmp.eq.s32.totalorder %s21, 1
      %p86 = por %p84, %p85
      %p87 = scmp.ne.s32.totalorder %s78, %s79
      %p88 = scmp.eq.s32.totalorder %s21, 0
      %p89 = por %p87, %p88
      %p90 = scmp.ne.s32.totalorder %s78, %s79
      %p91 = scmp.eq.s32.totalorder %s22, 1
      %p92 = por %p90, %p91
      %p94 = scmp.ne.s32.totalorder %s79, %s93
      %p95 = scmp.eq.s32.totalorder %s22, 0
      %p96 = por %p94, %p95
      %s98 = sadd.s32 %s97, 1
      %p101 = scmp.eq.s32.totalorder %s16, 1
      %p102 = scmp.ne.s32.totalorder %s97, %s99
      %p103 = scmp.eq.s32.totalorder %s16, 0
      %p104 = por %p102, %p103
      %p105 = scmp.ne.s32.totalorder %s97, %s99
      %p106 = scmp.eq.s32.totalorder %s21, 1
      %p107 = por %p105, %p106
      %p108 = scmp.ne.s32.totalorder %s99, %s100
      %p109 = scmp.eq.s32.totalorder %s21, 0
      %p110 = por %p108, %p109
      %p111 = scmp.ne.s32.totalorder %s99, %s100
      %p112 = scmp.eq.s32.totalorder %s22, 1
      %p113 = por %p111, %p112
      %p115 = scmp.ne.s32.totalorder %s100, %s114
      %p116 = scmp.eq.s32.totalorder %s22, 0
      %p117 = por %p115, %p116
      %s119 = sadd.s32 %s118, 1
      %p122 = scmp.eq.s32.totalorder %s16, 1
      %p123 = scmp.ne.s32.totalorder %s118, %s120
      %p124 = scmp.eq.s32.totalorder %s16, 0
      %p125 = por %p123, %p124
      %p126 = scmp.ne.s32.totalorder %s118, %s120
      %p127 = scmp.eq.s32.totalorder %s21, 1
      %p128 = por %p126, %p127
      %p129 = scmp.ne.s32.totalorder %s120, %s121
      %p130 = scmp.eq.s32.totalorder %s21, 0
      %p131 = por %p129, %p130
      %p132 = scmp.ne.s32.totalorder %s120, %s121
      %p133 = scmp.eq.s32.totalorder %s22, 1
      %p134 = por %p132, %p133
      %p136 = scmp.ne.s32.totalorder %s121, %s135
      %p137 = scmp.eq.s32.totalorder %s22, 0
      %p138 = por %p136, %p137
      %s140 = sadd.s32 %s139, 1
      %p143 = scmp.eq.s32.totalorder %s16, 1
      %p144 = scmp.ne.s32.totalorder %s139, %s141
      %p145 = scmp.eq.s32.totalorder %s16, 0
      %p146 = por %p144, %p145
      %p147 = scmp.ne.s32.totalorder %s139, %s141
      %p148 = scmp.eq.s32.totalorder %s21, 1
      %p149 = por %p147, %p148
      %p150 = scmp.ne.s32.totalorder %s141, %s142
      %p151 = scmp.eq.s32.totalorder %s21, 0
      %p152 = por %p150, %p151
      %p153 = scmp.ne.s32.totalorder %s141, %s142
      %p154 = scmp.eq.s32.totalorder %s22, 1
      %p155 = por %p153, %p154
      %p157 = scmp.ne.s32.totalorder %s142, %s156
      %p158 = scmp.eq.s32.totalorder %s22, 0
      %p159 = por %p157, %p158
      %s160 = ssub.s32 %s16, %s23
      %p161 = scmp.eq.s32.totalorder %s160, 0
      %s163 = sadd.s32 %s162, 1
      %s164 = scalar_select %p161, %s162, %s163
      %p167 = pneg %p161
      %p168 = scmp.eq.s32.totalorder %s16, 1
      %p169 = por %p167, %p168
      %p170 = scmp.ne.s32.totalorder %s162, %s165
      %p171 = scmp.eq.s32.totalorder %s16, 0
      %p172 = por %p170, %p171
      %p173 = scmp.ne.s32.totalorder %s162, %s165
      %p174 = scmp.eq.s32.totalorder %s21, 1
      %p175 = por %p173, %p174
      %p176 = scmp.ne.s32.totalorder %s165, %s166
      %p177 = scmp.eq.s32.totalorder %s21, 0
      %p178 = por %p176, %p177
      %p179 = scmp.ne.s32.totalorder %s165, %s166
      %p180 = scmp.eq.s32.totalorder %s22, 1
      %p181 = por %p179, %p180
      %p183 = scmp.ne.s32.totalorder %s166, %s182
      %p184 = scmp.eq.s32.totalorder %s22, 0
      %p185 = por %p183, %p184
      %s187 = sadd.s32 %s186, 1
      %p190 = scmp.eq.s32.totalorder %s16, 1
      %p191 = scmp.ne.s32.totalorder %s186, %s188
      %p192 = scmp.eq.s32.totalorder %s16, 0
      %p193 = por %p191, %p192
      %p194 = scmp.ne.s32.totalorder %s186, %s188
      %p195 = scmp.eq.s32.totalorder %s21, 1
      %p196 = por %p194, %p195
      %p197 = scmp.ne.s32.totalorder %s188, %s189
      %p198 = scmp.eq.s32.totalorder %s21, 0
      %p199 = por %p197, %p198
      %p200 = scmp.ne.s32.totalorder %s188, %s189
      %p201 = scmp.eq.s32.totalorder %s22, 1
      %p202 = por %p200, %p201
      %p204 = scmp.ne.s32.totalorder %s189, %s203
      %p205 = scmp.eq.s32.totalorder %s22, 0
      %p206 = por %p204, %p205
      %p207 = scmp.le.s32.totalorder 1, %s16
      %p208 = scmp.lt.s32.totalorder %s16, 3
      %p209 = pnand %p207, %p208
      %p210 = pneg %p209
      // Predicated region
      $region9: #{_lambda_.3} parent=5 // pred_check
        _
      $region10: #{_lambda_.3} parent=5 // pred_check_branch
        %212 = sbr.rel (%p209) target = $region12
      $region11: #{_lambda_.3} parent=5 // pred_region
        %s213 = ssub.s32 %s16, 1
        // Predicated region
        $region13: #{_lambda_.3} parent=11 // pred_check
          %p214 = pneg %p89
        $region14: #{_lambda_.3} parent=11 // pred_check_branch
          %216 = sbr.rel (%p214) target = $region16
        $region15: #{_lambda_.3} parent=11 // pred_region
          %218 = vsyncadd [#allocation5], 0
          %s219 = sshll.u32 %s2, 4
          %s220 = int_to_ptr.hbm [resolvable:$true] %s219
          %s221 = sshll.u32 [#allocation4], 4
          %s222 = int_to_ptr.vmem [resolvable:$true] %s221
          %227 = dma.hbm_to_vmem [thread:$0]  %s220, 10240, %s222, [#allocation5], 320, 320, 20
        $region16: #{_lambda_.3} parent=11 // pred_fallthru
          _
        // Predicated region
        $region17: #{_lambda_.3} parent=11 // pred_check
          %p228 = pneg %p110
        $region18: #{_lambda_.3} parent=11 // pred_check_branch
          %230 = sbr.rel (%p228) target = $region20
        $region19: #{_lambda_.3} parent=11 // pred_region
          _
        $region20: #{_lambda_.3} parent=11 // pred_fallthru
          _
        // Predicated region
        $region21: #{_lambda_.3} parent=11 // pred_check
          %p231 = pneg %p131
        $region22: #{_lambda_.3} parent=11 // pred_check_branch
          %233 = sbr.rel (%p231) target = $region24
        $region23: #{_lambda_.3} parent=11 // pred_region
          _
        $region24: #{_lambda_.3} parent=11 // pred_fallthru
          _
        // Predicated region
        $region25: #{_lambda_.3} parent=11 // pred_check
          %p234 = pneg %p152
        $region26: #{_lambda_.3} parent=11 // pred_check_branch
          %236 = sbr.rel (%p234) target = $region28
        $region27: #{_lambda_.3} parent=11 // pred_region
          _
        $region28: #{_lambda_.3} parent=11 // pred_fallthru
          _
      $region12: #{_lambda_.3} parent=5 // pred_fallthru
        _
      %p237 = scmp.lt.s32.totalorder %s16, 2
      // Predicated region
      $region29: #{_lambda_.3} parent=5 // pred_check
        %p238 = pneg %p237
      $region30: #{_lambda_.3} parent=5 // pred_check_branch
        %240 = sbr.rel (%p238) target = $region32
      $region31: #{_lambda_.3} parent=5 // pred_region
        // Predicated region
        $region33: #{_lambda_.3} parent=31 // pred_check
          %p241 = pneg %p36
        $region34: #{_lambda_.3} parent=31 // pred_check_branch
          %243 = sbr.rel (%p241) target = $region36
        $region35: #{_lambda_.3} parent=31 // pred_region
          %s244 = smul.u32 4, %s16
          %p245 = scmp.lt.s32.totalorder %s244, 7
          %s246 = scalar_select %p245, %s244, 7
          %s247 = smul.addr %s246, 4
          %s248 = smul.addr %s247, 2
          %s249 = scalar_lea.vmem %s0, %s248
          %s250 = smul.u32 4, %s16
        $region36: #{_lambda_.3} parent=31 // pred_fallthru
          _
        // Predicated region
        $region37: #{_lambda_.3} parent=31 // pred_check
          %p251 = pneg %p62
        $region38: #{_lambda_.3} parent=31 // pred_check_branch
          %253 = sbr.rel (%p251) target = $region40
        $region39: #{_lambda_.3} parent=31 // pred_region
          %s254 = smul.u32 4, %s16
          %p255 = scmp.lt.s32.totalorder %s254, 7
          %s256 = scalar_select %p255, %s254, 7
          %s257 = smul.addr %s256, 4
          %s258 = scalar_lea.vmem %s1, %s257
          %s259 = smul.u32 4, %s16
        $region40: #{_lambda_.3} parent=31 // pred_fallthru
          _
      $region32: #{_lambda_.3} parent=5 // pred_fallthru
        _
      %p260 = scmp.le.s32.totalorder 1, %s16
      %p261 = scmp.lt.s32.totalorder %s16, 3
      %p262 = pnand %p260, %p261
      %p263 = pneg %p262
      // Predicated region
      $region41: #{_lambda_.3} parent=5 // pred_check
        _
      $region42: #{_lambda_.3} parent=5 // pred_check_branch
        %265 = sbr.rel (%p262) target = $region44
      $region43: #{_lambda_.3} parent=5 // pred_region
        %s266 = ssub.s32 %s16, 1
        // Predicated region
        $region45: #{_lambda_.3} parent=43 // pred_check
          %p267 = pneg %p89
        $region46: #{_lambda_.3} parent=43 // pred_check_branch
          %269 = sbr.rel (%p267) target = $region48
        $region47: #{_lambda_.3} parent=43 // pred_region
          %271 = dma.done [#allocation5], 10240
        $region48: #{_lambda_.3} parent=43 // pred_fallthru
          _
        %s272 = smul.u32 4, %s21
        %p273 = scmp.lt.s32.totalorder %s272, 7
        %s274 = scalar_select %p273, %s272, 7
        %s275 = smul.addr %s274, 4
        %s276 = smul.addr %s275, 2
        %s277 = scalar_lea.vmem %s0, %s276
        %p278 = pneg %p42
        %p279 = pneg %p39
        %s280 = smul.u32 4, %s21
        %p281 = scmp.lt.s32.totalorder %s280, 7
        %s282 = scalar_select %p281, %s280, 7
        %s283 = smul.addr %s282, 4
        %s284 = scalar_lea.vmem %s1, %s283
        %p285 = pneg %p68
        %p286 = pneg %p65
        %p287 = pneg %p89
        %p288 = pneg %p86
        %p289 = pneg %p110
        %p290 = pneg %p107
        %p291 = pneg %p131
        %p292 = pneg %p128
        %p293 = pneg %p152
        %p294 = pneg %p149
        %p295 = pneg %p178
        %p296 = pneg %p175
        %s297 = smul.u32 4, %s21
        %p298 = scmp.lt.s32.totalorder %s297, 7
        %s299 = scalar_select %p298, %s297, 7
        %s300 = smul.addr %s299, 4
        %s301 = scalar_lea.vmem %s6, %s300
        %p302 = pneg %p199
        %p303 = pneg %p196
        %s304 = smul.u32 4, %s21
        %p305 = scmp.lt.s32.totalorder %s304, 7
        %s306 = scalar_select %p305, %s304, 7
        %s307 = smul.addr %s306, 4
        %s308 = smul.addr %s307, 2
        %s309 = scalar_lea.vmem %s0, %s308
        %s310 = smul.u32 4, %s21
        %s311 = smul.u32 4, %s21
        %p312 = scmp.lt.s32.totalorder %s311, 7
        %s313 = scalar_select %p312, %s311, 7
        %s314 = smul.addr %s313, 4
        %s315 = scalar_lea.vmem %s1, %s314
        %s316 = smul.u32 4, %s21
        %s317 = smul.u32 4, %s21
        %p318 = scmp.lt.s32.totalorder %s317, 7
        %s319 = scalar_select %p318, %s317, 7
        %s320 = smul.addr %s319, 4
        %s321 = scalar_lea.vmem %s6, %s320
        %s322 = smul.u32 4, %s21
        %p323 = scmp.eq.s32.totalorder %s21, 0
        // Predicated region
        $region49: #{_lambda_.3} parent=43 // pred_check
          %p324 = pneg %p323
        $region50: #{_lambda_.3} parent=43 // pred_check_branch
          %326 = sbr.rel (%p324) target = $region52
        $region51: #{_lambda_.3} parent=43 // pred_region
          %327 = vst [vmem:[#allocation2] sm:$0xff] 0.0
          %vm328 = vcmask 24576
          %329 = vst.msk [vmem:[#allocation7] sm:$0x1] %vm328, 0.0
        $region52: #{_lambda_.3} parent=43 // pred_fallthru
          _
        %v330 = vld [vmem:[%s315] sm:$0xf]
        %v331 = vld [vmem:[%s315 + $0x4] sm:$0xf]
        %v332 = vld [vmem:[%s315 + $0x8] sm:$0xf]
        %v333 = vld [vmem:[%s315 + $0xc] sm:$0xf]
        %v334 = vadd.f32 %v330, 2.7182817
        %v335 = vadd.f32 %v331, 2.7182817
        %v336 = vadd.f32 %v332, 2.7182817
        %v337 = vadd.f32 %v333, 2.7182817
        %v338 = vlog2.pop %v334
        %v339 = vmul.f32 %v338, 0.6931472
        %v340 = vlog2.pop %v335
        %v341 = vmul.f32 %v340, 0.6931472
        %v342 = vlog2.pop %v336
        %v343 = vmul.f32 %v342, 0.6931472
        %v344 = vlog2.pop %v337
        %v345 = vmul.f32 %v344, 0.6931472
        %v346 = vrcp.pop %v339
        %v347 = vmul.f32 %v339, %v346
        %v348 = vsub.f32 1.0, %v347
        %v349 = vmul.f32 %v346, %v348
        %v350 = vadd.f32 %v346, %v349
        %vm351 = vweird.f32 %v339
        %vm352 = vweird.f32 %v346
        %vm353 = vmor %vm351, %vm352
        %v354 = vsel %vm353, %v346, %v350
        %v355 = vand.u32 2147483647, %v339
        %vm356 = vcmp.eq.f32.partialorder %v355, 8.507059e+37
        %v357 = vand.u32 %v339, 2147483648
        %v358 = vor.u32 1.1754944e-38, %v357
        %v359 = vsel %vm356, %v358, %v354
        %v360 = vmul.f32 1.0, %v359
        %v361 = vrcp.pop %v341
        %v362 = vmul.f32 %v341, %v361
        %v363 = vsub.f32 1.0, %v362
        %v364 = vmul.f32 %v361, %v363
        %v365 = vadd.f32 %v361, %v364
        %vm366 = vweird.f32 %v341
        %vm367 = vweird.f32 %v361
        %vm368 = vmor %vm366, %vm367
        %v369 = vsel %vm368, %v361, %v365
        %v370 = vand.u32 2147483647, %v341
        %vm371 = vcmp.eq.f32.partialorder %v370, 8.507059e+37
        %v372 = vand.u32 %v341, 2147483648
        %v373 = vor.u32 1.1754944e-38, %v372
        %v374 = vsel %vm371, %v373, %v369
        %v375 = vmul.f32 1.0, %v374
        %v376 = vrcp.pop %v343
        %v377 = vmul.f32 %v343, %v376
        %v378 = vsub.f32 1.0, %v377
        %v379 = vmul.f32 %v376, %v378
        %v380 = vadd.f32 %v376, %v379
        %vm381 = vweird.f32 %v343
        %vm382 = vweird.f32 %v376
        %vm383 = vmor %vm381, %vm382
        %v384 = vsel %vm383, %v376, %v380
        %v385 = vand.u32 2147483647, %v343
        %vm386 = vcmp.eq.f32.partialorder %v385, 8.507059e+37
        %v387 = vand.u32 %v343, 2147483648
        %v388 = vor.u32 1.1754944e-38, %v387
        %v389 = vsel %vm386, %v388, %v384
        %v390 = vmul.f32 1.0, %v389
        %v391 = vrcp.pop %v345
        %v392 = vmul.f32 %v345, %v391
        %v393 = vsub.f32 1.0, %v392
        %v394 = vmul.f32 %v391, %v393
        %v395 = vadd.f32 %v391, %v394
        %vm396 = vweird.f32 %v345
        %vm397 = vweird.f32 %v391
        %vm398 = vmor %vm396, %vm397
        %v399 = vsel %vm398, %v391, %v395
        %v400 = vand.u32 2147483647, %v345
        %vm401 = vcmp.eq.f32.partialorder %v400, 8.507059e+37
        %v402 = vand.u32 %v345, 2147483648
        %v403 = vor.u32 1.1754944e-38, %v402
        %v404 = vsel %vm401, %v403, %v399
        %v405 = vmul.f32 1.0, %v404
        %vm406 = vcmask 3072
        %407 = vst.msk [vmem:[#allocation3] sm:$0xf] %vm406, %v360
        %408 = vst.msk [vmem:[#allocation3 + $0x4] sm:$0xf] %vm406, %v375
        %409 = vst.msk [vmem:[#allocation3 + $0x8] sm:$0xf] %vm406, %v390
        %410 = vst.msk [vmem:[#allocation3 + $0xc] sm:$0xf] %vm406, %v405
        %v411 = vld [vmem:[#allocation4] sm:$0xff]
        %v412 = vld [vmem:[#allocation4 + $0x8] sm:$0xff]
        %v413 = vld [vmem:[#allocation4 + $0x10] sm:$0xf]
        %v414 = vld [vmem:[#allocation4 + $0x14] sm:$0xff]
        %v415 = vld [vmem:[#allocation4 + $0x1c] sm:$0xff]
        %v416 = vld [vmem:[#allocation4 + $0x24] sm:$0xf]
        %v417 = vld [vmem:[#allocation4 + $0x28] sm:$0xff]
        %v418 = vld [vmem:[#allocation4 + $0x30] sm:$0xff]
        %v419 = vld [vmem:[#allocation4 + $0x38] sm:$0xf]
        %v420 = vld [vmem:[#allocation4 + $0x3c] sm:$0xff]
        %v421 = vld [vmem:[#allocation4 + $0x44] sm:$0xff]
        %v422 = vld [vmem:[#allocation4 + $0x4c] sm:$0xf]
        %v423 = vld [vmem:[#allocation4 + $0x50] sm:$0xff]
        %v424 = vld [vmem:[#allocation4 + $0x58] sm:$0xff]
        %v425 = vld [vmem:[#allocation4 + $0x60] sm:$0xf]
        %v426 = vld [vmem:[#allocation4 + $0x64] sm:$0xff]
        %v427 = vld [vmem:[#allocation4 + $0x6c] sm:$0xff]
        %v428 = vld [vmem:[#allocation4 + $0x74] sm:$0xf]
        %v429 = vld [vmem:[#allocation4 + $0x78] sm:$0xff]
        %v430 = vld [vmem:[#allocation4 + $0x80] sm:$0xff]
        %v431 = vld [vmem:[#allocation4 + $0x88] sm:$0xf]
        %v432 = vld [vmem:[#allocation4 + $0x8c] sm:$0xff]
        %v433 = vld [vmem:[#allocation4 + $0x94] sm:$0xff]
        %v434 = vld [vmem:[#allocation4 + $0x9c] sm:$0xf]
        %v435 = vld [vmem:[#allocation4 + $0xa0] sm:$0xff]
        %v436 = vld [vmem:[#allocation4 + $0xa8] sm:$0xff]
        %v437 = vld [vmem:[#allocation4 + $0xb0] sm:$0xf]
        %v438 = vld [vmem:[#allocation4 + $0xb4] sm:$0xff]
        %v439 = vld [vmem:[#allocation4 + $0xbc] sm:$0xff]
        %v440 = vld [vmem:[#allocation4 + $0xc4] sm:$0xf]
        %v441 = vld [vmem:[#allocation4 + $0xc8] sm:$0xff]
        %v442 = vld [vmem:[#allocation4 + $0xd0] sm:$0xff]
        %v443 = vld [vmem:[#allocation4 + $0xd8] sm:$0xf]
        %v444 = vld [vmem:[#allocation4 + $0xdc] sm:$0xff]
        %v445 = vld [vmem:[#allocation4 + $0xe4] sm:$0xff]
        %v446 = vld [vmem:[#allocation4 + $0xec] sm:$0xf]
        %v447 = vld [vmem:[#allocation4 + $0xf0] sm:$0xff]
        %v448 = vld [vmem:[#allocation4 + $0xf8] sm:$0xff]
        %v449 = vld [vmem:[#allocation4 + $0x100] sm:$0xf]
        %v450 = vld [vmem:[#allocation4 + $0x104] sm:$0xff]
        %v451 = vld [vmem:[#allocation4 + $0x10c] sm:$0xff]
        %v452 = vld [vmem:[#allocation4 + $0x114] sm:$0xf]
        %v453 = vld [vmem:[#allocation4 + $0x118] sm:$0xff]
        %v454 = vld [vmem:[#allocation4 + $0x120] sm:$0xff]
        %v455 = vld [vmem:[#allocation4 + $0x128] sm:$0xf]
        %v456 = vld [vmem:[#allocation4 + $0x12c] sm:$0xff]
        %v457 = vld [vmem:[#allocation4 + $0x134] sm:$0xff]
        %v458 = vld [vmem:[#allocation4 + $0x13c] sm:$0xf]
        %v459 = vld [vmem:[#allocation4 + $0x140] sm:$0xff]
        %v460 = vld [vmem:[#allocation4 + $0x148] sm:$0xff]
        %v461 = vld [vmem:[#allocation4 + $0x150] sm:$0xf]
        %v462 = vld [vmem:[#allocation4 + $0x154] sm:$0xff]
        %v463 = vld [vmem:[#allocation4 + $0x15c] sm:$0xff]
        %v464 = vld [vmem:[#allocation4 + $0x164] sm:$0xf]
        %v465 = vld [vmem:[#allocation4 + $0x168] sm:$0xff]
        %v466 = vld [vmem:[#allocation4 + $0x170] sm:$0xff]
        %v467 = vld [vmem:[#allocation4 + $0x178] sm:$0xf]
        %v468 = vld [vmem:[#allocation4 + $0x17c] sm:$0xff]
        %v469 = vld [vmem:[#allocation4 + $0x184] sm:$0xff]
        %v470 = vld [vmem:[#allocation4 + $0x18c] sm:$0xf]
        %v471 = vld [vmem:[#allocation4 + $0x190] sm:$0xff]
        %v472 = vld [vmem:[#allocation4 + $0x198] sm:$0xff]
        %v473 = vld [vmem:[#allocation4 + $0x1a0] sm:$0xf]
        %v474 = vld [vmem:[#allocation4 + $0x1a4] sm:$0xff]
        %v475 = vld [vmem:[#allocation4 + $0x1ac] sm:$0xff]
        %v476 = vld [vmem:[#allocation4 + $0x1b4] sm:$0xf]
        %v477 = vld [vmem:[#allocation4 + $0x1b8] sm:$0xff]
        %v478 = vld [vmem:[#allocation4 + $0x1c0] sm:$0xff]
        %v479 = vld [vmem:[#allocation4 + $0x1c8] sm:$0xf]
        %v480 = vld [vmem:[#allocation4 + $0x1cc] sm:$0xff]
        %v481 = vld [vmem:[#allocation4 + $0x1d4] sm:$0xff]
        %v482 = vld [vmem:[#allocation4 + $0x1dc] sm:$0xf]
        %v483 = vld [vmem:[#allocation4 + $0x1e0] sm:$0xff]
        %v484 = vld [vmem:[#allocation4 + $0x1e8] sm:$0xff]
        %v485 = vld [vmem:[#allocation4 + $0x1f0] sm:$0xf]
        %v486 = vld [vmem:[#allocation4 + $0x1f4] sm:$0xff]
        %v487 = vld [vmem:[#allocation4 + $0x1fc] sm:$0xff]
        %v488 = vld [vmem:[#allocation4 + $0x204] sm:$0xf]
        %v489 = vld [vmem:[#allocation4 + $0x208] sm:$0xff]
        %v490 = vld [vmem:[#allocation4 + $0x210] sm:$0xff]
        %v491 = vld [vmem:[#allocation4 + $0x218] sm:$0xf]
        %v492 = vld [vmem:[#allocation4 + $0x21c] sm:$0xff]
        %v493 = vld [vmem:[#allocation4 + $0x224] sm:$0xff]
        %v494 = vld [vmem:[#allocation4 + $0x22c] sm:$0xf]
        %v495 = vld [vmem:[#allocation4 + $0x230] sm:$0xff]
        %v496 = vld [vmem:[#allocation4 + $0x238] sm:$0xff]
        %v497 = vld [vmem:[#allocation4 + $0x240] sm:$0xf]
        %v498 = vld [vmem:[#allocation4 + $0x244] sm:$0xff]
        %v499 = vld [vmem:[#allocation4 + $0x24c] sm:$0xff]
        %v500 = vld [vmem:[#allocation4 + $0x254] sm:$0xf]
        %v501 = vld [vmem:[#allocation4 + $0x258] sm:$0xff]
        %v502 = vld [vmem:[#allocation4 + $0x260] sm:$0xff]
        %v503 = vld [vmem:[#allocation4 + $0x268] sm:$0xf]
        %v504 = vld [vmem:[#allocation4 + $0x26c] sm:$0xff]
        %v505 = vld [vmem:[#allocation4 + $0x274] sm:$0xff]
        %v506 = vld [vmem:[#allocation4 + $0x27c] sm:$0xf]
        %v507 = vld [vmem:[%s3] sm:$0x1]
        %v508 = vld [vmem:[#allocation2] sm:$0xff]
        %v509 = vld [vmem:[#allocation3] sm:$0xf]
        %511 = vst [vmem:[#allocation1] ss:$2 sm:$0xff] %v508
        %v512 = vld.sshfl [vmem:[#allocation1] sm:$0xff pattern:$0x75316420]
        %v513 = vld.sshfl [vmem:[#allocation1 + $0x8] sm:$0xff pattern:$0x75316420]
        %v516 = vpack.c.bf16 %v512, %v512
        %v517 = vpack.c.bf16 %v513, %v513
        %v614 = vunpack.c.l.b16 %v411
        %v615 = vunpack.c.h.b16 %v411
        %v616 = vunpack.c.l.b16 %v412
        %v617 = vunpack.c.h.b16 %v412
        %v618 = vunpack.c.l.b16 %v413
        %v619 = vunpack.c.l.b16 %v414
        %v620 = vunpack.c.h.b16 %v414
        %v621 = vunpack.c.l.b16 %v415
        %v622 = vunpack.c.h.b16 %v415
        %v623 = vunpack.c.l.b16 %v416
        %v624 = vunpack.c.l.b16 %v417
        %v625 = vunpack.c.h.b16 %v417
        %v626 = vunpack.c.l.b16 %v418
        %v627 = vunpack.c.h.b16 %v418
        %v628 = vunpack.c.l.b16 %v419
        %v629 = vunpack.c.l.b16 %v420
        %v630 = vunpack.c.h.b16 %v420
        %v631 = vunpack.c.l.b16 %v421
        %v632 = vunpack.c.h.b16 %v421
        %v633 = vunpack.c.l.b16 %v422
        %v634 = vunpack.c.l.b16 %v423
        %v635 = vunpack.c.h.b16 %v423
        %v636 = vunpack.c.l.b16 %v424
        %v637 = vunpack.c.h.b16 %v424
        %v638 = vunpack.c.l.b16 %v425
        %v639 = vunpack.c.l.b16 %v426
        %v640 = vunpack.c.h.b16 %v426
        %v641 = vunpack.c.l.b16 %v427
        %v642 = vunpack.c.h.b16 %v427
        %v643 = vunpack.c.l.b16 %v428
        %v644 = vunpack.c.l.b16 %v429
        %v645 = vunpack.c.h.b16 %v429
        %v646 = vunpack.c.l.b16 %v430
        %v647 = vunpack.c.h.b16 %v430
        %v648 = vunpack.c.l.b16 %v431
        %v649 = vunpack.c.l.b16 %v432
        %v650 = vunpack.c.h.b16 %v432
        %v651 = vunpack.c.l.b16 %v433
        %v652 = vunpack.c.h.b16 %v433
        %v653 = vunpack.c.l.b16 %v434
        %v654 = vunpack.c.l.b16 %v435
        %v655 = vunpack.c.h.b16 %v435
        %v656 = vunpack.c.l.b16 %v436
        %v657 = vunpack.c.h.b16 %v436
        %v658 = vunpack.c.l.b16 %v437
        %v659 = vunpack.c.l.b16 %v438
        %v660 = vunpack.c.h.b16 %v438
        %v661 = vunpack.c.l.b16 %v439
        %v662 = vunpack.c.h.b16 %v439
        %v663 = vunpack.c.l.b16 %v440
        %v664 = vunpack.c.l.b16 %v441
        %v665 = vunpack.c.h.b16 %v441
        %v666 = vunpack.c.l.b16 %v442
        %v667 = vunpack.c.h.b16 %v442
        %v668 = vunpack.c.l.b16 %v443
        %v669 = vunpack.c.l.b16 %v444
        %v670 = vunpack.c.h.b16 %v444
        %v671 = vunpack.c.l.b16 %v445
        %v672 = vunpack.c.h.b16 %v445
        %v673 = vunpack.c.l.b16 %v446
        %v674 = vunpack.c.l.b16 %v447
        %v675 = vunpack.c.h.b16 %v447
        %v676 = vunpack.c.l.b16 %v448
        %v677 = vunpack.c.h.b16 %v448
        %v678 = vunpack.c.l.b16 %v449
        %v679 = vunpack.c.l.b16 %v450
        %v680 = vunpack.c.h.b16 %v450
        %v681 = vunpack.c.l.b16 %v451
        %v682 = vunpack.c.h.b16 %v451
        %v683 = vunpack.c.l.b16 %v452
        %v684 = vunpack.c.l.b16 %v453
        %v685 = vunpack.c.h.b16 %v453
        %v686 = vunpack.c.l.b16 %v454
        %v687 = vunpack.c.h.b16 %v454
        %v688 = vunpack.c.l.b16 %v455
        %v689 = vunpack.c.l.b16 %v456
        %v690 = vunpack.c.h.b16 %v456
        %v691 = vunpack.c.l.b16 %v457
        %v692 = vunpack.c.h.b16 %v457
        %v693 = vunpack.c.l.b16 %v458
        %v694 = vunpack.c.l.b16 %v459
        %v695 = vunpack.c.h.b16 %v459
        %v696 = vunpack.c.l.b16 %v460
        %v697 = vunpack.c.h.b16 %v460
        %v698 = vunpack.c.l.b16 %v461
        %v699 = vunpack.c.l.b16 %v462
        %v700 = vunpack.c.h.b16 %v462
        %v701 = vunpack.c.l.b16 %v463
        %v702 = vunpack.c.h.b16 %v463
        %v703 = vunpack.c.l.b16 %v464
        %v704 = vunpack.c.l.b16 %v465
        %v705 = vunpack.c.h.b16 %v465
        %v706 = vunpack.c.l.b16 %v466
        %v707 = vunpack.c.h.b16 %v466
        %v708 = vunpack.c.l.b16 %v467
        %v709 = vunpack.c.l.b16 %v468
        %v710 = vunpack.c.h.b16 %v468
        %v711 = vunpack.c.l.b16 %v469
        %v712 = vunpack.c.h.b16 %v469
        %v713 = vunpack.c.l.b16 %v470
        %v714 = vunpack.c.l.b16 %v471
        %v715 = vunpack.c.h.b16 %v471
        %v716 = vunpack.c.l.b16 %v472
        %v717 = vunpack.c.h.b16 %v472
        %v718 = vunpack.c.l.b16 %v473
        %v719 = vunpack.c.l.b16 %v474
        %v720 = vunpack.c.h.b16 %v474
        %v721 = vunpack.c.l.b16 %v475
        %v722 = vunpack.c.h.b16 %v475
        %v723 = vunpack.c.l.b16 %v476
        %v724 = vunpack.c.l.b16 %v477
        %v725 = vunpack.c.h.b16 %v477
        %v726 = vunpack.c.l.b16 %v478
        %v727 = vunpack.c.h.b16 %v478
        %v728 = vunpack.c.l.b16 %v479
        %v729 = vunpack.c.l.b16 %v480
        %v730 = vunpack.c.h.b16 %v480
        %v731 = vunpack.c.l.b16 %v481
        %v732 = vunpack.c.h.b16 %v481
        %v733 = vunpack.c.l.b16 %v482
        %v734 = vunpack.c.l.b16 %v483
        %v735 = vunpack.c.h.b16 %v483
        %v736 = vunpack.c.l.b16 %v484
        %v737 = vunpack.c.h.b16 %v484
        %v738 = vunpack.c.l.b16 %v485
        %v739 = vunpack.c.l.b16 %v486
        %v740 = vunpack.c.h.b16 %v486
        %v741 = vunpack.c.l.b16 %v487
        %v742 = vunpack.c.h.b16 %v487
        %v743 = vunpack.c.l.b16 %v488
        %v744 = vunpack.c.l.b16 %v489
        %v745 = vunpack.c.h.b16 %v489
        %v746 = vunpack.c.l.b16 %v490
        %v747 = vunpack.c.h.b16 %v490
        %v748 = vunpack.c.l.b16 %v491
        %v749 = vunpack.c.l.b16 %v492
        %v750 = vunpack.c.h.b16 %v492
        %v751 = vunpack.c.l.b16 %v493
        %v752 = vunpack.c.h.b16 %v493
        %v753 = vunpack.c.l.b16 %v494
        %v754 = vunpack.c.l.b16 %v495
        %v755 = vunpack.c.h.b16 %v495
        %v756 = vunpack.c.l.b16 %v496
        %v757 = vunpack.c.h.b16 %v496
        %v758 = vunpack.c.l.b16 %v497
        %v759 = vunpack.c.l.b16 %v498
        %v760 = vunpack.c.h.b16 %v498
        %v761 = vunpack.c.l.b16 %v499
        %v762 = vunpack.c.h.b16 %v499
        %v763 = vunpack.c.l.b16 %v500
        %v764 = vunpack.c.l.b16 %v501
        %v765 = vunpack.c.h.b16 %v501
        %v766 = vunpack.c.l.b16 %v502
        %v767 = vunpack.c.h.b16 %v502
        %v768 = vunpack.c.l.b16 %v503
        %v769 = vunpack.c.l.b16 %v504
        %v770 = vunpack.c.h.b16 %v504
        %v771 = vunpack.c.l.b16 %v505
        %v772 = vunpack.c.h.b16 %v505
        %v773 = vunpack.c.l.b16 %v506
        %v774 = vpack.c.b16 %v619, %v614
        %v775 = vpack.c.b16 %v620, %v615
        %v776 = vpack.c.b16 %v621, %v616
        %v777 = vpack.c.b16 %v622, %v617
        %v778 = vpack.c.b16 %v623, %v618
        %v779 = vpack.c.b16 %v629, %v624
        %v780 = vpack.c.b16 %v630, %v625
        %v781 = vpack.c.b16 %v631, %v626
        %v782 = vpack.c.b16 %v632, %v627
        %v783 = vpack.c.b16 %v633, %v628
        %v784 = vpack.c.b16 %v639, %v634
        %v785 = vpack.c.b16 %v640, %v635
        %v786 = vpack.c.b16 %v641, %v636
        %v787 = vpack.c.b16 %v642, %v637
        %v788 = vpack.c.b16 %v643, %v638
        %v789 = vpack.c.b16 %v649, %v644
        %v790 = vpack.c.b16 %v650, %v645
        %v791 = vpack.c.b16 %v651, %v646
        %v792 = vpack.c.b16 %v652, %v647
        %v793 = vpack.c.b16 %v653, %v648
        %v794 = vpack.c.b16 %v659, %v654
        %v795 = vpack.c.b16 %v660, %v655
        %v796 = vpack.c.b16 %v661, %v656
        %v797 = vpack.c.b16 %v662, %v657
        %v798 = vpack.c.b16 %v663, %v658
        %v799 = vpack.c.b16 %v669, %v664
        %v800 = vpack.c.b16 %v670, %v665
        %v801 = vpack.c.b16 %v671, %v666
        %v802 = vpack.c.b16 %v672, %v667
        %v803 = vpack.c.b16 %v673, %v668
        %v804 = vpack.c.b16 %v679, %v674
        %v805 = vpack.c.b16 %v680, %v675
        %v806 = vpack.c.b16 %v681, %v676
        %v807 = vpack.c.b16 %v682, %v677
        %v808 = vpack.c.b16 %v683, %v678
        %v809 = vpack.c.b16 %v689, %v684
        %v810 = vpack.c.b16 %v690, %v685
        %v811 = vpack.c.b16 %v691, %v686
        %v812 = vpack.c.b16 %v692, %v687
        %v813 = vpack.c.b16 %v693, %v688
        %v814 = vpack.c.b16 %v699, %v694
        %v815 = vpack.c.b16 %v700, %v695
        %v816 = vpack.c.b16 %v701, %v696
        %v817 = vpack.c.b16 %v702, %v697
        %v818 = vpack.c.b16 %v703, %v698
        %v819 = vpack.c.b16 %v709, %v704
        %v820 = vpack.c.b16 %v710, %v705
        %v821 = vpack.c.b16 %v711, %v706
        %v822 = vpack.c.b16 %v712, %v707
        %v823 = vpack.c.b16 %v713, %v708
        %v824 = vpack.c.b16 %v719, %v714
        %v825 = vpack.c.b16 %v720, %v715
        %v826 = vpack.c.b16 %v721, %v716
        %v827 = vpack.c.b16 %v722, %v717
        %v828 = vpack.c.b16 %v723, %v718
        %v829 = vpack.c.b16 %v729, %v724
        %v830 = vpack.c.b16 %v730, %v725
        %v831 = vpack.c.b16 %v731, %v726
        %v832 = vpack.c.b16 %v732, %v727
        %v833 = vpack.c.b16 %v733, %v728
        %v834 = vpack.c.b16 %v739, %v734
        %v835 = vpack.c.b16 %v740, %v735
        %v836 = vpack.c.b16 %v741, %v736
        %v837 = vpack.c.b16 %v742, %v737
        %v838 = vpack.c.b16 %v743, %v738
        %v839 = vpack.c.b16 %v749, %v744
        %v840 = vpack.c.b16 %v750, %v745
        %v841 = vpack.c.b16 %v751, %v746
        %v842 = vpack.c.b16 %v752, %v747
        %v843 = vpack.c.b16 %v753, %v748
        %v844 = vpack.c.b16 %v759, %v754
        %v845 = vpack.c.b16 %v760, %v755
        %v846 = vpack.c.b16 %v761, %v756
        %v847 = vpack.c.b16 %v762, %v757
        %v848 = vpack.c.b16 %v763, %v758
        %v849 = vpack.c.b16 %v769, %v764
        %v850 = vpack.c.b16 %v770, %v765
        %v851 = vpack.c.b16 %v771, %v766
        %v852 = vpack.c.b16 %v772, %v767
        %v853 = vpack.c.b16 %v773, %v768
        %934 = vmatpush.bf16.msra.mxu0 %v809
        %935 = vmatpush.bf16.msra.mxu0 %v804
        %936 = vmatpush.bf16.msra.mxu0 %v799
        %937 = vmatpush.bf16.msra.mxu0 %v794
        %938 = vmatpush.bf16.msra.mxu0 %v789
        %939 = vmatpush.bf16.msra.mxu0 %v784
        %940 = vmatpush.bf16.msra.mxu0 %v779
        %941 = vmatpush.bf16.msra.mxu0 %v774
        %942 = vmatmul.bf16.gmra.mxu0 %v516
        %v943 = vpop.f32.mrf.mxu0
        %v944 = vadd.f32 0.0, %v943
        %v945 = vpop.f32.mrf.mxu0
        %946 = vdwg.mxu0
        %947 = vmatpush.bf16.msra.mxu0 %v849
        %948 = vmatpush.bf16.msra.mxu0 %v844
        %949 = vmatpush.bf16.msra.mxu0 %v839
        %950 = vmatpush.bf16.msra.mxu0 %v834
        %951 = vmatpush.bf16.msra.mxu0 %v829
        %952 = vmatpush.bf16.msra.mxu0 %v824
        %953 = vmatpush.bf16.msra.mxu0 %v819
        %954 = vmatpush.bf16.msra.mxu0 %v814
        %955 = vmatmul.bf16.gmra.mxu0 %v517
        %v956 = vpop.f32.mrf.mxu0
        %v957 = vadd.f32 %v944, %v956
        %v958 = vpop.f32.mrf.mxu0
        %959 = vdwg.mxu0
        %960 = vmatpush.bf16.msra.mxu0 %v810
        %961 = vmatpush.bf16.msra.mxu0 %v805
        %962 = vmatpush.bf16.msra.mxu0 %v800
        %963 = vmatpush.bf16.msra.mxu0 %v795
        %964 = vmatpush.bf16.msra.mxu0 %v790
        %965 = vmatpush.bf16.msra.mxu0 %v785
        %966 = vmatpush.bf16.msra.mxu0 %v780
        %967 = vmatpush.bf16.msra.mxu0 %v775
        %968 = vmatmul.bf16.gmra.mxu0 %v516
        %v969 = vpop.f32.mrf.mxu0
        %v970 = vadd.f32 0.0, %v969
        %v971 = vpop.f32.mrf.mxu0
        %972 = vdwg.mxu0
        %973 = vmatpush.bf16.msra.mxu0 %v850
        %974 = vmatpush.bf16.msra.mxu0 %v845
        %975 = vmatpush.bf16.msra.mxu0 %v840
        %976 = vmatpush.bf16.msra.mxu0 %v835
        %977 = vmatpush.bf16.msra.mxu0 %v830
        %978 = vmatpush.bf16.msra.mxu0 %v825
        %979 = vmatpush.bf16.msra.mxu0 %v820
        %980 = vmatpush.bf16.msra.mxu0 %v815
        %981 = vmatmul.bf16.gmra.mxu0 %v517
        %v982 = vpop.f32.mrf.mxu0
        %v983 = vadd.f32 %v970, %v982
        %v984 = vpop.f32.mrf.mxu0
        %985 = vdwg.mxu0
        %986 = vmatpush.bf16.msra.mxu0 %v811
        %987 = vmatpush.bf16.msra.mxu0 %v806
        %988 = vmatpush.bf16.msra.mxu0 %v801
        %989 = vmatpush.bf16.msra.mxu0 %v796
        %990 = vmatpush.bf16.msra.mxu0 %v791
        %991 = vmatpush.bf16.msra.mxu0 %v786
        %992 = vmatpush.bf16.msra.mxu0 %v781
        %993 = vmatpush.bf16.msra.mxu0 %v776
        %994 = vmatmul.bf16.gmra.mxu0 %v516
        %v995 = vpop.f32.mrf.mxu0
        %v996 = vadd.f32 0.0, %v995
        %v997 = vpop.f32.mrf.mxu0
        %998 = vdwg.mxu0
        %999 = vmatpush.bf16.msra.mxu0 %v851
        %1000 = vmatpush.bf16.msra.mxu0 %v846
        %1001 = vmatpush.bf16.msra.mxu0 %v841
        %1002 = vmatpush.bf16.msra.mxu0 %v836
        %1003 = vmatpush.bf16.msra.mxu0 %v831
        %1004 = vmatpush.bf16.msra.mxu0 %v826
        %1005 = vmatpush.bf16.msra.mxu0 %v821
        %1006 = vmatpush.bf16.msra.mxu0 %v816
        %1007 = vmatmul.bf16.gmra.mxu0 %v517
        %v1008 = vpop.f32.mrf.mxu0
        %v1009 = vadd.f32 %v996, %v1008
        %v1010 = vpop.f32.mrf.mxu0
        %1011 = vdwg.mxu0
        %1012 = vmatpush.bf16.msra.mxu0 %v812
        %1013 = vmatpush.bf16.msra.mxu0 %v807
        %1014 = vmatpush.bf16.msra.mxu0 %v802
        %1015 = vmatpush.bf16.msra.mxu0 %v797
        %1016 = vmatpush.bf16.msra.mxu0 %v792
        %1017 = vmatpush.bf16.msra.mxu0 %v787
        %1018 = vmatpush.bf16.msra.mxu0 %v782
        %1019 = vmatpush.bf16.msra.mxu0 %v777
        %1020 = vmatmul.bf16.gmra.mxu0 %v516
        %v1021 = vpop.f32.mrf.mxu0
        %v1022 = vadd.f32 0.0, %v1021
        %v1023 = vpop.f32.mrf.mxu0
        %1024 = vdwg.mxu0
        %1025 = vmatpush.bf16.msra.mxu0 %v852
        %1026 = vmatpush.bf16.msra.mxu0 %v847
        %1027 = vmatpush.bf16.msra.mxu0 %v842
        %1028 = vmatpush.bf16.msra.mxu0 %v837
        %1029 = vmatpush.bf16.msra.mxu0 %v832
        %1030 = vmatpush.bf16.msra.mxu0 %v827
        %1031 = vmatpush.bf16.msra.mxu0 %v822
        %1032 = vmatpush.bf16.msra.mxu0 %v817
        %1033 = vmatmul.bf16.gmra.mxu0 %v517
        %v1034 = vpop.f32.mrf.mxu0
        %v1035 = vadd.f32 %v1022, %v1034
        %v1036 = vpop.f32.mrf.mxu0
        %1037 = vdwg.mxu0
        %1038 = vmatpush.bf16.msra.mxu0 %v813
        %1039 = vmatpush.bf16.msra.mxu0 %v808
        %1040 = vmatpush.bf16.msra.mxu0 %v803
        %1041 = vmatpush.bf16.msra.mxu0 %v798
        %1042 = vmatpush.bf16.msra.mxu0 %v793
        %1043 = vmatpush.bf16.msra.mxu0 %v788
        %1044 = vmatpush.bf16.msra.mxu0 %v783
        %1045 = vmatpush.bf16.msra.mxu0 %v778
        %1046 = vmatmul.bf16.gmra.mxu0 %v516
        %v1047 = vpop.f32.mrf.mxu0
        %v1048 = vadd.f32 0.0, %v1047
        %v1049 = vpop.f32.mrf.mxu0
        %1050 = vdwg.mxu0
        %1051 = vmatpush.bf16.msra.mxu0 %v853
        %1052 = vmatpush.bf16.msra.mxu0 %v848
        %1053 = vmatpush.bf16.msra.mxu0 %v843
        %1054 = vmatpush.bf16.msra.mxu0 %v838
        %1055 = vmatpush.bf16.msra.mxu0 %v833
        %1056 = vmatpush.bf16.msra.mxu0 %v828
        %1057 = vmatpush.bf16.msra.mxu0 %v823
        %1058 = vmatpush.bf16.msra.mxu0 %v818
        %1059 = vmatmul.bf16.gmra.mxu0 %v517
        %v1060 = vpop.f32.mrf.mxu0
        %v1061 = vadd.f32 %v1048, %v1060
        %v1062 = vpop.f32.mrf.mxu0
        %1063 = vdwg.mxu0
        %v1065 = vperm.slane %v507, 0
        %v1067 = vadd.f32 %v957, %v1065
        %v1068 = vtanh.pop %v1067
        %v1069 = vsub.f32 %v508, %v1068
        %1071 = vset.pattern.permute.xlu0 0
        %1072 = vperm.xlu0 %1071, %v509
        %v1073 = vpop.permute.xlu0 %1072
        %v1075 = vmul.f32 %v1073, %v1068
        %v1076 = vadd.f32 %v1069, %v1075
        %v1077 = vld [vmem:[%s309] sm:$0xff]
        %v1078 = vunpack.c.l.bf16 %v1077
        %v1079 = vunpack.c.h.bf16 %v1077
        %1082 = vst [vmem:[#allocation1] ss:$2 sm:$0xff] %v1078
        %s1083 = scalar_lea.vmem [#allocation1], 16
        %1084 = vst [vmem:[%s1083] ss:$2 sm:$0xff] %v1079
        %v1085 = vld.sshfl [vmem:[#allocation1] sm:$0xff pattern:$0x75316420]
        %v1086 = vld.sshfl [vmem:[#allocation1 + $0x8] sm:$0xff pattern:$0x75316420]
        %v1087 = vld.sshfl [vmem:[#allocation1 + $0x10] sm:$0xff pattern:$0x75316420]
        %v1088 = vld.sshfl [vmem:[#allocation1 + $0x18] sm:$0xff pattern:$0x75316420]
        %v1093 = vadd.f32 %v983, %v1085
        %v1094 = vadd.f32 %v1009, %v1086
        %v1095 = vadd.f32 %v1035, %v1087
        %v1096 = vadd.f32 %v1061, %v1088
        %v1097 = vxor.u32 %v1093, 2147483648
        %v1098 = vxor.u32 %v1094, 2147483648
        %v1099 = vxor.u32 %v1095, 2147483648
        %v1100 = vxor.u32 %v1096, 2147483648
        %v1101 = vmul.f32 %v1097, 1.442695
        %v1102 = vpow.pop %v1101
        %v1103 = vmul.f32 %v1098, 1.442695
        %v1104 = vpow.pop %v1103
        %v1105 = vmul.f32 %v1099, 1.442695
        %v1106 = vpow.pop %v1105
        %v1107 = vmul.f32 %v1100, 1.442695
        %v1108 = vpow.pop %v1107
        %v1109 = vadd.f32 %v1102, 1.0
        %v1110 = vadd.f32 %v1104, 1.0
        %v1111 = vadd.f32 %v1106, 1.0
        %v1112 = vadd.f32 %v1108, 1.0
        %v1113 = vrcp.pop %v1109
        %v1114 = vmul.f32 %v1109, %v1113
        %v1115 = vsub.f32 1.0, %v1114
        %v1116 = vmul.f32 %v1113, %v1115
        %v1117 = vadd.f32 %v1113, %v1116
        %vm1118 = vweird.f32 %v1109
        %vm1119 = vweird.f32 %v1113
        %vm1120 = vmor %vm1118, %vm1119
        %v1121 = vsel %vm1120, %v1113, %v1117
        %v1122 = vand.u32 2147483647, %v1109
        %vm1123 = vcmp.eq.f32.partialorder %v1122, 8.507059e+37
        %v1124 = vand.u32 %v1109, 2147483648
        %v1125 = vor.u32 1.1754944e-38, %v1124
        %v1126 = vsel %vm1123, %v1125, %v1121
        %v1127 = vmul.f32 1.0, %v1126
        %v1128 = vrcp.pop %v1110
        %v1129 = vmul.f32 %v1110, %v1128
        %v1130 = vsub.f32 1.0, %v1129
        %v1131 = vmul.f32 %v1128, %v1130
        %v1132 = vadd.f32 %v1128, %v1131
        %vm1133 = vweird.f32 %v1110
        %vm1134 = vweird.f32 %v1128
        %vm1135 = vmor %vm1133, %vm1134
        %v1136 = vsel %vm1135, %v1128, %v1132
        %v1137 = vand.u32 2147483647, %v1110
        %vm1138 = vcmp.eq.f32.partialorder %v1137, 8.507059e+37
        %v1139 = vand.u32 %v1110, 2147483648
        %v1140 = vor.u32 1.1754944e-38, %v1139
        %v1141 = vsel %vm1138, %v1140, %v1136
        %v1142 = vmul.f32 1.0, %v1141
        %v1143 = vrcp.pop %v1111
        %v1144 = vmul.f32 %v1111, %v1143
        %v1145 = vsub.f32 1.0, %v1144
        %v1146 = vmul.f32 %v1143, %v1145
        %v1147 = vadd.f32 %v1143, %v1146
        %vm1148 = vweird.f32 %v1111
        %vm1149 = vweird.f32 %v1143
        %vm1150 = vmor %vm1148, %vm1149
        %v1151 = vsel %vm1150, %v1143, %v1147
        %v1152 = vand.u32 2147483647, %v1111
        %vm1153 = vcmp.eq.f32.partialorder %v1152, 8.507059e+37
        %v1154 = vand.u32 %v1111, 2147483648
        %v1155 = vor.u32 1.1754944e-38, %v1154
        %v1156 = vsel %vm1153, %v1155, %v1151
        %v1157 = vmul.f32 1.0, %v1156
        %v1158 = vrcp.pop %v1112
        %v1159 = vmul.f32 %v1112, %v1158
        %v1160 = vsub.f32 1.0, %v1159
        %v1161 = vmul.f32 %v1158, %v1160
        %v1162 = vadd.f32 %v1158, %v1161
        %vm1163 = vweird.f32 %v1112
        %vm1164 = vweird.f32 %v1158
        %vm1165 = vmor %vm1163, %vm1164
        %v1166 = vsel %vm1165, %v1158, %v1162
        %v1167 = vand.u32 2147483647, %v1112
        %vm1168 = vcmp.eq.f32.partialorder %v1167, 8.507059e+37
        %v1169 = vand.u32 %v1112, 2147483648
        %v1170 = vor.u32 1.1754944e-38, %v1169
        %v1171 = vsel %vm1168, %v1170, %v1166
        %v1172 = vmul.f32 1.0, %v1171
        %v1173 = vmul.f32 %v1142, %v1076
        %v1174 = vmul.f32 %v1127, %v1172
        %v1175 = vadd.f32 %v1173, %v1174
        %v1176 = vtanh.pop %v1175
        %v1177 = vmul.f32 %v1157, %v1176
        %1178 = vst [vmem:[%s321] sm:$0xf] %v1177
        %s1179 = scalar_lea.vmem [#allocation3], 4
        %v1180 = vld [vmem:[%s1179] sm:$0xf]
        %v1181 = vpack.c.bf16 %v1175, %v1175
        %v1182 = vpack.c.bf16 %v1177, %v1177
        %1183 = vmatpush.bf16.msra.mxu0 %v809
        %1184 = vmatpush.bf16.msra.mxu0 %v804
        %1185 = vmatpush.bf16.msra.mxu0 %v799
        %1186 = vmatpush.bf16.msra.mxu0 %v794
        %1187 = vmatpush.bf16.msra.mxu0 %v789
        %1188 = vmatpush.bf16.msra.mxu0 %v784
        %1189 = vmatpush.bf16.msra.mxu0 %v779
        %1190 = vmatpush.bf16.msra.mxu0 %v774
        %1191 = vmatmul.bf16.gmra.mxu0 %v1181
        %v1192 = vpop.f32.mrf.mxu0
        %v1193 = vadd.f32 0.0, %v1192
        %v1194 = vpop.f32.mrf.mxu0
        %1195 = vdwg.mxu0
        %1196 = vmatpush.bf16.msra.mxu0 %v849
        %1197 = vmatpush.bf16.msra.mxu0 %v844
        %1198 = vmatpush.bf16.msra.mxu0 %v839
        %1199 = vmatpush.bf16.msra.mxu0 %v834
        %1200 = vmatpush.bf16.msra.mxu0 %v829
        %1201 = vmatpush.bf16.msra.mxu0 %v824
        %1202 = vmatpush.bf16.msra.mxu0 %v819
        %1203 = vmatpush.bf16.msra.mxu0 %v814
        %1204 = vmatmul.bf16.gmra.mxu0 %v1182
        %v1205 = vpop.f32.mrf.mxu0
        %v1206 = vadd.f32 %v1193, %v1205
        %v1207 = vpop.f32.mrf.mxu0
        %1208 = vdwg.mxu0
        %1209 = vmatpush.bf16.msra.mxu0 %v810
        %1210 = vmatpush.bf16.msra.mxu0 %v805
        %1211 = vmatpush.bf16.msra.mxu0 %v800
        %1212 = vmatpush.bf16.msra.mxu0 %v795
        %1213 = vmatpush.bf16.msra.mxu0 %v790
        %1214 = vmatpush.bf16.msra.mxu0 %v785
        %1215 = vmatpush.bf16.msra.mxu0 %v780
        %1216 = vmatpush.bf16.msra.mxu0 %v775
        %1217 = vmatmul.bf16.gmra.mxu0 %v1181
        %v1218 = vpop.f32.mrf.mxu0
        %v1219 = vadd.f32 0.0, %v1218
        %v1220 = vpop.f32.mrf.mxu0
        %1221 = vdwg.mxu0
        %1222 = vmatpush.bf16.msra.mxu0 %v850
        %1223 = vmatpush.bf16.msra.mxu0 %v845
        %1224 = vmatpush.bf16.msra.mxu0 %v840
        %1225 = vmatpush.bf16.msra.mxu0 %v835
        %1226 = vmatpush.bf16.msra.mxu0 %v830
        %1227 = vmatpush.bf16.msra.mxu0 %v825
        %1228 = vmatpush.bf16.msra.mxu0 %v820
        %1229 = vmatpush.bf16.msra.mxu0 %v815
        %1230 = vmatmul.bf16.gmra.mxu0 %v1182
        %v1231 = vpop.f32.mrf.mxu0
        %v1232 = vadd.f32 %v1219, %v1231
        %v1233 = vpop.f32.mrf.mxu0
        %1234 = vdwg.mxu0
        %1235 = vmatpush.bf16.msra.mxu0 %v811
        %1236 = vmatpush.bf16.msra.mxu0 %v806
        %1237 = vmatpush.bf16.msra.mxu0 %v801
        %1238 = vmatpush.bf16.msra.mxu0 %v796
        %1239 = vmatpush.bf16.msra.mxu0 %v791
        %1240 = vmatpush.bf16.msra.mxu0 %v786
        %1241 = vmatpush.bf16.msra.mxu0 %v781
        %1242 = vmatpush.bf16.msra.mxu0 %v776
        %1243 = vmatmul.bf16.gmra.mxu0 %v1181
        %v1244 = vpop.f32.mrf.mxu0
        %v1245 = vadd.f32 0.0, %v1244
        %v1246 = vpop.f32.mrf.mxu0
        %1247 = vdwg.mxu0
        %1248 = vmatpush.bf16.msra.mxu0 %v851
        %1249 = vmatpush.bf16.msra.mxu0 %v846
        %1250 = vmatpush.bf16.msra.mxu0 %v841
        %1251 = vmatpush.bf16.msra.mxu0 %v836
        %1252 = vmatpush.bf16.msra.mxu0 %v831
        %1253 = vmatpush.bf16.msra.mxu0 %v826
        %1254 = vmatpush.bf16.msra.mxu0 %v821
        %1255 = vmatpush.bf16.msra.mxu0 %v816
        %1256 = vmatmul.bf16.gmra.mxu0 %v1182
        %v1257 = vpop.f32.mrf.mxu0
        %v1258 = vadd.f32 %v1245, %v1257
        %v1259 = vpop.f32.mrf.mxu0
        %1260 = vdwg.mxu0
        %1261 = vmatpush.bf16.msra.mxu0 %v812
        %1262 = vmatpush.bf16.msra.mxu0 %v807
        %1263 = vmatpush.bf16.msra.mxu0 %v802
        %1264 = vmatpush.bf16.msra.mxu0 %v797
        %1265 = vmatpush.bf16.msra.mxu0 %v792
        %1266 = vmatpush.bf16.msra.mxu0 %v787
        %1267 = vmatpush.bf16.msra.mxu0 %v782
        %1268 = vmatpush.bf16.msra.mxu0 %v777
        %1269 = vmatmul.bf16.gmra.mxu0 %v1181
        %v1270 = vpop.f32.mrf.mxu0
        %v1271 = vadd.f32 0.0, %v1270
        %v1272 = vpop.f32.mrf.mxu0
        %1273 = vdwg.mxu0
        %1274 = vmatpush.bf16.msra.mxu0 %v852
        %1275 = vmatpush.bf16.msra.mxu0 %v847
        %1276 = vmatpush.bf16.msra.mxu0 %v842
        %1277 = vmatpush.bf16.msra.mxu0 %v837
        %1278 = vmatpush.bf16.msra.mxu0 %v832
        %1279 = vmatpush.bf16.msra.mxu0 %v827
        %1280 = vmatpush.bf16.msra.mxu0 %v822
        %1281 = vmatpush.bf16.msra.mxu0 %v817
        %1282 = vmatmul.bf16.gmra.mxu0 %v1182
        %v1283 = vpop.f32.mrf.mxu0
        %v1284 = vadd.f32 %v1271, %v1283
        %v1285 = vpop.f32.mrf.mxu0
        %1286 = vdwg.mxu0
        %1287 = vmatpush.bf16.msra.mxu0 %v813
        %1288 = vmatpush.bf16.msra.mxu0 %v808
        %1289 = vmatpush.bf16.msra.mxu0 %v803
        %1290 = vmatpush.bf16.msra.mxu0 %v798
        %1291 = vmatpush.bf16.msra.mxu0 %v793
        %1292 = vmatpush.bf16.msra.mxu0 %v788
        %1293 = vmatpush.bf16.msra.mxu0 %v783
        %1294 = vmatpush.bf16.msra.mxu0 %v778
        %1295 = vmatmul.bf16.gmra.mxu0 %v1181
        %v1296 = vpop.f32.mrf.mxu0
        %v1297 = vadd.f32 0.0, %v1296
        %v1298 = vpop.f32.mrf.mxu0
        %1299 = vdwg.mxu0
        %1300 = vmatpush.bf16.msra.mxu0 %v853
        %1301 = vmatpush.bf16.msra.mxu0 %v848
        %1302 = vmatpush.bf16.msra.mxu0 %v843
        %1303 = vmatpush.bf16.msra.mxu0 %v838
        %1304 = vmatpush.bf16.msra.mxu0 %v833
        %1305 = vmatpush.bf16.msra.mxu0 %v828
        %1306 = vmatpush.bf16.msra.mxu0 %v823
        %1307 = vmatpush.bf16.msra.mxu0 %v818
        %1308 = vmatmul.bf16.gmra.mxu0 %v1182
        %v1309 = vpop.f32.mrf.mxu0
        %v1310 = vadd.f32 %v1297, %v1309
        %v1311 = vpop.f32.mrf.mxu0
        %1312 = vdwg.mxu0
        %v1313 = vadd.f32 %v1206, %v1065
        %v1314 = vtanh.pop %v1313
        %v1315 = vsub.f32 %v1175, %v1314
        %1317 = vset.pattern.permute.xlu0 0
        %1318 = vperm.xlu0 %1317, %v1180
        %v1319 = vpop.permute.xlu0 %1318
        %v1321 = vmul.f32 %v1319, %v1314
        %v1322 = vadd.f32 %v1315, %v1321
        %s1323 = scalar_lea.vmem %s309, 8
        %v1324 = vld [vmem:[%s1323] sm:$0xff]
        %v1325 = vunpack.c.l.bf16 %v1324
        %v1326 = vunpack.c.h.bf16 %v1324
        %1329 = vst [vmem:[#allocation1] ss:$2 sm:$0xff] %v1325
        %s1330 = scalar_lea.vmem [#allocation1], 16
        %1331 = vst [vmem:[%s1330] ss:$2 sm:$0xff] %v1326
        %v1332 = vld.sshfl [vmem:[#allocation1] sm:$0xff pattern:$0x75316420]
        %v1333 = vld.sshfl [vmem:[#allocation1 + $0x8] sm:$0xff pattern:$0x75316420]
        %v1334 = vld.sshfl [vmem:[#allocation1 + $0x10] sm:$0xff pattern:$0x75316420]
        %v1335 = vld.sshfl [vmem:[#allocation1 + $0x18] sm:$0xff pattern:$0x75316420]
        %v1340 = vadd.f32 %v1232, %v1332
        %v1341 = vadd.f32 %v1258, %v1333
        %v1342 = vadd.f32 %v1284, %v1334
        %v1343 = vadd.f32 %v1310, %v1335
        %v1344 = vxor.u32 %v1340, 2147483648
        %v1345 = vxor.u32 %v1341, 2147483648
        %v1346 = vxor.u32 %v1342, 2147483648
        %v1347 = vxor.u32 %v1343, 2147483648
        %v1348 = vmul.f32 %v1344, 1.442695
        %v1349 = vpow.pop %v1348
        %v1350 = vmul.f32 %v1345, 1.442695
        %v1351 = vpow.pop %v1350
        %v1352 = vmul.f32 %v1346, 1.442695
        %v1353 = vpow.pop %v1352
        %v1354 = vmul.f32 %v1347, 1.442695
        %v1355 = vpow.pop %v1354
        %v1356 = vadd.f32 %v1349, 1.0
        %v1357 = vadd.f32 %v1351, 1.0
        %v1358 = vadd.f32 %v1353, 1.0
        %v1359 = vadd.f32 %v1355, 1.0
        %v1360 = vrcp.pop %v1356
        %v1361 = vmul.f32 %v1356, %v1360
        %v1362 = vsub.f32 1.0, %v1361
        %v1363 = vmul.f32 %v1360, %v1362
        %v1364 = vadd.f32 %v1360, %v1363
        %vm1365 = vweird.f32 %v1356
        %vm1366 = vweird.f32 %v1360
        %vm1367 = vmor %vm1365, %vm1366
        %v1368 = vsel %vm1367, %v1360, %v1364
        %v1369 = vand.u32 2147483647, %v1356
        %vm1370 = vcmp.eq.f32.partialorder %v1369, 8.507059e+37
        %v1371 = vand.u32 %v1356, 2147483648
        %v1372 = vor.u32 1.1754944e-38, %v1371
        %v1373 = vsel %vm1370, %v1372, %v1368
        %v1374 = vmul.f32 1.0, %v1373
        %v1375 = vrcp.pop %v1357
        %v1376 = vmul.f32 %v1357, %v1375
        %v1377 = vsub.f32 1.0, %v1376
        %v1378 = vmul.f32 %v1375, %v1377
        %v1379 = vadd.f32 %v1375, %v1378
        %vm1380 = vweird.f32 %v1357
        %vm1381 = vweird.f32 %v1375
        %vm1382 = vmor %vm1380, %vm1381
        %v1383 = vsel %vm1382, %v1375, %v1379
        %v1384 = vand.u32 2147483647, %v1357
        %vm1385 = vcmp.eq.f32.partialorder %v1384, 8.507059e+37
        %v1386 = vand.u32 %v1357, 2147483648
        %v1387 = vor.u32 1.1754944e-38, %v1386
        %v1388 = vsel %vm1385, %v1387, %v1383
        %v1389 = vmul.f32 1.0, %v1388
        %v1390 = vrcp.pop %v1358
        %v1391 = vmul.f32 %v1358, %v1390
        %v1392 = vsub.f32 1.0, %v1391
        %v1393 = vmul.f32 %v1390, %v1392
        %v1394 = vadd.f32 %v1390, %v1393
        %vm1395 = vweird.f32 %v1358
        %vm1396 = vweird.f32 %v1390
        %vm1397 = vmor %vm1395, %vm1396
        %v1398 = vsel %vm1397, %v1390, %v1394
        %v1399 = vand.u32 2147483647, %v1358
        %vm1400 = vcmp.eq.f32.partialorder %v1399, 8.507059e+37
        %v1401 = vand.u32 %v1358, 2147483648
        %v1402 = vor.u32 1.1754944e-38, %v1401
        %v1403 = vsel %vm1400, %v1402, %v1398
        %v1404 = vmul.f32 1.0, %v1403
        %v1405 = vrcp.pop %v1359
        %v1406 = vmul.f32 %v1359, %v1405
        %v1407 = vsub.f32 1.0, %v1406
        %v1408 = vmul.f32 %v1405, %v1407
        %v1409 = vadd.f32 %v1405, %v1408
        %vm1410 = vweird.f32 %v1359
        %vm1411 = vweird.f32 %v1405
        %vm1412 = vmor %vm1410, %vm1411
        %v1413 = vsel %vm1412, %v1405, %v1409
        %v1414 = vand.u32 2147483647, %v1359
        %vm1415 = vcmp.eq.f32.partialorder %v1414, 8.507059e+37
        %v1416 = vand.u32 %v1359, 2147483648
        %v1417 = vor.u32 1.1754944e-38, %v1416
        %v1418 = vsel %vm1415, %v1417, %v1413
        %v1419 = vmul.f32 1.0, %v1418
        %v1420 = vmul.f32 %v1389, %v1322
        %v1421 = vmul.f32 %v1374, %v1419
        %v1422 = vadd.f32 %v1420, %v1421
        %v1423 = vtanh.pop %v1422
        %v1424 = vmul.f32 %v1404, %v1423
        %s1425 = scalar_lea.vmem %s321, 4
        %1426 = vst [vmem:[%s1425] sm:$0xf] %v1424
        %s1427 = scalar_lea.vmem [#allocation3], 8
        %v1428 = vld [vmem:[%s1427] sm:$0xf]
        %v1429 = vpack.c.bf16 %v1422, %v1422
        %v1430 = vpack.c.bf16 %v1424, %v1424
        %1431 = vmatpush.bf16.msra.mxu0 %v809
        %1432 = vmatpush.bf16.msra.mxu0 %v804
        %1433 = vmatpush.bf16.msra.mxu0 %v799
        %1434 = vmatpush.bf16.msra.mxu0 %v794
        %1435 = vmatpush.bf16.msra.mxu0 %v789
        %1436 = vmatpush.bf16.msra.mxu0 %v784
        %1437 = vmatpush.bf16.msra.mxu0 %v779
        %1438 = vmatpush.bf16.msra.mxu0 %v774
        %1439 = vmatmul.bf16.gmra.mxu0 %v1429
        %v1440 = vpop.f32.mrf.mxu0
        %v1441 = vadd.f32 0.0, %v1440
        %v1442 = vpop.f32.mrf.mxu0
        %1443 = vdwg.mxu0
        %1444 = vmatpush.bf16.msra.mxu0 %v849
        %1445 = vmatpush.bf16.msra.mxu0 %v844
        %1446 = vmatpush.bf16.msra.mxu0 %v839
        %1447 = vmatpush.bf16.msra.mxu0 %v834
        %1448 = vmatpush.bf16.msra.mxu0 %v829
        %1449 = vmatpush.bf16.msra.mxu0 %v824
        %1450 = vmatpush.bf16.msra.mxu0 %v819
        %1451 = vmatpush.bf16.msra.mxu0 %v814
        %1452 = vmatmul.bf16.gmra.mxu0 %v1430
        %v1453 = vpop.f32.mrf.mxu0
        %v1454 = vadd.f32 %v1441, %v1453
        %v1455 = vpop.f32.mrf.mxu0
        %1456 = vdwg.mxu0
        %1457 = vmatpush.bf16.msra.mxu0 %v810
        %1458 = vmatpush.bf16.msra.mxu0 %v805
        %1459 = vmatpush.bf16.msra.mxu0 %v800
        %1460 = vmatpush.bf16.msra.mxu0 %v795
        %1461 = vmatpush.bf16.msra.mxu0 %v790
        %1462 = vmatpush.bf16.msra.mxu0 %v785
        %1463 = vmatpush.bf16.msra.mxu0 %v780
        %1464 = vmatpush.bf16.msra.mxu0 %v775
        %1465 = vmatmul.bf16.gmra.mxu0 %v1429
        %v1466 = vpop.f32.mrf.mxu0
        %v1467 = vadd.f32 0.0, %v1466
        %v1468 = vpop.f32.mrf.mxu0
        %1469 = vdwg.mxu0
        %1470 = vmatpush.bf16.msra.mxu0 %v850
        %1471 = vmatpush.bf16.msra.mxu0 %v845
        %1472 = vmatpush.bf16.msra.mxu0 %v840
        %1473 = vmatpush.bf16.msra.mxu0 %v835
        %1474 = vmatpush.bf16.msra.mxu0 %v830
        %1475 = vmatpush.bf16.msra.mxu0 %v825
        %1476 = vmatpush.bf16.msra.mxu0 %v820
        %1477 = vmatpush.bf16.msra.mxu0 %v815
        %1478 = vmatmul.bf16.gmra.mxu0 %v1430
        %v1479 = vpop.f32.mrf.mxu0
        %v1480 = vadd.f32 %v1467, %v1479
        %v1481 = vpop.f32.mrf.mxu0
        %1482 = vdwg.mxu0
        %1483 = vmatpush.bf16.msra.mxu0 %v811
        %1484 = vmatpush.bf16.msra.mxu0 %v806
        %1485 = vmatpush.bf16.msra.mxu0 %v801
        %1486 = vmatpush.bf16.msra.mxu0 %v796
        %1487 = vmatpush.bf16.msra.mxu0 %v791
        %1488 = vmatpush.bf16.msra.mxu0 %v786
        %1489 = vmatpush.bf16.msra.mxu0 %v781
        %1490 = vmatpush.bf16.msra.mxu0 %v776
        %1491 = vmatmul.bf16.gmra.mxu0 %v1429
        %v1492 = vpop.f32.mrf.mxu0
        %v1493 = vadd.f32 0.0, %v1492
        %v1494 = vpop.f32.mrf.mxu0
        %1495 = vdwg.mxu0
        %1496 = vmatpush.bf16.msra.mxu0 %v851
        %1497 = vmatpush.bf16.msra.mxu0 %v846
        %1498 = vmatpush.bf16.msra.mxu0 %v841
        %1499 = vmatpush.bf16.msra.mxu0 %v836
        %1500 = vmatpush.bf16.msra.mxu0 %v831
        %1501 = vmatpush.bf16.msra.mxu0 %v826
        %1502 = vmatpush.bf16.msra.mxu0 %v821
        %1503 = vmatpush.bf16.msra.mxu0 %v816
        %1504 = vmatmul.bf16.gmra.mxu0 %v1430
        %v1505 = vpop.f32.mrf.mxu0
        %v1506 = vadd.f32 %v1493, %v1505
        %v1507 = vpop.f32.mrf.mxu0
        %1508 = vdwg.mxu0
        %1509 = vmatpush.bf16.msra.mxu0 %v812
        %1510 = vmatpush.bf16.msra.mxu0 %v807
        %1511 = vmatpush.bf16.msra.mxu0 %v802
        %1512 = vmatpush.bf16.msra.mxu0 %v797
        %1513 = vmatpush.bf16.msra.mxu0 %v792
        %1514 = vmatpush.bf16.msra.mxu0 %v787
        %1515 = vmatpush.bf16.msra.mxu0 %v782
        %1516 = vmatpush.bf16.msra.mxu0 %v777
        %1517 = vmatmul.bf16.gmra.mxu0 %v1429
        %v1518 = vpop.f32.mrf.mxu0
        %v1519 = vadd.f32 0.0, %v1518
        %v1520 = vpop.f32.mrf.mxu0
        %1521 = vdwg.mxu0
        %1522 = vmatpush.bf16.msra.mxu0 %v852
        %1523 = vmatpush.bf16.msra.mxu0 %v847
        %1524 = vmatpush.bf16.msra.mxu0 %v842
        %1525 = vmatpush.bf16.msra.mxu0 %v837
        %1526 = vmatpush.bf16.msra.mxu0 %v832
        %1527 = vmatpush.bf16.msra.mxu0 %v827
        %1528 = vmatpush.bf16.msra.mxu0 %v822
        %1529 = vmatpush.bf16.msra.mxu0 %v817
        %1530 = vmatmul.bf16.gmra.mxu0 %v1430
        %v1531 = vpop.f32.mrf.mxu0
        %v1532 = vadd.f32 %v1519, %v1531
        %v1533 = vpop.f32.mrf.mxu0
        %1534 = vdwg.mxu0
        %1535 = vmatpush.bf16.msra.mxu0 %v813
        %1536 = vmatpush.bf16.msra.mxu0 %v808
        %1537 = vmatpush.bf16.msra.mxu0 %v803
        %1538 = vmatpush.bf16.msra.mxu0 %v798
        %1539 = vmatpush.bf16.msra.mxu0 %v793
        %1540 = vmatpush.bf16.msra.mxu0 %v788
        %1541 = vmatpush.bf16.msra.mxu0 %v783
        %1542 = vmatpush.bf16.msra.mxu0 %v778
        %1543 = vmatmul.bf16.gmra.mxu0 %v1429
        %v1544 = vpop.f32.mrf.mxu0
        %v1545 = vadd.f32 0.0, %v1544
        %v1546 = vpop.f32.mrf.mxu0
        %1547 = vdwg.mxu0
        %1548 = vmatpush.bf16.msra.mxu0 %v853
        %1549 = vmatpush.bf16.msra.mxu0 %v848
        %1550 = vmatpush.bf16.msra.mxu0 %v843
        %1551 = vmatpush.bf16.msra.mxu0 %v838
        %1552 = vmatpush.bf16.msra.mxu0 %v833
        %1553 = vmatpush.bf16.msra.mxu0 %v828
        %1554 = vmatpush.bf16.msra.mxu0 %v823
        %1555 = vmatpush.bf16.msra.mxu0 %v818
        %1556 = vmatmul.bf16.gmra.mxu0 %v1430
        %v1557 = vpop.f32.mrf.mxu0
        %v1558 = vadd.f32 %v1545, %v1557
        %v1559 = vpop.f32.mrf.mxu0
        %1560 = vdwg.mxu0
        %v1561 = vadd.f32 %v1454, %v1065
        %v1562 = vtanh.pop %v1561
        %v1563 = vsub.f32 %v1422, %v1562
        %1565 = vset.pattern.permute.xlu0 0
        %1566 = vperm.xlu0 %1565, %v1428
        %v1567 = vpop.permute.xlu0 %1566
        %v1569 = vmul.f32 %v1567, %v1562
        %v1570 = vadd.f32 %v1563, %v1569
        %s1571 = scalar_lea.vmem %s309, 16
        %v1572 = vld [vmem:[%s1571] sm:$0xff]
        %v1573 = vunpack.c.l.bf16 %v1572
        %v1574 = vunpack.c.h.bf16 %v1572
        %1577 = vst [vmem:[#allocation1] ss:$2 sm:$0xff] %v1573
        %s1578 = scalar_lea.vmem [#allocation1], 16
        %1579 = vst [vmem:[%s1578] ss:$2 sm:$0xff] %v1574
        %v1580 = vld.sshfl [vmem:[#allocation1] sm:$0xff pattern:$0x75316420]
        %v1581 = vld.sshfl [vmem:[#allocation1 + $0x8] sm:$0xff pattern:$0x75316420]
        %v1582 = vld.sshfl [vmem:[#allocation1 + $0x10] sm:$0xff pattern:$0x75316420]
        %v1583 = vld.sshfl [vmem:[#allocation1 + $0x18] sm:$0xff pattern:$0x75316420]
        %v1588 = vadd.f32 %v1480, %v1580
        %v1589 = vadd.f32 %v1506, %v1581
        %v1590 = vadd.f32 %v1532, %v1582
        %v1591 = vadd.f32 %v1558, %v1583
        %v1592 = vxor.u32 %v1588, 2147483648
        %v1593 = vxor.u32 %v1589, 2147483648
        %v1594 = vxor.u32 %v1590, 2147483648
        %v1595 = vxor.u32 %v1591, 2147483648
        %v1596 = vmul.f32 %v1592, 1.442695
        %v1597 = vpow.pop %v1596
        %v1598 = vmul.f32 %v1593, 1.442695
        %v1599 = vpow.pop %v1598
        %v1600 = vmul.f32 %v1594, 1.442695
        %v1601 = vpow.pop %v1600
        %v1602 = vmul.f32 %v1595, 1.442695
        %v1603 = vpow.pop %v1602
        %v1604 = vadd.f32 %v1597, 1.0
        %v1605 = vadd.f32 %v1599, 1.0
        %v1606 = vadd.f32 %v1601, 1.0
        %v1607 = vadd.f32 %v1603, 1.0
        %v1608 = vrcp.pop %v1604
        %v1609 = vmul.f32 %v1604, %v1608
        %v1610 = vsub.f32 1.0, %v1609
        %v1611 = vmul.f32 %v1608, %v1610
        %v1612 = vadd.f32 %v1608, %v1611
        %vm1613 = vweird.f32 %v1604
        %vm1614 = vweird.f32 %v1608
        %vm1615 = vmor %vm1613, %vm1614
        %v1616 = vsel %vm1615, %v1608, %v1612
        %v1617 = vand.u32 2147483647, %v1604
        %vm1618 = vcmp.eq.f32.partialorder %v1617, 8.507059e+37
        %v1619 = vand.u32 %v1604, 2147483648
        %v1620 = vor.u32 1.1754944e-38, %v1619
        %v1621 = vsel %vm1618, %v1620, %v1616
        %v1622 = vmul.f32 1.0, %v1621
        %v1623 = vrcp.pop %v1605
        %v1624 = vmul.f32 %v1605, %v1623
        %v1625 = vsub.f32 1.0, %v1624
        %v1626 = vmul.f32 %v1623, %v1625
        %v1627 = vadd.f32 %v1623, %v1626
        %vm1628 = vweird.f32 %v1605
        %vm1629 = vweird.f32 %v1623
        %vm1630 = vmor %vm1628, %vm1629
        %v1631 = vsel %vm1630, %v1623, %v1627
        %v1632 = vand.u32 2147483647, %v1605
        %vm1633 = vcmp.eq.f32.partialorder %v1632, 8.507059e+37
        %v1634 = vand.u32 %v1605, 2147483648
        %v1635 = vor.u32 1.1754944e-38, %v1634
        %v1636 = vsel %vm1633, %v1635, %v1631
        %v1637 = vmul.f32 1.0, %v1636
        %v1638 = vrcp.pop %v1606
        %v1639 = vmul.f32 %v1606, %v1638
        %v1640 = vsub.f32 1.0, %v1639
        %v1641 = vmul.f32 %v1638, %v1640
        %v1642 = vadd.f32 %v1638, %v1641
        %vm1643 = vweird.f32 %v1606
        %vm1644 = vweird.f32 %v1638
        %vm1645 = vmor %vm1643, %vm1644
        %v1646 = vsel %vm1645, %v1638, %v1642
        %v1647 = vand.u32 2147483647, %v1606
        %vm1648 = vcmp.eq.f32.partialorder %v1647, 8.507059e+37
        %v1649 = vand.u32 %v1606, 2147483648
        %v1650 = vor.u32 1.1754944e-38, %v1649
        %v1651 = vsel %vm1648, %v1650, %v1646
        %v1652 = vmul.f32 1.0, %v1651
        %v1653 = vrcp.pop %v1607
        %v1654 = vmul.f32 %v1607, %v1653
        %v1655 = vsub.f32 1.0, %v1654
        %v1656 = vmul.f32 %v1653, %v1655
        %v1657 = vadd.f32 %v1653, %v1656
        %vm1658 = vweird.f32 %v1607
        %vm1659 = vweird.f32 %v1653
        %vm1660 = vmor %vm1658, %vm1659
        %v1661 = vsel %vm1660, %v1653, %v1657
        %v1662 = vand.u32 2147483647, %v1607
        %vm1663 = vcmp.eq.f32.partialorder %v1662, 8.507059e+37
        %v1664 = vand.u32 %v1607, 2147483648
        %v1665 = vor.u32 1.1754944e-38, %v1664
        %v1666 = vsel %vm1663, %v1665, %v1661
        %v1667 = vmul.f32 1.0, %v1666
        %v1668 = vmul.f32 %v1637, %v1570
        %v1669 = vmul.f32 %v1622, %v1667
        %v1670 = vadd.f32 %v1668, %v1669
        %v1671 = vtanh.pop %v1670
        %v1672 = vmul.f32 %v1652, %v1671
        %s1673 = scalar_lea.vmem %s321, 8
        %1674 = vst [vmem:[%s1673] sm:$0xf] %v1672
        %s1675 = scalar_lea.vmem [#allocation3], 12
        %v1676 = vld [vmem:[%s1675] sm:$0xf]
        %v1677 = vpack.c.bf16 %v1670, %v1670
        %v1678 = vpack.c.bf16 %v1672, %v1672
        %1679 = vmatpush.bf16.msra.mxu0 %v809
        %1680 = vmatpush.bf16.msra.mxu0 %v804
        %1681 = vmatpush.bf16.msra.mxu0 %v799
        %1682 = vmatpush.bf16.msra.mxu0 %v794
        %1683 = vmatpush.bf16.msra.mxu0 %v789
        %1684 = vmatpush.bf16.msra.mxu0 %v784
        %1685 = vmatpush.bf16.msra.mxu0 %v779
        %1686 = vmatpush.bf16.msra.mxu0 %v774
        %1687 = vmatmul.bf16.gmra.mxu0 %v1677
        %v1688 = vpop.f32.mrf.mxu0
        %v1689 = vadd.f32 0.0, %v1688
        %v1690 = vpop.f32.mrf.mxu0
        %1691 = vdwg.mxu0
        %1692 = vmatpush.bf16.msra.mxu0 %v849
        %1693 = vmatpush.bf16.msra.mxu0 %v844
        %1694 = vmatpush.bf16.msra.mxu0 %v839
        %1695 = vmatpush.bf16.msra.mxu0 %v834
        %1696 = vmatpush.bf16.msra.mxu0 %v829
        %1697 = vmatpush.bf16.msra.mxu0 %v824
        %1698 = vmatpush.bf16.msra.mxu0 %v819
        %1699 = vmatpush.bf16.msra.mxu0 %v814
        %1700 = vmatmul.bf16.gmra.mxu0 %v1678
        %v1701 = vpop.f32.mrf.mxu0
        %v1702 = vadd.f32 %v1689, %v1701
        %v1703 = vpop.f32.mrf.mxu0
        %1704 = vdwg.mxu0
        %1705 = vmatpush.bf16.msra.mxu0 %v810
        %1706 = vmatpush.bf16.msra.mxu0 %v805
        %1707 = vmatpush.bf16.msra.mxu0 %v800
        %1708 = vmatpush.bf16.msra.mxu0 %v795
        %1709 = vmatpush.bf16.msra.mxu0 %v790
        %1710 = vmatpush.bf16.msra.mxu0 %v785
        %1711 = vmatpush.bf16.msra.mxu0 %v780
        %1712 = vmatpush.bf16.msra.mxu0 %v775
        %1713 = vmatmul.bf16.gmra.mxu0 %v1677
        %v1714 = vpop.f32.mrf.mxu0
        %v1715 = vadd.f32 0.0, %v1714
        %v1716 = vpop.f32.mrf.mxu0
        %1717 = vdwg.mxu0
        %1718 = vmatpush.bf16.msra.mxu0 %v850
        %1719 = vmatpush.bf16.msra.mxu0 %v845
        %1720 = vmatpush.bf16.msra.mxu0 %v840
        %1721 = vmatpush.bf16.msra.mxu0 %v835
        %1722 = vmatpush.bf16.msra.mxu0 %v830
        %1723 = vmatpush.bf16.msra.mxu0 %v825
        %1724 = vmatpush.bf16.msra.mxu0 %v820
        %1725 = vmatpush.bf16.msra.mxu0 %v815
        %1726 = vmatmul.bf16.gmra.mxu0 %v1678
        %v1727 = vpop.f32.mrf.mxu0
        %v1728 = vadd.f32 %v1715, %v1727
        %v1729 = vpop.f32.mrf.mxu0
        %1730 = vdwg.mxu0
        %1731 = vmatpush.bf16.msra.mxu0 %v811
        %1732 = vmatpush.bf16.msra.mxu0 %v806
        %1733 = vmatpush.bf16.msra.mxu0 %v801
        %1734 = vmatpush.bf16.msra.mxu0 %v796
        %1735 = vmatpush.bf16.msra.mxu0 %v791
        %1736 = vmatpush.bf16.msra.mxu0 %v786
        %1737 = vmatpush.bf16.msra.mxu0 %v781
        %1738 = vmatpush.bf16.msra.mxu0 %v776
        %1739 = vmatmul.bf16.gmra.mxu0 %v1677
        %v1740 = vpop.f32.mrf.mxu0
        %v1741 = vadd.f32 0.0, %v1740
        %v1742 = vpop.f32.mrf.mxu0
        %1743 = vdwg.mxu0
        %1744 = vmatpush.bf16.msra.mxu0 %v851
        %1745 = vmatpush.bf16.msra.mxu0 %v846
        %1746 = vmatpush.bf16.msra.mxu0 %v841
        %1747 = vmatpush.bf16.msra.mxu0 %v836
        %1748 = vmatpush.bf16.msra.mxu0 %v831
        %1749 = vmatpush.bf16.msra.mxu0 %v826
        %1750 = vmatpush.bf16.msra.mxu0 %v821
        %1751 = vmatpush.bf16.msra.mxu0 %v816
        %1752 = vmatmul.bf16.gmra.mxu0 %v1678
        %v1753 = vpop.f32.mrf.mxu0
        %v1754 = vadd.f32 %v1741, %v1753
        %v1755 = vpop.f32.mrf.mxu0
        %1756 = vdwg.mxu0
        %1757 = vmatpush.bf16.msra.mxu0 %v812
        %1758 = vmatpush.bf16.msra.mxu0 %v807
        %1759 = vmatpush.bf16.msra.mxu0 %v802
        %1760 = vmatpush.bf16.msra.mxu0 %v797
        %1761 = vmatpush.bf16.msra.mxu0 %v792
        %1762 = vmatpush.bf16.msra.mxu0 %v787
        %1763 = vmatpush.bf16.msra.mxu0 %v782
        %1764 = vmatpush.bf16.msra.mxu0 %v777
        %1765 = vmatmul.bf16.gmra.mxu0 %v1677
        %v1766 = vpop.f32.mrf.mxu0
        %v1767 = vadd.f32 0.0, %v1766
        %v1768 = vpop.f32.mrf.mxu0
        %1769 = vdwg.mxu0
        %1770 = vmatpush.bf16.msra.mxu0 %v852
        %1771 = vmatpush.bf16.msra.mxu0 %v847
        %1772 = vmatpush.bf16.msra.mxu0 %v842
        %1773 = vmatpush.bf16.msra.mxu0 %v837
        %1774 = vmatpush.bf16.msra.mxu0 %v832
        %1775 = vmatpush.bf16.msra.mxu0 %v827
        %1776 = vmatpush.bf16.msra.mxu0 %v822
        %1777 = vmatpush.bf16.msra.mxu0 %v817
        %1778 = vmatmul.bf16.gmra.mxu0 %v1678
        %v1779 = vpop.f32.mrf.mxu0
        %v1780 = vadd.f32 %v1767, %v1779
        %v1781 = vpop.f32.mrf.mxu0
        %1782 = vdwg.mxu0
        %1783 = vmatpush.bf16.msra.mxu0 %v813
        %1784 = vmatpush.bf16.msra.mxu0 %v808
        %1785 = vmatpush.bf16.msra.mxu0 %v803
        %1786 = vmatpush.bf16.msra.mxu0 %v798
        %1787 = vmatpush.bf16.msra.mxu0 %v793
        %1788 = vmatpush.bf16.msra.mxu0 %v788
        %1789 = vmatpush.bf16.msra.mxu0 %v783
        %1790 = vmatpush.bf16.msra.mxu0 %v778
        %1791 = vmatmul.bf16.gmra.mxu0 %v1677
        %v1792 = vpop.f32.mrf.mxu0
        %v1793 = vadd.f32 0.0, %v1792
        %v1794 = vpop.f32.mrf.mxu0
        %1795 = vdwg.mxu0
        %1796 = vmatpush.bf16.msra.mxu0 %v853
        %1797 = vmatpush.bf16.msra.mxu0 %v848
        %1798 = vmatpush.bf16.msra.mxu0 %v843
        %1799 = vmatpush.bf16.msra.mxu0 %v838
        %1800 = vmatpush.bf16.msra.mxu0 %v833
        %1801 = vmatpush.bf16.msra.mxu0 %v828
        %1802 = vmatpush.bf16.msra.mxu0 %v823
        %1803 = vmatpush.bf16.msra.mxu0 %v818
        %1804 = vmatmul.bf16.gmra.mxu0 %v1678
        %v1805 = vpop.f32.mrf.mxu0
        %v1806 = vadd.f32 %v1793, %v1805
        %v1807 = vpop.f32.mrf.mxu0
        %1808 = vdwg.mxu0
        %v1809 = vadd.f32 %v1702, %v1065
        %v1810 = vtanh.pop %v1809
        %v1811 = vsub.f32 %v1670, %v1810
        %1813 = vset.pattern.permute.xlu0 0
        %1814 = vperm.xlu0 %1813, %v1676
        %v1815 = vpop.permute.xlu0 %1814
        %v1817 = vmul.f32 %v1815, %v1810
        %v1818 = vadd.f32 %v1811, %v1817
        %s1819 = scalar_lea.vmem %s309, 24
        %v1820 = vld [vmem:[%s1819] sm:$0xff]
        %v1821 = vunpack.c.l.bf16 %v1820
        %v1822 = vunpack.c.h.bf16 %v1820
        %1825 = vst [vmem:[#allocation1] ss:$2 sm:$0xff] %v1821
        %s1826 = scalar_lea.vmem [#allocation1], 16
        %1827 = vst [vmem:[%s1826] ss:$2 sm:$0xff] %v1822
        %v1828 = vld.sshfl [vmem:[#allocation1] sm:$0xff pattern:$0x75316420]
        %v1829 = vld.sshfl [vmem:[#allocation1 + $0x8] sm:$0xff pattern:$0x75316420]
        %v1830 = vld.sshfl [vmem:[#allocation1 + $0x10] sm:$0xff pattern:$0x75316420]
        %v1831 = vld.sshfl [vmem:[#allocation1 + $0x18] sm:$0xff pattern:$0x75316420]
        %v1836 = vadd.f32 %v1728, %v1828
        %v1837 = vadd.f32 %v1754, %v1829
        %v1838 = vadd.f32 %v1780, %v1830
        %v1839 = vadd.f32 %v1806, %v1831
        %v1840 = vxor.u32 %v1836, 2147483648
        %v1841 = vxor.u32 %v1837, 2147483648
        %v1842 = vxor.u32 %v1838, 2147483648
        %v1843 = vxor.u32 %v1839, 2147483648
        %v1844 = vmul.f32 %v1840, 1.442695
        %v1845 = vpow.pop %v1844
        %v1846 = vmul.f32 %v1841, 1.442695
        %v1847 = vpow.pop %v1846
        %v1848 = vmul.f32 %v1842, 1.442695
        %v1849 = vpow.pop %v1848
        %v1850 = vmul.f32 %v1843, 1.442695
        %v1851 = vpow.pop %v1850
        %v1852 = vadd.f32 %v1845, 1.0
        %v1853 = vadd.f32 %v1847, 1.0
        %v1854 = vadd.f32 %v1849, 1.0
        %v1855 = vadd.f32 %v1851, 1.0
        %v1856 = vrcp.pop %v1852
        %v1857 = vmul.f32 %v1852, %v1856
        %v1858 = vsub.f32 1.0, %v1857
        %v1859 = vmul.f32 %v1856, %v1858
        %v1860 = vadd.f32 %v1856, %v1859
        %vm1861 = vweird.f32 %v1852
        %vm1862 = vweird.f32 %v1856
        %vm1863 = vmor %vm1861, %vm1862
        %v1864 = vsel %vm1863, %v1856, %v1860
        %v1865 = vand.u32 2147483647, %v1852
        %vm1866 = vcmp.eq.f32.partialorder %v1865, 8.507059e+37
        %v1867 = vand.u32 %v1852, 2147483648
        %v1868 = vor.u32 1.1754944e-38, %v1867
        %v1869 = vsel %vm1866, %v1868, %v1864
        %v1870 = vmul.f32 1.0, %v1869
        %v1871 = vrcp.pop %v1853
        %v1872 = vmul.f32 %v1853, %v1871
        %v1873 = vsub.f32 1.0, %v1872
        %v1874 = vmul.f32 %v1871, %v1873
        %v1875 = vadd.f32 %v1871, %v1874
        %vm1876 = vweird.f32 %v1853
        %vm1877 = vweird.f32 %v1871
        %vm1878 = vmor %vm1876, %vm1877
        %v1879 = vsel %vm1878, %v1871, %v1875
        %v1880 = vand.u32 2147483647, %v1853
        %vm1881 = vcmp.eq.f32.partialorder %v1880, 8.507059e+37
        %v1882 = vand.u32 %v1853, 2147483648
        %v1883 = vor.u32 1.1754944e-38, %v1882
        %v1884 = vsel %vm1881, %v1883, %v1879
        %v1885 = vmul.f32 1.0, %v1884
        %v1886 = vrcp.pop %v1854
        %v1887 = vmul.f32 %v1854, %v1886
        %v1888 = vsub.f32 1.0, %v1887
        %v1889 = vmul.f32 %v1886, %v1888
        %v1890 = vadd.f32 %v1886, %v1889
        %vm1891 = vweird.f32 %v1854
        %vm1892 = vweird.f32 %v1886
        %vm1893 = vmor %vm1891, %vm1892
        %v1894 = vsel %vm1893, %v1886, %v1890
        %v1895 = vand.u32 2147483647, %v1854
        %vm1896 = vcmp.eq.f32.partialorder %v1895, 8.507059e+37
        %v1897 = vand.u32 %v1854, 2147483648
        %v1898 = vor.u32 1.1754944e-38, %v1897
        %v1899 = vsel %vm1896, %v1898, %v1894
        %v1900 = vmul.f32 1.0, %v1899
        %v1901 = vrcp.pop %v1855
        %v1902 = vmul.f32 %v1855, %v1901
        %v1903 = vsub.f32 1.0, %v1902
        %v1904 = vmul.f32 %v1901, %v1903
        %v1905 = vadd.f32 %v1901, %v1904
        %vm1906 = vweird.f32 %v1855
        %vm1907 = vweird.f32 %v1901
        %vm1908 = vmor %vm1906, %vm1907
        %v1909 = vsel %vm1908, %v1901, %v1905
        %v1910 = vand.u32 2147483647, %v1855
        %vm1911 = vcmp.eq.f32.partialorder %v1910, 8.507059e+37
        %v1912 = vand.u32 %v1855, 2147483648
        %v1913 = vor.u32 1.1754944e-38, %v1912
        %v1914 = vsel %vm1911, %v1913, %v1909
        %v1915 = vmul.f32 1.0, %v1914
        %v1916 = vmul.f32 %v1885, %v1818
        %v1917 = vmul.f32 %v1870, %v1915
        %v1918 = vadd.f32 %v1916, %v1917
        %v1919 = vtanh.pop %v1918
        %v1920 = vmul.f32 %v1900, %v1919
        %s1921 = scalar_lea.vmem %s321, 12
        %1922 = vst [vmem:[%s1921] sm:$0xf] %v1920
        %v1925 = vrot.slane %v1920, 4
        %vm1926 = vcmask 1043456
        %v1927 = vsel %vm1926, %v1918, %v1925
        %1929 = vst [vmem:[#allocation2] sm:$0xff] %v1927
        %p1930 = scmp.eq.s32.totalorder %s21, 1
        // Predicated region
        $region53: #{_lambda_.3} parent=43 // pred_check
          %p1931 = pneg %p1930
        $region54: #{_lambda_.3} parent=43 // pred_check_branch
          %1933 = sbr.rel (%p1931) target = $region56
        $region55: #{_lambda_.3} parent=43 // pred_region
          %v1934 = vld [vmem:[%s4] sm:$0xff]
          %v1935 = vld [vmem:[%s4 + $0x8] sm:$0xff]
          %v1936 = vld [vmem:[%s4 + $0x10] sm:$0xff]
          %v1937 = vld [vmem:[%s4 + $0x18] sm:$0xff]
          %v1938 = vld [vmem:[%s4 + $0x20] sm:$0xff]
          %v1939 = vld [vmem:[%s4 + $0x28] sm:$0xff]
          %v1940 = vld [vmem:[%s4 + $0x30] sm:$0xff]
          %v1941 = vld [vmem:[%s4 + $0x38] sm:$0xff]
          %v1942 = vld [vmem:[%s4 + $0x40] sm:$0xff]
          %v1943 = vld [vmem:[%s4 + $0x48] sm:$0xff]
          %v1944 = vld [vmem:[%s4 + $0x50] sm:$0xff]
          %v1945 = vld [vmem:[%s4 + $0x58] sm:$0xff]
          %v1946 = vld [vmem:[%s4 + $0x60] sm:$0xff]
          %v1947 = vld [vmem:[%s4 + $0x68] sm:$0xff]
          %v1948 = vld [vmem:[%s4 + $0x70] sm:$0xff]
          %v1949 = vld [vmem:[%s4 + $0x78] sm:$0xff]
          %v1950 = vld [vmem:[%s4 + $0x80] sm:$0xff]
          %v1951 = vld [vmem:[%s4 + $0x88] sm:$0xff]
          %v1952 = vld [vmem:[%s4 + $0x90] sm:$0xff]
          %v1953 = vld [vmem:[%s4 + $0x98] sm:$0xff]
          %v1954 = vld [vmem:[%s4 + $0xa0] sm:$0xff]
          %v1955 = vld [vmem:[%s4 + $0xa8] sm:$0xff]
          %v1956 = vld [vmem:[%s4 + $0xb0] sm:$0xff]
          %v1957 = vld [vmem:[%s4 + $0xb8] sm:$0xff]
          %v1958 = vld [vmem:[%s4 + $0xc0] sm:$0xff]
          %v1959 = vld [vmem:[%s4 + $0xc8] sm:$0xff]
          %v1960 = vld [vmem:[%s4 + $0xd0] sm:$0xff]
          %v1961 = vld [vmem:[%s4 + $0xd8] sm:$0xff]
          %v1962 = vld [vmem:[%s4 + $0xe0] sm:$0xff]
          %v1963 = vld [vmem:[%s4 + $0xe8] sm:$0xff]
          %v1964 = vld [vmem:[%s4 + $0xf0] sm:$0xff]
          %v1965 = vld [vmem:[%s4 + $0xf8] sm:$0xff]
          %v1966 = vrot.slane %v1920, 2
          %1968 = vmatpush.msra.mxu0 %v1965
          %1969 = vmatpush.msra.mxu0 %v1964
          %1970 = vmatpush.msra.mxu0 %v1963
          %1971 = vmatpush.msra.mxu0 %v1962
          %1972 = vmatpush.msra.mxu0 %v1961
          %1973 = vmatpush.msra.mxu0 %v1960
          %1974 = vmatpush.msra.mxu0 %v1959
          %1975 = vmatpush.msra.mxu0 %v1958
          %1976 = vmatpush.msra.mxu0 %v1957
          %1977 = vmatpush.msra.mxu0 %v1956
          %1978 = vmatpush.msra.mxu0 %v1955
          %1979 = vmatpush.msra.mxu0 %v1954
          %1980 = vmatpush.msra.mxu0 %v1953
          %1981 = vmatpush.msra.mxu0 %v1952
          %1982 = vmatpush.msra.mxu0 %v1951
          %1983 = vmatpush.msra.mxu0 %v1950
          %1984 = vmatmul.f32.gmra.mxu0 %v1966
          %v1985 = vpop.f32.mrf.mxu0
          %v1986 = vadd.f32 0.0, %v1985
          %1987 = vdwg.mxu0
          %1988 = vmatpush.msra.mxu0 %v1949
          %1989 = vmatpush.msra.mxu0 %v1948
          %1990 = vmatpush.msra.mxu0 %v1947
          %1991 = vmatpush.msra.mxu0 %v1946
          %1992 = vmatpush.msra.mxu0 %v1945
          %1993 = vmatpush.msra.mxu0 %v1944
          %1994 = vmatpush.msra.mxu0 %v1943
          %1995 = vmatpush.msra.mxu0 %v1942
          %1996 = vmatpush.msra.mxu0 %v1941
          %1997 = vmatpush.msra.mxu0 %v1940
          %1998 = vmatpush.msra.mxu0 %v1939
          %1999 = vmatpush.msra.mxu0 %v1938
          %2000 = vmatpush.msra.mxu0 %v1937
          %2001 = vmatpush.msra.mxu0 %v1936
          %2002 = vmatpush.msra.mxu0 %v1935
          %2003 = vmatpush.msra.mxu0 %v1934
          %2004 = vmatmul.f32.gmra.mxu0 %v1920
          %v2005 = vpop.f32.mrf.mxu0
          %v2006 = vadd.f32 %v1986, %v2005
          %2007 = vdwg.mxu0
          %v2008 = vld [vmem:[%s5] sm:$0x1]
          %v2009 = vadd.f32 %v2006, %v2008
          %vm2010 = vcmp.ne.f32.partialorder %v2009, %v2009
          %v2011 = vand.u32 2147483647, %v2009
          %vm2012 = vcmp.eq.f32.partialorder %v2011, inf
          %vm2013 = vmor %vm2010, %vm2012
          %v2014 = vsel %vm2013, 0.0, %v2009
          %v2015 = vxor.u32 %v2014, 2147483648
          %v2016 = vmul.f32 %v2015, 1.442695
          %v2017 = vpow.pop %v2016
          %v2018 = vadd.f32 %v2017, 1.0
          %v2019 = vrcp.pop %v2018
          %v2020 = vmul.f32 %v2018, %v2019
          %v2021 = vsub.f32 1.0, %v2020
          %v2022 = vmul.f32 %v2019, %v2021
          %v2023 = vadd.f32 %v2019, %v2022
          %vm2024 = vweird.f32 %v2018
          %vm2025 = vweird.f32 %v2019
          %vm2026 = vmor %vm2024, %vm2025
          %v2027 = vsel %vm2026, %v2019, %v2023
          %v2028 = vand.u32 2147483647, %v2018
          %vm2029 = vcmp.eq.f32.partialorder %v2028, 8.507059e+37
          %v2030 = vand.u32 %v2018, 2147483648
          %v2031 = vor.u32 1.1754944e-38, %v2030
          %v2032 = vsel %vm2029, %v2031, %v2027
          %v2033 = vmul.f32 1.0, %v2032
          %vm2034 = vcmp.ne.f32.partialorder %v2033, %v2033
          %v2035 = vand.u32 2147483647, %v2033
          %vm2036 = vcmp.eq.f32.partialorder %v2035, inf
          %vm2037 = vmor %vm2034, %vm2036
          %v2038 = vsel %vm2037, 0.0, %v2033
          %vm2039 = vcmask 24576
          %2040 = vst.msk [vmem:[#allocation7] sm:$0x1] %vm2039, %v2038
        $region56: #{_lambda_.3} parent=43 // pred_fallthru
          _
        %s2041 = smul.u32 4, %s21
        %p2042 = scmp.lt.s32.totalorder %s2041, 7
        %s2043 = scalar_select %p2042, %s2041, 7
        %s2044 = smul.addr %s2043, 4
        %s2045 = scalar_lea.vmem %s6, %s2044
        // Predicated region
        $region57: #{_lambda_.3} parent=43 // pred_check
          %p2046 = pneg %p175
        $region58: #{_lambda_.3} parent=43 // pred_check_branch
          %2048 = sbr.rel (%p2046) target = $region60
        $region59: #{_lambda_.3} parent=43 // pred_region
          %s2049 = smul.u32 4, %s21
        $region60: #{_lambda_.3} parent=43 // pred_fallthru
          _
        // Predicated region
        $region61: #{_lambda_.3} parent=43 // pred_check
          %p2050 = pneg %p196
        $region62: #{_lambda_.3} parent=43 // pred_check_branch
          %2052 = sbr.rel (%p2050) target = $region64
        $region63: #{_lambda_.3} parent=43 // pred_region
          %2054 = vsyncadd [#allocation6], 0
          %s2056 = sshll.u32 [#allocation7], 4
          %s2057 = int_to_ptr.vmem [resolvable:$true] %s2056
          %s2058 = sshll.u32 %s7, 4
          %s2059 = int_to_ptr.hbm [resolvable:$true] %s2058
          %2061 = dma.vmem_to_hbm [thread:$0]  %s2057, 16, %s2059, [#allocation6]
        $region64: #{_lambda_.3} parent=43 // pred_fallthru
          _
        // Predicated region
        $region65: #{_lambda_.3} parent=43 // pred_check
          %p2062 = pneg %p196
        $region66: #{_lambda_.3} parent=43 // pred_check_branch
          %2064 = sbr.rel (%p2062) target = $region68
        $region67: #{_lambda_.3} parent=43 // pred_region
          %2066 = dma.done [#allocation6], 16
        $region68: #{_lambda_.3} parent=43 // pred_fallthru
          _
      $region44: #{_lambda_.3} parent=5 // pred_fallthru
        _
      %p2067 = scmp.le.s32.totalorder 2, %s16
      // Predicated region
      $region69: #{_lambda_.3} parent=5 // pred_check
        %p2068 = pneg %p2067
      $region70: #{_lambda_.3} parent=5 // pred_check_branch
        %2070 = sbr.rel (%p2068) target = $region72
      $region71: #{_lambda_.3} parent=5 // pred_region
        %s2071 = ssub.s32 %s16, 2
        // Predicated region
        $region73: #{_lambda_.3} parent=71 // pred_check
          %p2072 = pneg %p181
        $region74: #{_lambda_.3} parent=71 // pred_check_branch
          %2074 = sbr.rel (%p2072) target = $region76
        $region75: #{_lambda_.3} parent=71 // pred_region
          %s2075 = smul.u32 4, %s22
          %p2076 = scmp.lt.s32.totalorder %s2075, 7
          %s2077 = scalar_select %p2076, %s2075, 7
          %s2078 = smul.addr %s2077, 4
          %s2079 = scalar_lea.vmem %s6, %s2078
        $region76: #{_lambda_.3} parent=71 // pred_fallthru
          _
      $region72: #{_lambda_.3} parent=5 // pred_fallthru
        _
    $region6: #{_lambda_.3} parent=1 // loop_footer
      %s20 = sadd.s32 1, %s16
    $region7: #{_lambda_.3} parent=1 // loop_footer_branch
      %15 = sbr.rel target = $region3
    $region8: #{_lambda_.3} parent=1 // loop_exit
      _
    %2080 = vsyncpa [#allocation5], 1
    %s2081 = scalar_lea.sflag [#allocation5], 1
    %2082 = vsyncpa %s2081, 1
    %2083 = vsyncpa [#allocation6], 1
    %s2084 = scalar_lea.sflag [#allocation6], 1
    %2085 = vsyncpa %s2084, 1

</llo_original>
